<compile_context>
chip_gen: v7x
topology: tpu7x:2x2x1
jax: 0.10.0
libtpu: 0.0.40
codegen_flags: <defaults>
</compile_context>

<pallas_src>
import math

import jax
import jax.numpy as jnp
from jax.experimental import pallas as pl
from jax.experimental.pallas import tpu as pltpu

# ------------------------- small problem sizes -------------------------
B = 2            # batch
FEAT = 32        # "feature_dim" (perception channels)
PRED = 16        # prediction channels   (128 in reference)
VEH = 8          # vehicle state dim     (64 in reference)
HIDDEN = 32      # hidden_dim
HORIZON = 8      # planning_horizon
HIMG = WIMG = 8  # cost-volume spatial size
C1, C2, C3 = 32, 16, 8   # cost encoder channels (256,128,64 in reference)
NCAND = 6
NCP = 10 * 3     # control points (flattened)
# path_feature dim = hidden + first-point(3) + last-point(3) + horizon cost
DPF = HIDDEN + 3 + 3 + HORIZON
# TODO(synk): the reference value_network's first Linear expects hidden_dim
# inputs but receives hidden_dim+6+horizon features (shape bug in the PyTorch
# code); we size it to the actual feature dim so the forward pass runs.

CIN0 = FEAT + PRED          # cost-encoder input channels
HPAD = HIMG + 2             # padded plane height
WPAD = WIMG + 2             # padded plane width
PLANE = HPAD * WPAD         # 100 flattened padded positions per batch
LANE = 128                  # per-batch lane block (PLANE <= 128)
NLANE = B * LANE            # conv activation lane width (batch folded in)
PV_COLS = HIDDEN            # paths(24) + value(lane 24) + pad
assert PLANE <= LANE
assert HORIZON * 3 + 1 <= PV_COLS


# --------------------- packed-weight layouts (static) ---------------------
def _pack_layout(entries):
    """entries: [(name, rows, cols)] -> ({name: (row0, rows, cols)}, total_rows)."""
    blocks, r = {}, 0
    for name, nr, nc in entries:
        blocks[name] = (r, nr, nc)
        r = ((r + nr + 7) // 8) * 8     # keep every block sublane-aligned
    return blocks, r


CONV_COLS = CIN0  # 48
CONV_BLOCKS, CONV_ROWS = _pack_layout([
    ("c1w", 9 * C1, CIN0),   # 9 taps, each (C1, CIN0)
    ("c2w", 9 * C2, C1),
    ("c3w", 9 * C3, C2),
    ("c4w", C3, 1),          # 1x1 conv weight stored as a column
    ("c1b", C1, 1),          # conv biases stored as columns
    ("c2b", C2, 1),
    ("c3b", C3, 1),
    ("c4b", 1, 1),
])

MLP_COLS = 3 * HIDDEN  # 96 (widest block: merged [pg1 | o1_se | v1_se])
MLP_BLOCKS, MLP_ROWS = _pack_layout([
    ("fe1w", FEAT + VEH, HIDDEN),
    ("fe2w", HIDDEN, HIDDEN),
    ("se_w3", HIDDEN, 3 * HIDDEN),     # [pg1w | o1w[:32] | v1w[:32]]
    ("pg2w", HIDDEN, NCP),
    ("o1wc", NCP, HIDDEN),             # o1w[32:62]
    ("o2w", HIDDEN, HIDDEN),
    ("o3w", HIDDEN, PV_COLS),          # o3 padded to 32 cols (24 real)
    ("v1w", 3 + 3 + HORIZON, HIDDEN),  # v1w[32:46]  (first|last|cost rows)
    ("v2w", HIDDEN, HIDDEN // 2),
    ("v3w", HIDDEN // 2, 1),
    ("fe1b", 1, HIDDEN),
    ("fe2b", 1, HIDDEN),
    ("pg1b", 1, HIDDEN),
    ("pg2b", 1, NCP),
    ("o1b", 1, HIDDEN),
    ("o2b", 1, HIDDEN),
    ("o3b", 1, PV_COLS),
    ("v1b", 1, HIDDEN),
    ("v2b", 1, HIDDEN // 2),
    ("v3b", 1, 1),
    ("onehot_val", 1, PV_COLS),        # 1.0 at lane HORIZON*3 (folds value in)
])


def _vmem_spec():
    return pl.BlockSpec(memory_space=pltpu.MemorySpace.VMEM)


def _slab(ref, blocks, name):
    r0, nr, nc = blocks[name]
    return ref[r0:r0 + nr, 0:nc]


# ========================= fused planning kernel =========================
def _planning_kernel(x0_ref, pm_ref, veh_ref, noise_ref, pcost_ref, mask_ref,
                     wconv_ref, wmlp_ref, cv_ref, pv_ref):
    f32 = jnp.float32
    mask = mask_ref[...]                                   # (1, NLANE) interior

    def dotf(a, b):
        return jnp.dot(a, b, preferred_element_type=f32)

    # ---------------- cost encoder: 3x Conv3x3+ReLU, channel-major ----------
    # Activations live as (C, NLANE) values; the padded plane of batch b is at
    # lanes [128*b, 128*b+100).  Tap (ky,kx) is a lane rotation by
    # -(ky-1)*WPAD-(kx-1); interior outputs never read across a batch block.
    def conv3x3(x, wname, bname, cin, cout):
        rw, _, _ = CONV_BLOCKS[wname]
        rb, _, _ = CONV_BLOCKS[bname]
        acc = jnp.zeros((cout, NLANE), f32)
        for ky in range(3):
            for kx in range(3):
                off = (ky - 1) * WPAD + (kx - 1)
                xt = x if off == 0 else pltpu.roll(x, (-off) % NLANE, axis=1)
                t = ky * 3 + kx
                w = wconv_ref[rw + t * cout:rw + (t + 1) * cout, 0:cin]
                acc = acc + dotf(w, xt)
            # 9 shallow matmuls instead of one im2col patch matrix.
        bias = wconv_ref[rb:rb + cout, 0:1]                # (cout, 1)
        # mask re-zeroes border/pad lanes -> valid zero padding for next layer
        return jnp.maximum(acc + bias, 0.0) * mask

    x1 = conv3x3(x0_ref[...], "c1w", "c1b", CIN0, C1)      # (32, 256)
    x2 = conv3x3(x1, "c2w", "c2b", C1, C2)                 # (16, 256)
    x3 = conv3x3(x2, "c3w", "c3b", C2, C3)                 # ( 8, 256)

    rw4, _, _ = CONV_BLOCKS["c4w"]
    rb4, _, _ = CONV_BLOCKS["c4b"]
    w4 = wconv_ref[rw4:rw4 + C3, 0:1]                      # (8, 1)
    cv = jnp.sum(w4 * x3, axis=0, keepdims=True) + wconv_ref[rb4:rb4 + 1, 0:1]
    cv_ref[...] = cv.astype(cv_ref.dtype)                  # (1, 256) lane-dense

    # ---------------- planner MLP stack --------------------------------------
    def mb(name):
        return _slab(wmlp_ref, MLP_BLOCKS, name)

    # state encoding (single concatenated operand -> one fe1 dot)
    st_in = jnp.concatenate([pm_ref[...], veh_ref[...]], axis=1)   # (B, 40)
    h = jnp.maximum(dotf(st_in, mb("fe1w")) + mb("fe1b"), 0.0)
    se = jnp.maximum(dotf(h, mb("fe2w")) + mb("fe2b"), 0.0)        # (B, 32)

    # one merged-N matmul for the three dots that share LHS `se`
    se3 = dotf(se, mb("se_w3"))                                    # (B, 96)
    g = jnp.maximum(se3[:, 0:HIDDEN] + mb("pg1b"), 0.0)
    cp = dotf(g, mb("pg2w")) + mb("pg2b")                          # (B, 30)

    # optimizer layer 1: per-batch constant part + per-candidate noise part
    o1wc = mb("o1wc")
    base_o1 = dotf(cp, o1wc) + se3[:, HIDDEN:2 * HIDDEN] + mb("o1b")   # (B,32)
    h1 = dotf(noise_ref[...], o1wc)                                # (12, 32)
    h1 = jnp.maximum(h1.reshape(NCAND, B, HIDDEN) + base_o1[None],
                     0.0).reshape(NCAND * B, HIDDEN)
    h2 = jnp.maximum(dotf(h1, mb("o2w")) + mb("o2b"), 0.0)         # (12, 32)
    paths = dotf(h2, mb("o3w")) + mb("o3b")                        # (12, 32)
    # lanes HORIZON*3..31 of `paths` are exactly zero (weights padded w/ zeros)

    # value network: merged [first | last | cost] K-block + shared-se part
    vin = jnp.concatenate(
        [paths[:, 0:3], paths[:, (HORIZON - 1) * 3:HORIZON * 3],
         pcost_ref[...]], axis=1)                                  # (12, 14)
    base_v = se3[:, 2 * HIDDEN:3 * HIDDEN] + mb("v1b")             # (B, 32)
    v1 = dotf(vin, mb("v1w"))                                      # (12, 32)
    v1 = jnp.maximum(v1.reshape(NCAND, B, HIDDEN) + base_v[None],
                     0.0).reshape(NCAND * B, HIDDEN)
    v2 = jnp.maximum(dotf(v1, mb("v2w")) + mb("v2b"), 0.0)         # (12, 16)
    vals = dotf(v2, mb("v3w")) + mb("v3b")                         # (12, 1)

    # fold the value into lane HORIZON*3 -> single lane-dense output store
    pv_ref[...] = (paths + vals * mb("onehot_val")).astype(pv_ref.dtype)


def fused_planning_call(x0, pm, veh, noise, pcost, mask, wconv, wmlp):
    args = (x0, pm, veh, noise, pcost, mask, wconv, wmlp)
    return pl.pallas_call(
        _planning_kernel,
        out_shape=(jax.ShapeDtypeStruct((1, NLANE), jnp.float32),       # cost
                   jax.ShapeDtypeStruct((NCAND * B, PV_COLS), jnp.float32)),
        in_specs=[_vmem_spec() for _ in args],
        out_specs=(_vmem_spec(), _vmem_spec()),
        cost_estimate=pl.CostEstimate(flops=10_200_000, transcendentals=0,
                                      bytes_accessed=320_000),
    )(*args)


# ------------------------- parameter init -------------------------
def _init_linear(key, fan_in, fan_out):
    k1, k2 = jax.random.split(key)
    bound = 1.0 / math.sqrt(fan_in)
    w = jax.random.uniform(k1, (fan_in, fan_out), jnp.float32, -bound, bound)
    b = jax.random.uniform(k2, (fan_out,), jnp.float32, -bound, bound)
    return w, b


def _init_conv(key, kh, kw, cin, cout):
    k1, k2 = jax.random.split(key)
    fan_in = cin * kh * kw
    bound = 1.0 / math.sqrt(fan_in)
    w = jax.random.uniform(k1, (kh, kw, cin, cout), jnp.float32, -bound, bound)
    b = jax.random.uniform(k2, (cout,), jnp.float32, -bound, bound)
    return w, b


def init_params(key):
    keys = jax.random.split(key, 16)
    p = {}
    p["fe1"] = _init_linear(keys[0], FEAT + VEH, HIDDEN)
    p["fe2"] = _init_linear(keys[1], HIDDEN, HIDDEN)
    p["c1"] = _init_conv(keys[2], 3, 3, FEAT + PRED, C1)
    p["c2"] = _init_conv(keys[3], 3, 3, C1, C2)
    p["c3"] = _init_conv(keys[4], 3, 3, C2, C3)
    p["c4"] = _init_conv(keys[5], 1, 1, C3, 1)
    p["pg1"] = _init_linear(keys[6], HIDDEN, HIDDEN)
    p["pg2"] = _init_linear(keys[7], HIDDEN, NCP)
    p["o1"] = _init_linear(keys[8], HIDDEN + NCP, HIDDEN)
    p["o2"] = _init_linear(keys[9], HIDDEN, HIDDEN)
    p["o3"] = _init_linear(keys[10], HIDDEN, HORIZON * 3)
    p["v1"] = _init_linear(keys[11], DPF, HIDDEN)
    p["v2"] = _init_linear(keys[12], HIDDEN, HIDDEN // 2)
    p["v3"] = _init_linear(keys[13], HIDDEN // 2, 1)
    return p


# --------------- one-time packing into two lane-padded arrays ---------------
def _set(arr, blocks, name, val):
    r0, nr, nc = blocks[name]
    assert val.shape == (nr, nc), (name, val.shape, (nr, nc))
    return arr.at[r0:r0 + nr, 0:nc].set(val)


def _conv_taps(w):
    """(3,3,cin,cout) -> (9*cout, cin): tap t rows = [t*cout, (t+1)*cout)."""
    kh, kw, cin, cout = w.shape
    return jnp.transpose(w, (0, 1, 3, 2)).reshape(kh * kw * cout, cin)


def prepare_params(p):
    f32 = jnp.float32
    # ---- conv weights + biases ----
    wconv = jnp.zeros((CONV_ROWS, CONV_COLS), f32)
    wconv = _set(wconv, CONV_BLOCKS, "c1w", _conv_taps(p["c1"][0]))
    wconv = _set(wconv, CONV_BLOCKS, "c2w", _conv_taps(p["c2"][0]))
    wconv = _set(wconv, CONV_BLOCKS, "c3w", _conv_taps(p["c3"][0]))
    wconv = _set(wconv, CONV_BLOCKS, "c4w", p["c4"][0].reshape(C3, 1))
    wconv = _set(wconv, CONV_BLOCKS, "c1b", p["c1"][1].reshape(C1, 1))
    wconv = _set(wconv, CONV_BLOCKS, "c2b", p["c2"][1].reshape(C2, 1))
    wconv = _set(wconv, CONV_BLOCKS, "c3b", p["c3"][1].reshape(C3, 1))
    wconv = _set(wconv, CONV_BLOCKS, "c4b", p["c4"][1].reshape(1, 1))

    # ---- MLP weights + biases (split-K / merged-N slices precomputed) ----
    fe1w, fe1b = p["fe1"]
    fe2w, fe2b = p["fe2"]
    pg1w, pg1b = p["pg1"]
    pg2w, pg2b = p["pg2"]
    o1w, o1b = p["o1"]
    o2w, o2b = p["o2"]
    o3w, o3b = p["o3"]
    v1w, v1b = p["v1"]
    v2w, v2b = p["v2"]
    v3w, v3b = p["v3"]

    se_w3 = jnp.concatenate([pg1w, o1w[:HIDDEN], v1w[:HIDDEN]], axis=1)
    o3w_pad = jnp.zeros((HIDDEN, PV_COLS), f32).at[:, :HORIZON * 3].set(o3w)
    o3b_pad = jnp.zeros((1, PV_COLS), f32).at[0, :HORIZON * 3].set(o3b)
    onehot = jnp.zeros((1, PV_COLS), f32).at[0, HORIZON * 3].set(1.0)

    wmlp = jnp.zeros((MLP_ROWS, MLP_COLS), f32)
    wmlp = _set(wmlp, MLP_BLOCKS, "fe1w", fe1w)
    wmlp = _set(wmlp, MLP_BLOCKS, "fe2w", fe2w)
    wmlp = _set(wmlp, MLP_BLOCKS, "se_w3", se_w3)
    wmlp = _set(wmlp, MLP_BLOCKS, "pg2w", pg2w)
    wmlp = _set(wmlp, MLP_BLOCKS, "o1wc", o1w[HIDDEN:])
    wmlp = _set(wmlp, MLP_BLOCKS, "o2w", o2w)
    wmlp = _set(wmlp, MLP_BLOCKS, "o3w", o3w_pad)
    wmlp = _set(wmlp, MLP_BLOCKS, "v1w", v1w[HIDDEN:])
    wmlp = _set(wmlp, MLP_BLOCKS, "v2w", v2w)
    wmlp = _set(wmlp, MLP_BLOCKS, "v3w", v3w)
    wmlp = _set(wmlp, MLP_BLOCKS, "fe1b", fe1b.reshape(1, HIDDEN))
    wmlp = _set(wmlp, MLP_BLOCKS, "fe2b", fe2b.reshape(1, HIDDEN))
    wmlp = _set(wmlp, MLP_BLOCKS, "pg1b", pg1b.reshape(1, HIDDEN))
    wmlp = _set(wmlp, MLP_BLOCKS, "pg2b", pg2b.reshape(1, NCP))
    wmlp = _set(wmlp, MLP_BLOCKS, "o1b", o1b.reshape(1, HIDDEN))
    wmlp = _set(wmlp, MLP_BLOCKS, "o2b", o2b.reshape(1, HIDDEN))
    wmlp = _set(wmlp, MLP_BLOCKS, "o3b", o3b_pad)
    wmlp = _set(wmlp, MLP_BLOCKS, "v1b", v1b.reshape(1, HIDDEN))
    wmlp = _set(wmlp, MLP_BLOCKS, "v2b", v2b.reshape(1, HIDDEN // 2))
    wmlp = _set(wmlp, MLP_BLOCKS, "v3b", v3b.reshape(1, 1))
    wmlp = _set(wmlp, MLP_BLOCKS, "onehot_val", onehot)

    # ---- static interior mask for the flattened padded planes ----
    pos = jnp.arange(NLANE, dtype=jnp.int32)
    pp = pos % LANE
    r = pp // WPAD
    c = pp % WPAD
    interior = ((r >= 1) & (r <= HIMG) & (c >= 1) & (c <= WIMG) & (pp < PLANE))
    mask = interior.astype(f32).reshape(1, NLANE)

    return {"wconv": wconv, "wmlp": wmlp, "mask": mask}


# ------------------------- forward pass -------------------------
@jax.jit
def planning_forward(packed, perception, prediction, vehicle_state,
                     route_features, key):
    del route_features  # unused by the reference forward as well
    bsz = perception.shape[0]

    # cost-encoder input: channel-major, spatially padded, plane flattened into
    # the 128-lane block of its batch (tiny one-time XLA prep).
    x = jnp.concatenate([perception, prediction], axis=1)        # (B, 48, 8, 8)
    x = jnp.pad(x, ((0, 0), (0, 0), (1, 1), (1, 1)))             # (B, 48,10,10)
    x = x.reshape(bsz, CIN0, PLANE)
    x = jnp.pad(x, ((0, 0), (0, 0), (0, LANE - PLANE)))          # (B, 48, 128)
    x0 = jnp.transpose(x, (1, 0, 2)).reshape(CIN0, bsz * LANE)   # (48, 256)

    perc_mean = jnp.mean(perception, axis=(2, 3))                # (B, 32)

    # randomness kept in JAX (matches the reference's torch.randn / torch.rand
    # placeholders).
    k_noise, k_cost = jax.random.split(key)
    scales = 0.1 * jnp.arange(1, NCAND + 1, dtype=jnp.float32)
    noise = (jax.random.normal(k_noise, (NCAND, bsz, NCP), jnp.float32)
             * scales[:, None, None]).reshape(NCAND * bsz, NCP)
    # TODO(synk): sample_cost_along_path is a torch.rand placeholder in the
    # reference; reproduced with jax.random.uniform (no Pallas equivalent).
    path_cost = jax.random.uniform(
        k_cost, (NCAND, bsz, HORIZON), jnp.float32).reshape(NCAND * bsz, HORIZON)

    cv_flat, pv = fused_planning_call(x0, perc_mean, vehicle_state, noise,
                                      path_cost, packed["mask"],
                                      packed["wconv"], packed["wmlp"])

    # cost volume: (1, 256) -> (B, 1, 8, 8)
    cv = cv_flat.reshape(bsz, LANE)[:, :PLANE].reshape(bsz, HPAD, WPAD)
    cost_volume = cv[:, 1:HIMG + 1, 1:WIMG + 1][:, None, :, :]

    # paths / values unpacked from the fused (12, 32) output
    paths = jnp.transpose(
        pv[:, :HORIZON * 3].reshape(NCAND, bsz, HORIZON, 3), (1, 0, 2, 3))
    path_values = jnp.transpose(
        pv[:, HORIZON * 3:HORIZON * 3 + 1].reshape(NCAND, bsz, 1), (1, 0, 2))

    best_idx = jnp.argmax(path_values[:, :, 0], axis=1)          # (B,)
    best_paths = jnp.take_along_axis(
        paths, best_idx[:, None, None, None], axis=1)[:, 0]      # (B, T, 3)

    return {
        "trajectories": paths,
        "values": path_values,
        "best_trajectory": best_paths,
        "cost_volume": cost_volume,
    }


# ------------------------- demo -------------------------
if __name__ == "__main__":
    root = jax.random.PRNGKey(0)
    kp, k1, k2, k3, k4, kfwd = jax.random.split(root, 6)

    params = init_params(kp)
    packed = prepare_params(params)   # one-time weight packing (off hot path)

    perception_features = jax.random.normal(k1, (B, FEAT, HIMG, WIMG),
                                            jnp.float32)
    prediction_features = jax.random.normal(k2, (B, PRED, HIMG, WIMG),
                                            jnp.float32)
    vehicle_state = jax.random.normal(k3, (B, VEH), jnp.float32)
    route_features = jax.random.normal(k4, (B, 16), jnp.float32)

    out = planning_forward(packed, perception_features, prediction_features,
                           vehicle_state, route_features, kfwd)
    out = jax.block_until_ready(out)

    assert out["trajectories"].shape == (B, NCAND, HORIZON, 3)
    assert out["values"].shape == (B, NCAND, 1)
    assert out["best_trajectory"].shape == (B, HORIZON, 3)
    assert out["cost_volume"].shape == (B, 1, HIMG, WIMG)
    assert all(bool(jnp.all(jnp.isfinite(v))) for v in out.values())
    print("KERNEL_OK")
</pallas_src>

<mosaic_0001>
module attributes {stable_mosaic.version = 11 : i64} {
  func.func @_planning_kernel(%arg0: memref<48x256xf32, #tpu.memory_space<vmem>>, %arg1: memref<2x32xf32, #tpu.memory_space<vmem>>, %arg2: memref<2x8xf32, #tpu.memory_space<vmem>>, %arg3: memref<12x30xf32, #tpu.memory_space<vmem>>, %arg4: memref<12x8xf32, #tpu.memory_space<vmem>>, %arg5: memref<1x256xf32, #tpu.memory_space<vmem>>, %arg6: memref<576x48xf32, #tpu.memory_space<vmem>>, %arg7: memref<384x96xf32, #tpu.memory_space<vmem>>, %arg8: memref<1x256xf32, #tpu.memory_space<vmem>>, %arg9: memref<12x32xf32, #tpu.memory_space<vmem>>) attributes {dimension_semantics = [], scalar_prefetch = 0 : i64, scratch_operands = 0 : i64, tpu.core_type = #tpu.core_type<tc>} {
    %c0 = arith.constant 0 : index
    %c0_0 = arith.constant 0 : index
    %0 = vector.load %arg5[%c0, %c0_0] : memref<1x256xf32, #tpu.memory_space<vmem>>, vector<1x256xf32>
    %c0_1 = arith.constant 0 : index
    %c0_2 = arith.constant 0 : index
    %1 = vector.load %arg0[%c0_1, %c0_2] : memref<48x256xf32, #tpu.memory_space<vmem>>, vector<48x256xf32>
    %cst = arith.constant 0.000000e+00 : f32
    %2 = vector.broadcast %cst : f32 to vector<32x256xf32>
    %c11_i32 = arith.constant 11 : i32
    %3 = tpu.dynamic_rotate %1 by %c11_i32 dim 1 : vector<48x256xf32>, i32 -> vector<48x256xf32>
    %c0_3 = arith.constant 0 : index
    %c0_4 = arith.constant 0 : index
    %4 = vector.load %arg6[%c0_3, %c0_4] : memref<576x48xf32, #tpu.memory_space<vmem>>, vector<32x48xf32>
    %cst_5 = arith.constant dense<0.000000e+00> : vector<32x256xf32>
    %5 = tpu.matmul %4, %3, %cst_5 {dimension_numbers = #tpu.dot_dimension_numbers<[1], [0], [0], [1], [0, 0, 1, 1], [], []>} : vector<32x48xf32>, vector<48x256xf32>, vector<32x256xf32> -> vector<32x256xf32>
    %6 = arith.addf %2, %5 : vector<32x256xf32>
    %c10_i32 = arith.constant 10 : i32
    %7 = tpu.dynamic_rotate %1 by %c10_i32 dim 1 : vector<48x256xf32>, i32 -> vector<48x256xf32>
    %c32 = arith.constant 32 : index
    %c0_6 = arith.constant 0 : index
    %8 = vector.load %arg6[%c32, %c0_6] : memref<576x48xf32, #tpu.memory_space<vmem>>, vector<32x48xf32>
    %cst_7 = arith.constant dense<0.000000e+00> : vector<32x256xf32>
    %9 = tpu.matmul %8, %7, %cst_7 {dimension_numbers = #tpu.dot_dimension_numbers<[1], [0], [0], [1], [0, 0, 1, 1], [], []>} : vector<32x48xf32>, vector<48x256xf32>, vector<32x256xf32> -> vector<32x256xf32>
    %10 = arith.addf %6, %9 : vector<32x256xf32>
    %c9_i32 = arith.constant 9 : i32
    %11 = tpu.dynamic_rotate %1 by %c9_i32 dim 1 : vector<48x256xf32>, i32 -> vector<48x256xf32>
    %c64 = arith.constant 64 : index
    %c0_8 = arith.constant 0 : index
    %12 = vector.load %arg6[%c64, %c0_8] : memref<576x48xf32, #tpu.memory_space<vmem>>, vector<32x48xf32>
    %cst_9 = arith.constant dense<0.000000e+00> : vector<32x256xf32>
    %13 = tpu.matmul %12, %11, %cst_9 {dimension_numbers = #tpu.dot_dimension_numbers<[1], [0], [0], [1], [0, 0, 1, 1], [], []>} : vector<32x48xf32>, vector<48x256xf32>, vector<32x256xf32> -> vector<32x256xf32>
    %14 = arith.addf %10, %13 : vector<32x256xf32>
    %c1_i32 = arith.constant 1 : i32
    %15 = tpu.dynamic_rotate %1 by %c1_i32 dim 1 : vector<48x256xf32>, i32 -> vector<48x256xf32>
    %c96 = arith.constant 96 : index
    %c0_10 = arith.constant 0 : index
    %16 = vector.load %arg6[%c96, %c0_10] : memref<576x48xf32, #tpu.memory_space<vmem>>, vector<32x48xf32>
    %cst_11 = arith.constant dense<0.000000e+00> : vector<32x256xf32>
    %17 = tpu.matmul %16, %15, %cst_11 {dimension_numbers = #tpu.dot_dimension_numbers<[1], [0], [0], [1], [0, 0, 1, 1], [], []>} : vector<32x48xf32>, vector<48x256xf32>, vector<32x256xf32> -> vector<32x256xf32>
    %18 = arith.addf %14, %17 : vector<32x256xf32>
    %c128 = arith.constant 128 : index
    %c0_12 = arith.constant 0 : index
    %19 = vector.load %arg6[%c128, %c0_12] : memref<576x48xf32, #tpu.memory_space<vmem>>, vector<32x48xf32>
    %cst_13 = arith.constant dense<0.000000e+00> : vector<32x256xf32>
    %20 = tpu.matmul %19, %1, %cst_13 {dimension_numbers = #tpu.dot_dimension_numbers<[1], [0], [0], [1], [0, 0, 1, 1], [], []>} : vector<32x48xf32>, vector<48x256xf32>, vector<32x256xf32> -> vector<32x256xf32>
    %21 = arith.addf %18, %20 : vector<32x256xf32>
    %c255_i32 = arith.constant 255 : i32
    %22 = tpu.dynamic_rotate %1 by %c255_i32 dim 1 : vector<48x256xf32>, i32 -> vector<48x256xf32>
    %c160 = arith.constant 160 : index
    %c0_14 = arith.constant 0 : index
    %23 = vector.load %arg6[%c160, %c0_14] : memref<576x48xf32, #tpu.memory_space<vmem>>, vector<32x48xf32>
    %cst_15 = arith.constant dense<0.000000e+00> : vector<32x256xf32>
    %24 = tpu.matmul %23, %22, %cst_15 {dimension_numbers = #tpu.dot_dimension_numbers<[1], [0], [0], [1], [0, 0, 1, 1], [], []>} : vector<32x48xf32>, vector<48x256xf32>, vector<32x256xf32> -> vector<32x256xf32>
    %25 = arith.addf %21, %24 : vector<32x256xf32>
    %c247_i32 = arith.constant 247 : i32
    %26 = tpu.dynamic_rotate %1 by %c247_i32 dim 1 : vector<48x256xf32>, i32 -> vector<48x256xf32>
    %c192 = arith.constant 192 : index
    %c0_16 = arith.constant 0 : index
    %27 = vector.load %arg6[%c192, %c0_16] : memref<576x48xf32, #tpu.memory_space<vmem>>, vector<32x48xf32>
    %cst_17 = arith.constant dense<0.000000e+00> : vector<32x256xf32>
    %28 = tpu.matmul %27, %26, %cst_17 {dimension_numbers = #tpu.dot_dimension_numbers<[1], [0], [0], [1], [0, 0, 1, 1], [], []>} : vector<32x48xf32>, vector<48x256xf32>, vector<32x256xf32> -> vector<32x256xf32>
    %29 = arith.addf %25, %28 : vector<32x256xf32>
    %c246_i32 = arith.constant 246 : i32
    %30 = tpu.dynamic_rotate %1 by %c246_i32 dim 1 : vector<48x256xf32>, i32 -> vector<48x256xf32>
    %c224 = arith.constant 224 : index
    %c0_18 = arith.constant 0 : index
    %31 = vector.load %arg6[%c224, %c0_18] : memref<576x48xf32, #tpu.memory_space<vmem>>, vector<32x48xf32>
    %cst_19 = arith.constant dense<0.000000e+00> : vector<32x256xf32>
    %32 = tpu.matmul %31, %30, %cst_19 {dimension_numbers = #tpu.dot_dimension_numbers<[1], [0], [0], [1], [0, 0, 1, 1], [], []>} : vector<32x48xf32>, vector<48x256xf32>, vector<32x256xf32> -> vector<32x256xf32>
    %33 = arith.addf %29, %32 : vector<32x256xf32>
    %c245_i32 = arith.constant 245 : i32
    %34 = tpu.dynamic_rotate %1 by %c245_i32 dim 1 : vector<48x256xf32>, i32 -> vector<48x256xf32>
    %c256 = arith.constant 256 : index
    %c0_20 = arith.constant 0 : index
    %35 = vector.load %arg6[%c256, %c0_20] : memref<576x48xf32, #tpu.memory_space<vmem>>, vector<32x48xf32>
    %cst_21 = arith.constant dense<0.000000e+00> : vector<32x256xf32>
    %36 = tpu.matmul %35, %34, %cst_21 {dimension_numbers = #tpu.dot_dimension_numbers<[1], [0], [0], [1], [0, 0, 1, 1], [], []>} : vector<32x48xf32>, vector<48x256xf32>, vector<32x256xf32> -> vector<32x256xf32>
    %37 = arith.addf %33, %36 : vector<32x256xf32>
    %c512 = arith.constant 512 : index
    %c0_22 = arith.constant 0 : index
    %38 = vector.load %arg6[%c512, %c0_22] : memref<576x48xf32, #tpu.memory_space<vmem>>, vector<32x1xf32>
    %39 = vector.broadcast %38 : vector<32x1xf32> to vector<32x256xf32>
    %40 = arith.addf %37, %39 : vector<32x256xf32>
    %cst_23 = arith.constant 0.000000e+00 : f32
    %41 = vector.broadcast %cst_23 : f32 to vector<32x256xf32>
    %42 = arith.maximumf %40, %41 : vector<32x256xf32>
    %43 = vector.broadcast %0 : vector<1x256xf32> to vector<32x256xf32>
    %44 = arith.mulf %42, %43 : vector<32x256xf32>
    %cst_24 = arith.constant 0.000000e+00 : f32
    %45 = vector.broadcast %cst_24 : f32 to vector<16x256xf32>
    %c11_i32_25 = arith.constant 11 : i32
    %46 = tpu.dynamic_rotate %44 by %c11_i32_25 dim 1 : vector<32x256xf32>, i32 -> vector<32x256xf32>
    %c288 = arith.constant 288 : index
    %c0_26 = arith.constant 0 : index
    %47 = vector.load %arg6[%c288, %c0_26] : memref<576x48xf32, #tpu.memory_space<vmem>>, vector<16x32xf32>
    %cst_27 = arith.constant dense<0.000000e+00> : vector<16x256xf32>
    %48 = tpu.matmul %47, %46, %cst_27 {dimension_numbers = #tpu.dot_dimension_numbers<[1], [0], [0], [1], [0, 0, 1, 1], [], []>} : vector<16x32xf32>, vector<32x256xf32>, vector<16x256xf32> -> vector<16x256xf32>
    %49 = arith.addf %45, %48 : vector<16x256xf32>
    %c10_i32_28 = arith.constant 10 : i32
    %50 = tpu.dynamic_rotate %44 by %c10_i32_28 dim 1 : vector<32x256xf32>, i32 -> vector<32x256xf32>
    %c304 = arith.constant 304 : index
    %c0_29 = arith.constant 0 : index
    %51 = vector.load %arg6[%c304, %c0_29] : memref<576x48xf32, #tpu.memory_space<vmem>>, vector<16x32xf32>
    %cst_30 = arith.constant dense<0.000000e+00> : vector<16x256xf32>
    %52 = tpu.matmul %51, %50, %cst_30 {dimension_numbers = #tpu.dot_dimension_numbers<[1], [0], [0], [1], [0, 0, 1, 1], [], []>} : vector<16x32xf32>, vector<32x256xf32>, vector<16x256xf32> -> vector<16x256xf32>
    %53 = arith.addf %49, %52 : vector<16x256xf32>
    %c9_i32_31 = arith.constant 9 : i32
    %54 = tpu.dynamic_rotate %44 by %c9_i32_31 dim 1 : vector<32x256xf32>, i32 -> vector<32x256xf32>
    %c320 = arith.constant 320 : index
    %c0_32 = arith.constant 0 : index
    %55 = vector.load %arg6[%c320, %c0_32] : memref<576x48xf32, #tpu.memory_space<vmem>>, vector<16x32xf32>
    %cst_33 = arith.constant dense<0.000000e+00> : vector<16x256xf32>
    %56 = tpu.matmul %55, %54, %cst_33 {dimension_numbers = #tpu.dot_dimension_numbers<[1], [0], [0], [1], [0, 0, 1, 1], [], []>} : vector<16x32xf32>, vector<32x256xf32>, vector<16x256xf32> -> vector<16x256xf32>
    %57 = arith.addf %53, %56 : vector<16x256xf32>
    %c1_i32_34 = arith.constant 1 : i32
    %58 = tpu.dynamic_rotate %44 by %c1_i32_34 dim 1 : vector<32x256xf32>, i32 -> vector<32x256xf32>
    %c336 = arith.constant 336 : index
    %c0_35 = arith.constant 0 : index
    %59 = vector.load %arg6[%c336, %c0_35] : memref<576x48xf32, #tpu.memory_space<vmem>>, vector<16x32xf32>
    %cst_36 = arith.constant dense<0.000000e+00> : vector<16x256xf32>
    %60 = tpu.matmul %59, %58, %cst_36 {dimension_numbers = #tpu.dot_dimension_numbers<[1], [0], [0], [1], [0, 0, 1, 1], [], []>} : vector<16x32xf32>, vector<32x256xf32>, vector<16x256xf32> -> vector<16x256xf32>
    %61 = arith.addf %57, %60 : vector<16x256xf32>
    %c352 = arith.constant 352 : index
    %c0_37 = arith.constant 0 : index
    %62 = vector.load %arg6[%c352, %c0_37] : memref<576x48xf32, #tpu.memory_space<vmem>>, vector<16x32xf32>
    %cst_38 = arith.constant dense<0.000000e+00> : vector<16x256xf32>
    %63 = tpu.matmul %62, %44, %cst_38 {dimension_numbers = #tpu.dot_dimension_numbers<[1], [0], [0], [1], [0, 0, 1, 1], [], []>} : vector<16x32xf32>, vector<32x256xf32>, vector<16x256xf32> -> vector<16x256xf32>
    %64 = arith.addf %61, %63 : vector<16x256xf32>
    %c255_i32_39 = arith.constant 255 : i32
    %65 = tpu.dynamic_rotate %44 by %c255_i32_39 dim 1 : vector<32x256xf32>, i32 -> vector<32x256xf32>
    %c368 = arith.constant 368 : index
    %c0_40 = arith.constant 0 : index
    %66 = vector.load %arg6[%c368, %c0_40] : memref<576x48xf32, #tpu.memory_space<vmem>>, vector<16x32xf32>
    %cst_41 = arith.constant dense<0.000000e+00> : vector<16x256xf32>
    %67 = tpu.matmul %66, %65, %cst_41 {dimension_numbers = #tpu.dot_dimension_numbers<[1], [0], [0], [1], [0, 0, 1, 1], [], []>} : vector<16x32xf32>, vector<32x256xf32>, vector<16x256xf32> -> vector<16x256xf32>
    %68 = arith.addf %64, %67 : vector<16x256xf32>
    %c247_i32_42 = arith.constant 247 : i32
    %69 = tpu.dynamic_rotate %44 by %c247_i32_42 dim 1 : vector<32x256xf32>, i32 -> vector<32x256xf32>
    %c384 = arith.constant 384 : index
    %c0_43 = arith.constant 0 : index
    %70 = vector.load %arg6[%c384, %c0_43] : memref<576x48xf32, #tpu.memory_space<vmem>>, vector<16x32xf32>
    %cst_44 = arith.constant dense<0.000000e+00> : vector<16x256xf32>
    %71 = tpu.matmul %70, %69, %cst_44 {dimension_numbers = #tpu.dot_dimension_numbers<[1], [0], [0], [1], [0, 0, 1, 1], [], []>} : vector<16x32xf32>, vector<32x256xf32>, vector<16x256xf32> -> vector<16x256xf32>
    %72 = arith.addf %68, %71 : vector<16x256xf32>
    %c246_i32_45 = arith.constant 246 : i32
    %73 = tpu.dynamic_rotate %44 by %c246_i32_45 dim 1 : vector<32x256xf32>, i32 -> vector<32x256xf32>
    %c400 = arith.constant 400 : index
    %c0_46 = arith.constant 0 : index
    %74 = vector.load %arg6[%c400, %c0_46] : memref<576x48xf32, #tpu.memory_space<vmem>>, vector<16x32xf32>
    %cst_47 = arith.constant dense<0.000000e+00> : vector<16x256xf32>
    %75 = tpu.matmul %74, %73, %cst_47 {dimension_numbers = #tpu.dot_dimension_numbers<[1], [0], [0], [1], [0, 0, 1, 1], [], []>} : vector<16x32xf32>, vector<32x256xf32>, vector<16x256xf32> -> vector<16x256xf32>
    %76 = arith.addf %72, %75 : vector<16x256xf32>
    %c245_i32_48 = arith.constant 245 : i32
    %77 = tpu.dynamic_rotate %44 by %c245_i32_48 dim 1 : vector<32x256xf32>, i32 -> vector<32x256xf32>
    %c416 = arith.constant 416 : index
    %c0_49 = arith.constant 0 : index
    %78 = vector.load %arg6[%c416, %c0_49] : memref<576x48xf32, #tpu.memory_space<vmem>>, vector<16x32xf32>
    %cst_50 = arith.constant dense<0.000000e+00> : vector<16x256xf32>
    %79 = tpu.matmul %78, %77, %cst_50 {dimension_numbers = #tpu.dot_dimension_numbers<[1], [0], [0], [1], [0, 0, 1, 1], [], []>} : vector<16x32xf32>, vector<32x256xf32>, vector<16x256xf32> -> vector<16x256xf32>
    %80 = arith.addf %76, %79 : vector<16x256xf32>
    %c544 = arith.constant 544 : index
    %c0_51 = arith.constant 0 : index
    %81 = vector.load %arg6[%c544, %c0_51] : memref<576x48xf32, #tpu.memory_space<vmem>>, vector<16x1xf32>
    %82 = vector.broadcast %81 : vector<16x1xf32> to vector<16x256xf32>
    %83 = arith.addf %80, %82 : vector<16x256xf32>
    %cst_52 = arith.constant 0.000000e+00 : f32
    %84 = vector.broadcast %cst_52 : f32 to vector<16x256xf32>
    %85 = arith.maximumf %83, %84 : vector<16x256xf32>
    %86 = vector.broadcast %0 : vector<1x256xf32> to vector<16x256xf32>
    %87 = arith.mulf %85, %86 : vector<16x256xf32>
    %cst_53 = arith.constant 0.000000e+00 : f32
    %88 = vector.broadcast %cst_53 : f32 to vector<8x256xf32>
    %c11_i32_54 = arith.constant 11 : i32
    %89 = tpu.dynamic_rotate %87 by %c11_i32_54 dim 1 : vector<16x256xf32>, i32 -> vector<16x256xf32>
    %c432 = arith.constant 432 : index
    %c0_55 = arith.constant 0 : index
    %90 = vector.load %arg6[%c432, %c0_55] : memref<576x48xf32, #tpu.memory_space<vmem>>, vector<8x16xf32>
    %cst_56 = arith.constant dense<0.000000e+00> : vector<8x256xf32>
    %91 = tpu.matmul %90, %89, %cst_56 {dimension_numbers = #tpu.dot_dimension_numbers<[1], [0], [0], [1], [0, 0, 1, 1], [], []>} : vector<8x16xf32>, vector<16x256xf32>, vector<8x256xf32> -> vector<8x256xf32>
    %92 = arith.addf %88, %91 : vector<8x256xf32>
    %c10_i32_57 = arith.constant 10 : i32
    %93 = tpu.dynamic_rotate %87 by %c10_i32_57 dim 1 : vector<16x256xf32>, i32 -> vector<16x256xf32>
    %c440 = arith.constant 440 : index
    %c0_58 = arith.constant 0 : index
    %94 = vector.load %arg6[%c440, %c0_58] : memref<576x48xf32, #tpu.memory_space<vmem>>, vector<8x16xf32>
    %cst_59 = arith.constant dense<0.000000e+00> : vector<8x256xf32>
    %95 = tpu.matmul %94, %93, %cst_59 {dimension_numbers = #tpu.dot_dimension_numbers<[1], [0], [0], [1], [0, 0, 1, 1], [], []>} : vector<8x16xf32>, vector<16x256xf32>, vector<8x256xf32> -> vector<8x256xf32>
    %96 = arith.addf %92, %95 : vector<8x256xf32>
    %c9_i32_60 = arith.constant 9 : i32
    %97 = tpu.dynamic_rotate %87 by %c9_i32_60 dim 1 : vector<16x256xf32>, i32 -> vector<16x256xf32>
    %c448 = arith.constant 448 : index
    %c0_61 = arith.constant 0 : index
    %98 = vector.load %arg6[%c448, %c0_61] : memref<576x48xf32, #tpu.memory_space<vmem>>, vector<8x16xf32>
    %cst_62 = arith.constant dense<0.000000e+00> : vector<8x256xf32>
    %99 = tpu.matmul %98, %97, %cst_62 {dimension_numbers = #tpu.dot_dimension_numbers<[1], [0], [0], [1], [0, 0, 1, 1], [], []>} : vector<8x16xf32>, vector<16x256xf32>, vector<8x256xf32> -> vector<8x256xf32>
    %100 = arith.addf %96, %99 : vector<8x256xf32>
    %c1_i32_63 = arith.constant 1 : i32
    %101 = tpu.dynamic_rotate %87 by %c1_i32_63 dim 1 : vector<16x256xf32>, i32 -> vector<16x256xf32>
    %c456 = arith.constant 456 : index
    %c0_64 = arith.constant 0 : index
    %102 = vector.load %arg6[%c456, %c0_64] : memref<576x48xf32, #tpu.memory_space<vmem>>, vector<8x16xf32>
    %cst_65 = arith.constant dense<0.000000e+00> : vector<8x256xf32>
    %103 = tpu.matmul %102, %101, %cst_65 {dimension_numbers = #tpu.dot_dimension_numbers<[1], [0], [0], [1], [0, 0, 1, 1], [], []>} : vector<8x16xf32>, vector<16x256xf32>, vector<8x256xf32> -> vector<8x256xf32>
    %104 = arith.addf %100, %103 : vector<8x256xf32>
    %c464 = arith.constant 464 : index
    %c0_66 = arith.constant 0 : index
    %105 = vector.load %arg6[%c464, %c0_66] : memref<576x48xf32, #tpu.memory_space<vmem>>, vector<8x16xf32>
    %cst_67 = arith.constant dense<0.000000e+00> : vector<8x256xf32>
    %106 = tpu.matmul %105, %87, %cst_67 {dimension_numbers = #tpu.dot_dimension_numbers<[1], [0], [0], [1], [0, 0, 1, 1], [], []>} : vector<8x16xf32>, vector<16x256xf32>, vector<8x256xf32> -> vector<8x256xf32>
    %107 = arith.addf %104, %106 : vector<8x256xf32>
    %c255_i32_68 = arith.constant 255 : i32
    %108 = tpu.dynamic_rotate %87 by %c255_i32_68 dim 1 : vector<16x256xf32>, i32 -> vector<16x256xf32>
    %c472 = arith.constant 472 : index
    %c0_69 = arith.constant 0 : index
    %109 = vector.load %arg6[%c472, %c0_69] : memref<576x48xf32, #tpu.memory_space<vmem>>, vector<8x16xf32>
    %cst_70 = arith.constant dense<0.000000e+00> : vector<8x256xf32>
    %110 = tpu.matmul %109, %108, %cst_70 {dimension_numbers = #tpu.dot_dimension_numbers<[1], [0], [0], [1], [0, 0, 1, 1], [], []>} : vector<8x16xf32>, vector<16x256xf32>, vector<8x256xf32> -> vector<8x256xf32>
    %111 = arith.addf %107, %110 : vector<8x256xf32>
    %c247_i32_71 = arith.constant 247 : i32
    %112 = tpu.dynamic_rotate %87 by %c247_i32_71 dim 1 : vector<16x256xf32>, i32 -> vector<16x256xf32>
    %c480 = arith.constant 480 : index
    %c0_72 = arith.constant 0 : index
    %113 = vector.load %arg6[%c480, %c0_72] : memref<576x48xf32, #tpu.memory_space<vmem>>, vector<8x16xf32>
    %cst_73 = arith.constant dense<0.000000e+00> : vector<8x256xf32>
    %114 = tpu.matmul %113, %112, %cst_73 {dimension_numbers = #tpu.dot_dimension_numbers<[1], [0], [0], [1], [0, 0, 1, 1], [], []>} : vector<8x16xf32>, vector<16x256xf32>, vector<8x256xf32> -> vector<8x256xf32>
    %115 = arith.addf %111, %114 : vector<8x256xf32>
    %c246_i32_74 = arith.constant 246 : i32
    %116 = tpu.dynamic_rotate %87 by %c246_i32_74 dim 1 : vector<16x256xf32>, i32 -> vector<16x256xf32>
    %c488 = arith.constant 488 : index
    %c0_75 = arith.constant 0 : index
    %117 = vector.load %arg6[%c488, %c0_75] : memref<576x48xf32, #tpu.memory_space<vmem>>, vector<8x16xf32>
    %cst_76 = arith.constant dense<0.000000e+00> : vector<8x256xf32>
    %118 = tpu.matmul %117, %116, %cst_76 {dimension_numbers = #tpu.dot_dimension_numbers<[1], [0], [0], [1], [0, 0, 1, 1], [], []>} : vector<8x16xf32>, vector<16x256xf32>, vector<8x256xf32> -> vector<8x256xf32>
    %119 = arith.addf %115, %118 : vector<8x256xf32>
    %c245_i32_77 = arith.constant 245 : i32
    %120 = tpu.dynamic_rotate %87 by %c245_i32_77 dim 1 : vector<16x256xf32>, i32 -> vector<16x256xf32>
    %c496 = arith.constant 496 : index
    %c0_78 = arith.constant 0 : index
    %121 = vector.load %arg6[%c496, %c0_78] : memref<576x48xf32, #tpu.memory_space<vmem>>, vector<8x16xf32>
    %cst_79 = arith.constant dense<0.000000e+00> : vector<8x256xf32>
    %122 = tpu.matmul %121, %120, %cst_79 {dimension_numbers = #tpu.dot_dimension_numbers<[1], [0], [0], [1], [0, 0, 1, 1], [], []>} : vector<8x16xf32>, vector<16x256xf32>, vector<8x256xf32> -> vector<8x256xf32>
    %123 = arith.addf %119, %122 : vector<8x256xf32>
    %c560 = arith.constant 560 : index
    %c0_80 = arith.constant 0 : index
    %124 = vector.load %arg6[%c560, %c0_80] : memref<576x48xf32, #tpu.memory_space<vmem>>, vector<8x1xf32>
    %125 = vector.broadcast %124 : vector<8x1xf32> to vector<8x256xf32>
    %126 = arith.addf %123, %125 : vector<8x256xf32>
    %cst_81 = arith.constant 0.000000e+00 : f32
    %127 = vector.broadcast %cst_81 : f32 to vector<8x256xf32>
    %128 = arith.maximumf %126, %127 : vector<8x256xf32>
    %129 = vector.broadcast %0 : vector<1x256xf32> to vector<8x256xf32>
    %130 = arith.mulf %128, %129 : vector<8x256xf32>
    %c504 = arith.constant 504 : index
    %c0_82 = arith.constant 0 : index
    %131 = vector.load %arg6[%c504, %c0_82] : memref<576x48xf32, #tpu.memory_space<vmem>>, vector<8x1xf32>
    %132 = vector.broadcast %131 : vector<8x1xf32> to vector<8x256xf32>
    %133 = arith.mulf %132, %130 : vector<8x256xf32>
    %cst_83 = arith.constant dense<0.000000e+00> : vector<256xf32>
    %134 = vector.multi_reduction <add>, %133, %cst_83 [0] : vector<8x256xf32> to vector<256xf32>
    %135 = vector.shape_cast %134 : vector<256xf32> to vector<1x256xf32>
    %c568 = arith.constant 568 : index
    %c0_84 = arith.constant 0 : index
    %136 = vector.load %arg6[%c568, %c0_84] : memref<576x48xf32, #tpu.memory_space<vmem>>, vector<1x1xf32>
    %137 = vector.broadcast %136 : vector<1x1xf32> to vector<1x256xf32>
    %138 = arith.addf %135, %137 : vector<1x256xf32>
    %c0_85 = arith.constant 0 : index
    %c0_86 = arith.constant 0 : index
    %139 = vector.load %arg8[%c0_85, %c0_86] : memref<1x256xf32, #tpu.memory_space<vmem>>, vector<1x256xf32>
    tpu.vector_store %arg8[%c0_85, %c0_86], %138 {strides = array<i32>} : memref<1x256xf32, #tpu.memory_space<vmem>>, vector<1x256xf32>,
    %c0_87 = arith.constant 0 : index
    %c0_88 = arith.constant 0 : index
    %140 = vector.load %arg1[%c0_87, %c0_88] : memref<2x32xf32, #tpu.memory_space<vmem>>, vector<2x32xf32>
    %c0_89 = arith.constant 0 : index
    %c0_90 = arith.constant 0 : index
    %141 = vector.load %arg2[%c0_89, %c0_90] : memref<2x8xf32, #tpu.memory_space<vmem>>, vector<2x8xf32>
    %142 = tpu.concatenate %140, %141 in 1 : vector<2x32xf32>, vector<2x8xf32> -> vector<2x40xf32>
    %c0_91 = arith.constant 0 : index
    %c0_92 = arith.constant 0 : index
    %143 = vector.load %arg7[%c0_91, %c0_92] : memref<384x96xf32, #tpu.memory_space<vmem>>, vector<40x32xf32>
    %cst_93 = arith.constant dense<0.000000e+00> : vector<2x32xf32>
    %144 = tpu.matmul %142, %143, %cst_93 {dimension_numbers = #tpu.dot_dimension_numbers<[1], [0], [0], [1], [0, 0, 1, 1], [], []>} : vector<2x40xf32>, vector<40x32xf32>, vector<2x32xf32> -> vector<2x32xf32>
    %c296 = arith.constant 296 : index
    %c0_94 = arith.constant 0 : index
    %145 = vector.load %arg7[%c296, %c0_94] : memref<384x96xf32, #tpu.memory_space<vmem>>, vector<1x32xf32>
    %146 = vector.broadcast %145 : vector<1x32xf32> to vector<2x32xf32>
    %147 = arith.addf %144, %146 : vector<2x32xf32>
    %cst_95 = arith.constant 0.000000e+00 : f32
    %148 = vector.broadcast %cst_95 : f32 to vector<2x32xf32>
    %149 = arith.maximumf %147, %148 : vector<2x32xf32>
    %c40 = arith.constant 40 : index
    %c0_96 = arith.constant 0 : index
    %150 = vector.load %arg7[%c40, %c0_96] : memref<384x96xf32, #tpu.memory_space<vmem>>, vector<32x32xf32>
    %cst_97 = arith.constant dense<0.000000e+00> : vector<2x32xf32>
    %151 = tpu.matmul %149, %150, %cst_97 {dimension_numbers = #tpu.dot_dimension_numbers<[1], [0], [0], [1], [0, 0, 1, 1], [], []>} : vector<2x32xf32>, vector<32x32xf32>, vector<2x32xf32> -> vector<2x32xf32>
    %c304_98 = arith.constant 304 : index
    %c0_99 = arith.constant 0 : index
    %152 = vector.load %arg7[%c304_98, %c0_99] : memref<384x96xf32, #tpu.memory_space<vmem>>, vector<1x32xf32>
    %153 = vector.broadcast %152 : vector<1x32xf32> to vector<2x32xf32>
    %154 = arith.addf %151, %153 : vector<2x32xf32>
    %cst_100 = arith.constant 0.000000e+00 : f32
    %155 = vector.broadcast %cst_100 : f32 to vector<2x32xf32>
    %156 = arith.maximumf %154, %155 : vector<2x32xf32>
    %c72 = arith.constant 72 : index
    %c0_101 = arith.constant 0 : index
    %157 = vector.load %arg7[%c72, %c0_101] : memref<384x96xf32, #tpu.memory_space<vmem>>, vector<32x96xf32>
    %cst_102 = arith.constant dense<0.000000e+00> : vector<2x96xf32>
    %158 = tpu.matmul %156, %157, %cst_102 {dimension_numbers = #tpu.dot_dimension_numbers<[1], [0], [0], [1], [0, 0, 1, 1], [], []>} : vector<2x32xf32>, vector<32x96xf32>, vector<2x96xf32> -> vector<2x96xf32>
    %159 = vector.extract_strided_slice %158 {offsets = [0, 0], sizes = [2, 32], strides = [1, 1]} : vector<2x96xf32> to vector<2x32xf32>
    %c312 = arith.constant 312 : index
    %c0_103 = arith.constant 0 : index
    %160 = vector.load %arg7[%c312, %c0_103] : memref<384x96xf32, #tpu.memory_space<vmem>>, vector<1x32xf32>
    %161 = vector.broadcast %160 : vector<1x32xf32> to vector<2x32xf32>
    %162 = arith.addf %159, %161 : vector<2x32xf32>
    %cst_104 = arith.constant 0.000000e+00 : f32
    %163 = vector.broadcast %cst_104 : f32 to vector<2x32xf32>
    %164 = arith.maximumf %162, %163 : vector<2x32xf32>
    %c104 = arith.constant 104 : index
    %c0_105 = arith.constant 0 : index
    %165 = vector.load %arg7[%c104, %c0_105] : memref<384x96xf32, #tpu.memory_space<vmem>>, vector<32x30xf32>
    %cst_106 = arith.constant dense<0.000000e+00> : vector<2x30xf32>
    %166 = tpu.matmul %164, %165, %cst_106 {dimension_numbers = #tpu.dot_dimension_numbers<[1], [0], [0], [1], [0, 0, 1, 1], [], []>} : vector<2x32xf32>, vector<32x30xf32>, vector<2x30xf32> -> vector<2x30xf32>
    %c320_107 = arith.constant 320 : index
    %c0_108 = arith.constant 0 : index
    %167 = vector.load %arg7[%c320_107, %c0_108] : memref<384x96xf32, #tpu.memory_space<vmem>>, vector<1x30xf32>
    %168 = vector.broadcast %167 : vector<1x30xf32> to vector<2x30xf32>
    %169 = arith.addf %166, %168 : vector<2x30xf32>
    %c136 = arith.constant 136 : index
    %c0_109 = arith.constant 0 : index
    %170 = vector.load %arg7[%c136, %c0_109] : memref<384x96xf32, #tpu.memory_space<vmem>>, vector<30x32xf32>
    %cst_110 = arith.constant dense<0.000000e+00> : vector<2x32xf32>
    %171 = tpu.matmul %169, %170, %cst_110 {dimension_numbers = #tpu.dot_dimension_numbers<[1], [0], [0], [1], [0, 0, 1, 1], [], []>} : vector<2x30xf32>, vector<30x32xf32>, vector<2x32xf32> -> vector<2x32xf32>
    %172 = vector.extract_strided_slice %158 {offsets = [0, 32], sizes = [2, 32], strides = [1, 1]} : vector<2x96xf32> to vector<2x32xf32>
    %173 = arith.addf %171, %172 : vector<2x32xf32>
    %c328 = arith.constant 328 : index
    %c0_111 = arith.constant 0 : index
    %174 = vector.load %arg7[%c328, %c0_111] : memref<384x96xf32, #tpu.memory_space<vmem>>, vector<1x32xf32>
    %175 = vector.broadcast %174 : vector<1x32xf32> to vector<2x32xf32>
    %176 = arith.addf %173, %175 : vector<2x32xf32>
    %c0_112 = arith.constant 0 : index
    %c0_113 = arith.constant 0 : index
    %177 = vector.load %arg3[%c0_112, %c0_113] : memref<12x30xf32, #tpu.memory_space<vmem>>, vector<12x30xf32>
    %cst_114 = arith.constant dense<0.000000e+00> : vector<12x32xf32>
    %178 = tpu.matmul %177, %170, %cst_114 {dimension_numbers = #tpu.dot_dimension_numbers<[1], [0], [0], [1], [0, 0, 1, 1], [], []>} : vector<12x30xf32>, vector<30x32xf32>, vector<12x32xf32> -> vector<12x32xf32>
    %179 = vector.shape_cast %178 : vector<12x32xf32> to vector<6x2x32xf32>
    %180 = vector.shape_cast %176 : vector<2x32xf32> to vector<1x2x32xf32>
    %181 = vector.broadcast %180 : vector<1x2x32xf32> to vector<6x2x32xf32>
    %182 = arith.addf %179, %181 : vector<6x2x32xf32>
    %cst_115 = arith.constant 0.000000e+00 : f32
    %183 = vector.broadcast %cst_115 : f32 to vector<6x2x32xf32>
    %184 = arith.maximumf %182, %183 : vector<6x2x32xf32>
    %185 = vector.shape_cast %184 : vector<6x2x32xf32> to vector<12x32xf32>
    %c168 = arith.constant 168 : index
    %c0_116 = arith.constant 0 : index
    %186 = vector.load %arg7[%c168, %c0_116] : memref<384x96xf32, #tpu.memory_space<vmem>>, vector<32x32xf32>
    %cst_117 = arith.constant dense<0.000000e+00> : vector<12x32xf32>
    %187 = tpu.matmul %185, %186, %cst_117 {dimension_numbers = #tpu.dot_dimension_numbers<[1], [0], [0], [1], [0, 0, 1, 1], [], []>} : vector<12x32xf32>, vector<32x32xf32>, vector<12x32xf32> -> vector<12x32xf32>
    %c336_118 = arith.constant 336 : index
    %c0_119 = arith.constant 0 : index
    %188 = vector.load %arg7[%c336_118, %c0_119] : memref<384x96xf32, #tpu.memory_space<vmem>>, vector<1x32xf32>
    %189 = vector.broadcast %188 : vector<1x32xf32> to vector<12x32xf32>
    %190 = arith.addf %187, %189 : vector<12x32xf32>
    %cst_120 = arith.constant 0.000000e+00 : f32
    %191 = vector.broadcast %cst_120 : f32 to vector<12x32xf32>
    %192 = arith.maximumf %190, %191 : vector<12x32xf32>
    %c200 = arith.constant 200 : index
    %c0_121 = arith.constant 0 : index
    %193 = vector.load %arg7[%c200, %c0_121] : memref<384x96xf32, #tpu.memory_space<vmem>>, vector<32x32xf32>
    %cst_122 = arith.constant dense<0.000000e+00> : vector<12x32xf32>
    %194 = tpu.matmul %192, %193, %cst_122 {dimension_numbers = #tpu.dot_dimension_numbers<[1], [0], [0], [1], [0, 0, 1, 1], [], []>} : vector<12x32xf32>, vector<32x32xf32>, vector<12x32xf32> -> vector<12x32xf32>
    %c344 = arith.constant 344 : index
    %c0_123 = arith.constant 0 : index
    %195 = vector.load %arg7[%c344, %c0_123] : memref<384x96xf32, #tpu.memory_space<vmem>>, vector<1x32xf32>
    %196 = vector.broadcast %195 : vector<1x32xf32> to vector<12x32xf32>
    %197 = arith.addf %194, %196 : vector<12x32xf32>
    %198 = vector.extract_strided_slice %197 {offsets = [0, 0], sizes = [12, 3], strides = [1, 1]} : vector<12x32xf32> to vector<12x3xf32>
    %199 = vector.extract_strided_slice %197 {offsets = [0, 21], sizes = [12, 3], strides = [1, 1]} : vector<12x32xf32> to vector<12x3xf32>
    %c0_124 = arith.constant 0 : index
    %c0_125 = arith.constant 0 : index
    %200 = vector.load %arg4[%c0_124, %c0_125] : memref<12x8xf32, #tpu.memory_space<vmem>>, vector<12x8xf32>
    %201 = tpu.concatenate %198, %199, %200 in 1 : vector<12x3xf32>, vector<12x3xf32>, vector<12x8xf32> -> vector<12x14xf32>
    %202 = vector.extract_strided_slice %158 {offsets = [0, 64], sizes = [2, 32], strides = [1, 1]} : vector<2x96xf32> to vector<2x32xf32>
    %c352_126 = arith.constant 352 : index
    %c0_127 = arith.constant 0 : index
    %203 = vector.load %arg7[%c352_126, %c0_127] : memref<384x96xf32, #tpu.memory_space<vmem>>, vector<1x32xf32>
    %204 = vector.broadcast %203 : vector<1x32xf32> to vector<2x32xf32>
    %205 = arith.addf %202, %204 : vector<2x32xf32>
    %c232 = arith.constant 232 : index
    %c0_128 = arith.constant 0 : index
    %206 = vector.load %arg7[%c232, %c0_128] : memref<384x96xf32, #tpu.memory_space<vmem>>, vector<14x32xf32>
    %cst_129 = arith.constant dense<0.000000e+00> : vector<12x32xf32>
    %207 = tpu.matmul %201, %206, %cst_129 {dimension_numbers = #tpu.dot_dimension_numbers<[1], [0], [0], [1], [0, 0, 1, 1], [], []>} : vector<12x14xf32>, vector<14x32xf32>, vector<12x32xf32> -> vector<12x32xf32>
    %208 = vector.shape_cast %207 : vector<12x32xf32> to vector<6x2x32xf32>
    %209 = vector.shape_cast %205 : vector<2x32xf32> to vector<1x2x32xf32>
    %210 = vector.broadcast %209 : vector<1x2x32xf32> to vector<6x2x32xf32>
    %211 = arith.addf %208, %210 : vector<6x2x32xf32>
    %cst_130 = arith.constant 0.000000e+00 : f32
    %212 = vector.broadcast %cst_130 : f32 to vector<6x2x32xf32>
    %213 = arith.maximumf %211, %212 : vector<6x2x32xf32>
    %214 = vector.shape_cast %213 : vector<6x2x32xf32> to vector<12x32xf32>
    %c248 = arith.constant 248 : index
    %c0_131 = arith.constant 0 : index
    %215 = vector.load %arg7[%c248, %c0_131] : memref<384x96xf32, #tpu.memory_space<vmem>>, vector<32x16xf32>
    %cst_132 = arith.constant dense<0.000000e+00> : vector<12x16xf32>
    %216 = tpu.matmul %214, %215, %cst_132 {dimension_numbers = #tpu.dot_dimension_numbers<[1], [0], [0], [1], [0, 0, 1, 1], [], []>} : vector<12x32xf32>, vector<32x16xf32>, vector<12x16xf32> -> vector<12x16xf32>
    %c360 = arith.constant 360 : index
    %c0_133 = arith.constant 0 : index
    %217 = vector.load %arg7[%c360, %c0_133] : memref<384x96xf32, #tpu.memory_space<vmem>>, vector<1x16xf32>
    %218 = vector.broadcast %217 : vector<1x16xf32> to vector<12x16xf32>
    %219 = arith.addf %216, %218 : vector<12x16xf32>
    %cst_134 = arith.constant 0.000000e+00 : f32
    %220 = vector.broadcast %cst_134 : f32 to vector<12x16xf32>
    %221 = arith.maximumf %219, %220 : vector<12x16xf32>
    %c280 = arith.constant 280 : index
    %c0_135 = arith.constant 0 : index
    %222 = vector.load %arg7[%c280, %c0_135] : memref<384x96xf32, #tpu.memory_space<vmem>>, vector<16x1xf32>
    %cst_136 = arith.constant dense<0.000000e+00> : vector<12x1xf32>
    %223 = tpu.matmul %221, %222, %cst_136 {dimension_numbers = #tpu.dot_dimension_numbers<[1], [0], [0], [1], [0, 0, 1, 1], [], []>} : vector<12x16xf32>, vector<16x1xf32>, vector<12x1xf32> -> vector<12x1xf32>
    %c368_137 = arith.constant 368 : index
    %c0_138 = arith.constant 0 : index
    %224 = vector.load %arg7[%c368_137, %c0_138] : memref<384x96xf32, #tpu.memory_space<vmem>>, vector<1x1xf32>
    %225 = vector.broadcast %224 : vector<1x1xf32> to vector<12x1xf32>
    %226 = arith.addf %223, %225 : vector<12x1xf32>
    %c376 = arith.constant 376 : index
    %c0_139 = arith.constant 0 : index
    %227 = vector.load %arg7[%c376, %c0_139] : memref<384x96xf32, #tpu.memory_space<vmem>>, vector<1x32xf32>
    %228 = vector.broadcast %226 : vector<12x1xf32> to vector<12x32xf32>
    %229 = vector.broadcast %227 : vector<1x32xf32> to vector<12x32xf32>
    %230 = arith.mulf %228, %229 : vector<12x32xf32>
    %231 = arith.addf %197, %230 : vector<12x32xf32>
    %c0_140 = arith.constant 0 : index
    %c0_141 = arith.constant 0 : index
    %232 = vector.load %arg9[%c0_140, %c0_141] : memref<12x32xf32, #tpu.memory_space<vmem>>, vector<12x32xf32>
    tpu.vector_store %arg9[%c0_140, %c0_141], %231 {strides = array<i32>} : memref<12x32xf32, #tpu.memory_space<vmem>>, vector<12x32xf32>,
    return
  }
}

</mosaic_0001>

<llo_original>
// kernel: planning_forward.3
$region0: #{planning_forward.3}
  #allocation0 [shape = 'u32[]', space=smem, size = 0x4, offset = 0x4, fixed_abs, tag = 'smem constant byte address 0x4 - core index']
  #allocation1 [shape = 'u32[144,128]{1,0:T(1,128)}', space=vmem, size = 0x12000, scoped, tag = 'internal scratch']
  %s0 = inlined_call_operand.vmem [shape: f32[48,256], index: 0, kind: input, shape index: {}]
  %s1 = inlined_call_operand.vmem [shape: f32[2,32], index: 1, kind: input, shape index: {}]
  %s2 = inlined_call_operand.vmem [shape: f32[2,8], index: 2, kind: input, shape index: {}]
  %s3 = inlined_call_operand.vmem [shape: f32[12,30], index: 3, kind: input, shape index: {}]
  %s4 = inlined_call_operand.vmem [shape: f32[12,8], index: 4, kind: input, shape index: {}]
  %s5 = inlined_call_operand.vmem [shape: f32[1,256], index: 5, kind: input, shape index: {}]
  %s6 = inlined_call_operand.vmem [shape: f32[576,48], index: 6, kind: input, shape index: {}]
  %s7 = inlined_call_operand.vmem [shape: f32[384,96], index: 7, kind: input, shape index: {}]
  %s8 = inlined_call_operand.vmem [shape: f32[1,256], index: 8, kind: output, shape index: {0}]
  %s9 = inlined_call_operand.vmem [shape: f32[12,32], index: 9, kind: output, shape index: {1}]
  %10 = xla_tuple %s8, %s9
  %s11 = sld [smem:[#allocation0]]
  $region50: #{planning_forward.3} parent=0
    _
  %s13 = ssub.s32 1, %s11
  %s14 = scalar_select 0, %s13, %s11
  // Predicated region
  $region2: #{planning_forward.3} parent=0 // pred_check
    _
  $region3: #{planning_forward.3} parent=0 // pred_check_branch
    %16 = sbr.rel (0) target = $region5
  $region4: #{planning_forward.3} parent=0 // pred_region
    _
  $region5: #{planning_forward.3} parent=0 // pred_fallthru
    _
  // Predicated region
  $region6: #{planning_forward.3} parent=0 // pred_check
    _
  $region7: #{planning_forward.3} parent=0 // pred_check_branch
    %18 = sbr.rel (0) target = $region9
  $region8: #{planning_forward.3} parent=0 // pred_region
    _
  $region9: #{planning_forward.3} parent=0 // pred_fallthru
    _
  // Predicated region
  $region10: #{planning_forward.3} parent=0 // pred_check
    _
  $region11: #{planning_forward.3} parent=0 // pred_check_branch
    %20 = sbr.rel (0) target = $region13
  $region12: #{planning_forward.3} parent=0 // pred_region
    _
  $region13: #{planning_forward.3} parent=0 // pred_fallthru
    _
  // Predicated region
  $region14: #{planning_forward.3} parent=0 // pred_check
    _
  $region15: #{planning_forward.3} parent=0 // pred_check_branch
    %22 = sbr.rel (0) target = $region17
  $region16: #{planning_forward.3} parent=0 // pred_region
    _
  $region17: #{planning_forward.3} parent=0 // pred_fallthru
    _
  // Predicated region
  $region18: #{planning_forward.3} parent=0 // pred_check
    _
  $region19: #{planning_forward.3} parent=0 // pred_check_branch
    %24 = sbr.rel (0) target = $region21
  $region20: #{planning_forward.3} parent=0 // pred_region
    _
  $region21: #{planning_forward.3} parent=0 // pred_fallthru
    _
  // Predicated region
  $region22: #{planning_forward.3} parent=0 // pred_check
    _
  $region23: #{planning_forward.3} parent=0 // pred_check_branch
    %26 = sbr.rel (0) target = $region25
  $region24: #{planning_forward.3} parent=0 // pred_region
    _
  $region25: #{planning_forward.3} parent=0 // pred_fallthru
    _
  // Predicated region
  $region26: #{planning_forward.3} parent=0 // pred_check
    _
  $region27: #{planning_forward.3} parent=0 // pred_check_branch
    %28 = sbr.rel (0) target = $region29
  $region28: #{planning_forward.3} parent=0 // pred_region
    _
  $region29: #{planning_forward.3} parent=0 // pred_fallthru
    _
  // Predicated region
  $region30: #{planning_forward.3} parent=0 // pred_check
    _
  $region31: #{planning_forward.3} parent=0 // pred_check_branch
    %30 = sbr.rel (0) target = $region33
  $region32: #{planning_forward.3} parent=0 // pred_region
    _
  $region33: #{planning_forward.3} parent=0 // pred_fallthru
    _
  %v31 = vld [vmem:[%s5] sm:$0x3]
  %v32 = vld [vmem:[%s0] sm:$0xff]
  %v33 = vld [vmem:[%s0 + $0x8] sm:$0xff]
  %v34 = vld [vmem:[%s0 + $0x10] sm:$0xff]
  %v35 = vld [vmem:[%s0 + $0x18] sm:$0xff]
  %v36 = vld [vmem:[%s0 + $0x20] sm:$0xff]
  %v37 = vld [vmem:[%s0 + $0x28] sm:$0xff]
  %v38 = vld [vmem:[%s0 + $0x30] sm:$0xff]
  %v39 = vld [vmem:[%s0 + $0x38] sm:$0xff]
  %v40 = vld [vmem:[%s0 + $0x40] sm:$0xff]
  %v41 = vld [vmem:[%s0 + $0x48] sm:$0xff]
  %v42 = vld [vmem:[%s0 + $0x50] sm:$0xff]
  %v43 = vld [vmem:[%s0 + $0x58] sm:$0xff]
  %44 = vrot.lane.b32.xlu0 %v32, 11
  %v45 = vpop.permute.xlu0 %44
  %46 = vrot.lane.b32.xlu0 %v34, 11
  %v47 = vpop.permute.xlu0 %46
  %48 = vrot.lane.b32.xlu0 %v36, 11
  %v49 = vpop.permute.xlu0 %48
  %50 = vrot.lane.b32.xlu0 %v38, 11
  %v51 = vpop.permute.xlu0 %50
  %52 = vrot.lane.b32.xlu0 %v40, 11
  %v53 = vpop.permute.xlu0 %52
  %54 = vrot.lane.b32.xlu0 %v42, 11
  %v55 = vpop.permute.xlu0 %54
  %56 = vrot.lane.b32.xlu0 %v33, 11
  %v57 = vpop.permute.xlu0 %56
  %58 = vrot.lane.b32.xlu0 %v35, 11
  %v59 = vpop.permute.xlu0 %58
  %60 = vrot.lane.b32.xlu0 %v37, 11
  %v61 = vpop.permute.xlu0 %60
  %62 = vrot.lane.b32.xlu0 %v39, 11
  %v63 = vpop.permute.xlu0 %62
  %64 = vrot.lane.b32.xlu0 %v41, 11
  %v65 = vpop.permute.xlu0 %64
  %66 = vrot.lane.b32.xlu0 %v43, 11
  %v67 = vpop.permute.xlu0 %66
  %v68 = vlaneseq
  %v69 = vand.u32 %v68, 127
  %vm70 = vcmp.lt.s32.totalorder %v69, 11
  %v71 = vsel %vm70, %v45, %v57
  %v72 = vsel %vm70, %v47, %v59
  %v73 = vsel %vm70, %v49, %v61
  %v74 = vsel %vm70, %v51, %v63
  %v75 = vsel %vm70, %v53, %v65
  %v76 = vsel %vm70, %v55, %v67
  %v77 = vsel %vm70, %v57, %v45
  %v78 = vsel %vm70, %v59, %v47
  %v79 = vsel %vm70, %v61, %v49
  %v80 = vsel %vm70, %v63, %v51
  %v81 = vsel %vm70, %v65, %v53
  %v82 = vsel %vm70, %v67, %v55
  %v83 = vld [vmem:[%s6] sm:$0xff]
  %v84 = vld [vmem:[%s6 + $0x8] sm:$0xff]
  %v85 = vld [vmem:[%s6 + $0x10] sm:$0xff]
  %v86 = vld [vmem:[%s6 + $0x18] sm:$0xff]
  %87 = vrot.lane.b32.xlu0 %v32, 10
  %v88 = vpop.permute.xlu0 %87
  %89 = vrot.lane.b32.xlu0 %v34, 10
  %v90 = vpop.permute.xlu0 %89
  %91 = vrot.lane.b32.xlu0 %v36, 10
  %v92 = vpop.permute.xlu0 %91
  %93 = vrot.lane.b32.xlu0 %v38, 10
  %v94 = vpop.permute.xlu0 %93
  %95 = vrot.lane.b32.xlu0 %v40, 10
  %v96 = vpop.permute.xlu0 %95
  %97 = vrot.lane.b32.xlu0 %v42, 10
  %v98 = vpop.permute.xlu0 %97
  %99 = vrot.lane.b32.xlu0 %v33, 10
  %v100 = vpop.permute.xlu0 %99
  %101 = vrot.lane.b32.xlu0 %v35, 10
  %v102 = vpop.permute.xlu0 %101
  %103 = vrot.lane.b32.xlu0 %v37, 10
  %v104 = vpop.permute.xlu0 %103
  %105 = vrot.lane.b32.xlu0 %v39, 10
  %v106 = vpop.permute.xlu0 %105
  %107 = vrot.lane.b32.xlu0 %v41, 10
  %v108 = vpop.permute.xlu0 %107
  %109 = vrot.lane.b32.xlu0 %v43, 10
  %v110 = vpop.permute.xlu0 %109
  %vm111 = vcmp.lt.s32.totalorder %v69, 10
  %v112 = vsel %vm111, %v88, %v100
  %v113 = vsel %vm111, %v90, %v102
  %v114 = vsel %vm111, %v92, %v104
  %v115 = vsel %vm111, %v94, %v106
  %v116 = vsel %vm111, %v96, %v108
  %v117 = vsel %vm111, %v98, %v110
  %v118 = vsel %vm111, %v100, %v88
  %v119 = vsel %vm111, %v102, %v90
  %v120 = vsel %vm111, %v104, %v92
  %v121 = vsel %vm111, %v106, %v94
  %v122 = vsel %vm111, %v108, %v96
  %v123 = vsel %vm111, %v110, %v98
  %v124 = vld [vmem:[%s6 + $0x20] sm:$0xff]
  %v125 = vld [vmem:[%s6 + $0x28] sm:$0xff]
  %v126 = vld [vmem:[%s6 + $0x30] sm:$0xff]
  %v127 = vld [vmem:[%s6 + $0x38] sm:$0xff]
  %vm128 = vcmask 392192
  %v130 = vsel %vm128, %v124, 0
  %v133 = vsel %vm128, %v125, 0
  %v136 = vsel %vm128, %v126, 0
  %v139 = vsel %vm128, %v127, 0
  %141 = vmatprep.subr.mxu0 %v112
  %142 = vmatpush1.msra.mxu0 %v118
  %143 = vmatprep.subr.mxu0 %v113
  %144 = vmatpush1.msra.mxu0 %v119
  %145 = vmatprep.subr.mxu0 %v114
  %146 = vmatpush1.msra.mxu0 %v120
  %147 = vmatprep.subr.mxu0 %v115
  %148 = vmatpush1.msra.mxu0 %v121
  %149 = vmatprep.subr.mxu0 %v116
  %150 = vmatpush1.msra.mxu0 %v122
  %151 = vmatprep.subr.mxu0 %v117
  %152 = vmatpush1.msra.mxu0 %v123
  %153 = vmatprep.subr.mxu0 0.0
  %154 = vmatpush1.msra.mxu0 0.0
  %155 = vmatprep.subr.mxu0 0.0
  %156 = vmatpush1.msra.mxu0 0.0
  %157 = vmatprep.subr.mxu0 0.0
  %158 = vmatpush1.msra.mxu0 0.0
  %159 = vmatprep.subr.mxu0 0.0
  %160 = vmatpush1.msra.mxu0 0.0
  %161 = vmatprep.subr.mxu0 0.0
  %162 = vmatpush1.msra.mxu0 0.0
  %163 = vmatprep.subr.mxu0 0.0
  %164 = vmatpush1.msra.mxu0 0.0
  %165 = vmatprep.subr.mxu0 0.0
  %166 = vmatpush1.msra.mxu0 0.0
  %167 = vmatprep.subr.mxu0 0.0
  %168 = vmatpush1.msra.mxu0 0.0
  %169 = vmatprep.subr.mxu0 0.0
  %170 = vmatpush1.msra.mxu0 0.0
  %171 = vmatprep.subr.mxu0 0.0
  %172 = vmatpush1.msra.mxu0 0.0
  %173 = vmatprep.subr.mxu0 0.0
  %174 = vmatpush1.msra.mxu0 0.0
  %175 = vmatprep.subr.mxu0 0.0
  %176 = vmatpush1.msra.mxu0 0.0
  %177 = vmatprep.subr.mxu0 0.0
  %178 = vmatpush1.msra.mxu0 0.0
  %179 = vmatprep.subr.mxu0 0.0
  %180 = vmatpush1.msra.mxu0 0.0
  %181 = vmatprep.subr.mxu0 0.0
  %182 = vmatpush1.msra.mxu0 0.0
  %183 = vmatprep.subr.mxu0 0.0
  %184 = vmatpush1.msra.mxu0 0.0
  %185 = vmatprep.subr.mxu0 0.0
  %186 = vmatpush1.msra.mxu0 0.0
  %187 = vmatprep.subr.mxu0 0.0
  %188 = vmatpush1.msra.mxu0 0.0
  %189 = vmatprep.subr.mxu0 0.0
  %190 = vmatpush1.msra.mxu0 0.0
  %191 = vmatprep.subr.mxu0 0.0
  %192 = vmatpush1.msra.mxu0 0.0
  %193 = vmatprep.subr.mxu0 0.0
  %194 = vmatpush1.msra.mxu0 0.0
  %195 = vmatprep.subr.mxu0 0.0
  %196 = vmatpush1.msra.mxu0 0.0
  %197 = vmatprep.subr.mxu0 0.0
  %198 = vmatpush1.msra.mxu0 0.0
  %199 = vmatprep.subr.mxu0 0.0
  %200 = vmatpush1.msra.mxu0 0.0
  %201 = vmatprep.subr.mxu0 0.0
  %202 = vmatpush1.msra.mxu0 0.0
  %203 = vmatprep.subr.mxu0 0.0
  %204 = vmatpush1.msra.mxu0 0.0
  %205 = vmatprep.mubr.f32.mxu0 0.0
  %206 = vmatmul.mubr.f32.gmra.mrb[0].mxu0 %v130
  %v207 = vpop.f32.mrb[0].mxu0
  %v208 = vadd.f32 0.0, %v207
  %v209 = vpop.f32.mrb[0].mxu0
  %v210 = vadd.f32 0.0, %v209
  %211 = vmatprep.mubr.f32.mxu0 0.0
  %212 = vmatmul.mubr.f32.gmra.mrb[0].mxu0 %v133
  %v213 = vpop.f32.mrb[0].mxu0
  %v214 = vadd.f32 0.0, %v213
  %v215 = vpop.f32.mrb[0].mxu0
  %v216 = vadd.f32 0.0, %v215
  %217 = vmatprep.mubr.f32.mxu0 0.0
  %218 = vmatmul.mubr.f32.gmra.mrb[0].mxu0 %v136
  %v219 = vpop.f32.mrb[0].mxu0
  %v220 = vadd.f32 0.0, %v219
  %v221 = vpop.f32.mrb[0].mxu0
  %v222 = vadd.f32 0.0, %v221
  %223 = vmatprep.mubr.f32.mxu0 0.0
  %224 = vmatmul.mubr.f32.gmra.mrb[0].mxu0 %v139
  %v225 = vpop.f32.mrb[0].mxu0
  %v226 = vadd.f32 0.0, %v225
  %v227 = vpop.f32.mrb[0].mxu0
  %v228 = vadd.f32 0.0, %v227
  %229 = vdwg.mxu0
  %v231 = vsel %vm128, %v83, 0
  %v234 = vsel %vm128, %v84, 0
  %v237 = vsel %vm128, %v85, 0
  %v240 = vsel %vm128, %v86, 0
  %242 = vmatprep.subr.mxu0 %v71
  %243 = vmatpush1.msra.mxu0 %v77
  %244 = vmatprep.subr.mxu0 %v72
  %245 = vmatpush1.msra.mxu0 %v78
  %246 = vmatprep.subr.mxu0 %v73
  %247 = vmatpush1.msra.mxu0 %v79
  %248 = vmatprep.subr.mxu0 %v74
  %249 = vmatpush1.msra.mxu0 %v80
  %250 = vmatprep.subr.mxu0 %v75
  %251 = vmatpush1.msra.mxu0 %v81
  %252 = vmatprep.subr.mxu0 %v76
  %253 = vmatpush1.msra.mxu0 %v82
  %254 = vmatprep.subr.mxu0 0.0
  %255 = vmatpush1.msra.mxu0 0.0
  %256 = vmatprep.subr.mxu0 0.0
  %257 = vmatpush1.msra.mxu0 0.0
  %258 = vmatprep.subr.mxu0 0.0
  %259 = vmatpush1.msra.mxu0 0.0
  %260 = vmatprep.subr.mxu0 0.0
  %261 = vmatpush1.msra.mxu0 0.0
  %262 = vmatprep.subr.mxu0 0.0
  %263 = vmatpush1.msra.mxu0 0.0
  %264 = vmatprep.subr.mxu0 0.0
  %265 = vmatpush1.msra.mxu0 0.0
  %266 = vmatprep.subr.mxu0 0.0
  %267 = vmatpush1.msra.mxu0 0.0
  %268 = vmatprep.subr.mxu0 0.0
  %269 = vmatpush1.msra.mxu0 0.0
  %270 = vmatprep.subr.mxu0 0.0
  %271 = vmatpush1.msra.mxu0 0.0
  %272 = vmatprep.subr.mxu0 0.0
  %273 = vmatpush1.msra.mxu0 0.0
  %274 = vmatprep.subr.mxu0 0.0
  %275 = vmatpush1.msra.mxu0 0.0
  %276 = vmatprep.subr.mxu0 0.0
  %277 = vmatpush1.msra.mxu0 0.0
  %278 = vmatprep.subr.mxu0 0.0
  %279 = vmatpush1.msra.mxu0 0.0
  %280 = vmatprep.subr.mxu0 0.0
  %281 = vmatpush1.msra.mxu0 0.0
  %282 = vmatprep.subr.mxu0 0.0
  %283 = vmatpush1.msra.mxu0 0.0
  %284 = vmatprep.subr.mxu0 0.0
  %285 = vmatpush1.msra.mxu0 0.0
  %286 = vmatprep.subr.mxu0 0.0
  %287 = vmatpush1.msra.mxu0 0.0
  %288 = vmatprep.subr.mxu0 0.0
  %289 = vmatpush1.msra.mxu0 0.0
  %290 = vmatprep.subr.mxu0 0.0
  %291 = vmatpush1.msra.mxu0 0.0
  %292 = vmatprep.subr.mxu0 0.0
  %293 = vmatpush1.msra.mxu0 0.0
  %294 = vmatprep.subr.mxu0 0.0
  %295 = vmatpush1.msra.mxu0 0.0
  %296 = vmatprep.subr.mxu0 0.0
  %297 = vmatpush1.msra.mxu0 0.0
  %298 = vmatprep.subr.mxu0 0.0
  %299 = vmatpush1.msra.mxu0 0.0
  %300 = vmatprep.subr.mxu0 0.0
  %301 = vmatpush1.msra.mxu0 0.0
  %302 = vmatprep.subr.mxu0 0.0
  %303 = vmatpush1.msra.mxu0 0.0
  %304 = vmatprep.subr.mxu0 0.0
  %305 = vmatpush1.msra.mxu0 0.0
  %306 = vmatprep.mubr.f32.mxu0 0.0
  %307 = vmatmul.mubr.f32.gmra.mrb[0].mxu0 %v231
  %v308 = vpop.f32.mrb[0].mxu0
  %v309 = vadd.f32 %v208, %v308
  %v310 = vpop.f32.mrb[0].mxu0
  %v311 = vadd.f32 %v210, %v310
  %312 = vmatprep.mubr.f32.mxu0 0.0
  %313 = vmatmul.mubr.f32.gmra.mrb[0].mxu0 %v234
  %v314 = vpop.f32.mrb[0].mxu0
  %v315 = vadd.f32 %v214, %v314
  %v316 = vpop.f32.mrb[0].mxu0
  %v317 = vadd.f32 %v216, %v316
  %318 = vmatprep.mubr.f32.mxu0 0.0
  %319 = vmatmul.mubr.f32.gmra.mrb[0].mxu0 %v237
  %v320 = vpop.f32.mrb[0].mxu0
  %v321 = vadd.f32 %v220, %v320
  %v322 = vpop.f32.mrb[0].mxu0
  %v323 = vadd.f32 %v222, %v322
  %324 = vmatprep.mubr.f32.mxu0 0.0
  %325 = vmatmul.mubr.f32.gmra.mrb[0].mxu0 %v240
  %v326 = vpop.f32.mrb[0].mxu0
  %v327 = vadd.f32 %v226, %v326
  %v328 = vpop.f32.mrb[0].mxu0
  %v329 = vadd.f32 %v228, %v328
  %330 = vdwg.mxu0
  %331 = vrot.lane.b32.xlu0 %v32, 9
  %v332 = vpop.permute.xlu0 %331
  %333 = vrot.lane.b32.xlu0 %v34, 9
  %v334 = vpop.permute.xlu0 %333
  %335 = vrot.lane.b32.xlu0 %v36, 9
  %v336 = vpop.permute.xlu0 %335
  %337 = vrot.lane.b32.xlu0 %v38, 9
  %v338 = vpop.permute.xlu0 %337
  %339 = vrot.lane.b32.xlu0 %v40, 9
  %v340 = vpop.permute.xlu0 %339
  %341 = vrot.lane.b32.xlu0 %v42, 9
  %v342 = vpop.permute.xlu0 %341
  %343 = vrot.lane.b32.xlu0 %v33, 9
  %v344 = vpop.permute.xlu0 %343
  %345 = vrot.lane.b32.xlu0 %v35, 9
  %v346 = vpop.permute.xlu0 %345
  %347 = vrot.lane.b32.xlu0 %v37, 9
  %v348 = vpop.permute.xlu0 %347
  %349 = vrot.lane.b32.xlu0 %v39, 9
  %v350 = vpop.permute.xlu0 %349
  %351 = vrot.lane.b32.xlu0 %v41, 9
  %v352 = vpop.permute.xlu0 %351
  %353 = vrot.lane.b32.xlu0 %v43, 9
  %v354 = vpop.permute.xlu0 %353
  %vm355 = vcmp.lt.s32.totalorder %v69, 9
  %v356 = vsel %vm355, %v332, %v344
  %v357 = vsel %vm355, %v334, %v346
  %v358 = vsel %vm355, %v336, %v348
  %v359 = vsel %vm355, %v338, %v350
  %v360 = vsel %vm355, %v340, %v352
  %v361 = vsel %vm355, %v342, %v354
  %v362 = vsel %vm355, %v344, %v332
  %v363 = vsel %vm355, %v346, %v334
  %v364 = vsel %vm355, %v348, %v336
  %v365 = vsel %vm355, %v350, %v338
  %v366 = vsel %vm355, %v352, %v340
  %v367 = vsel %vm355, %v354, %v342
  %v368 = vld [vmem:[%s6 + $0x40] sm:$0xff]
  %v369 = vld [vmem:[%s6 + $0x48] sm:$0xff]
  %v370 = vld [vmem:[%s6 + $0x50] sm:$0xff]
  %v371 = vld [vmem:[%s6 + $0x58] sm:$0xff]
  %v373 = vsel %vm128, %v368, 0
  %v376 = vsel %vm128, %v369, 0
  %v379 = vsel %vm128, %v370, 0
  %v382 = vsel %vm128, %v371, 0
  %384 = vmatprep.subr.mxu0 %v356
  %385 = vmatpush1.msra.mxu0 %v362
  %386 = vmatprep.subr.mxu0 %v357
  %387 = vmatpush1.msra.mxu0 %v363
  %388 = vmatprep.subr.mxu0 %v358
  %389 = vmatpush1.msra.mxu0 %v364
  %390 = vmatprep.subr.mxu0 %v359
  %391 = vmatpush1.msra.mxu0 %v365
  %392 = vmatprep.subr.mxu0 %v360
  %393 = vmatpush1.msra.mxu0 %v366
  %394 = vmatprep.subr.mxu0 %v361
  %395 = vmatpush1.msra.mxu0 %v367
  %396 = vmatprep.subr.mxu0 0.0
  %397 = vmatpush1.msra.mxu0 0.0
  %398 = vmatprep.subr.mxu0 0.0
  %399 = vmatpush1.msra.mxu0 0.0
  %400 = vmatprep.subr.mxu0 0.0
  %401 = vmatpush1.msra.mxu0 0.0
  %402 = vmatprep.subr.mxu0 0.0
  %403 = vmatpush1.msra.mxu0 0.0
  %404 = vmatprep.subr.mxu0 0.0
  %405 = vmatpush1.msra.mxu0 0.0
  %406 = vmatprep.subr.mxu0 0.0
  %407 = vmatpush1.msra.mxu0 0.0
  %408 = vmatprep.subr.mxu0 0.0
  %409 = vmatpush1.msra.mxu0 0.0
  %410 = vmatprep.subr.mxu0 0.0
  %411 = vmatpush1.msra.mxu0 0.0
  %412 = vmatprep.subr.mxu0 0.0
  %413 = vmatpush1.msra.mxu0 0.0
  %414 = vmatprep.subr.mxu0 0.0
  %415 = vmatpush1.msra.mxu0 0.0
  %416 = vmatprep.subr.mxu0 0.0
  %417 = vmatpush1.msra.mxu0 0.0
  %418 = vmatprep.subr.mxu0 0.0
  %419 = vmatpush1.msra.mxu0 0.0
  %420 = vmatprep.subr.mxu0 0.0
  %421 = vmatpush1.msra.mxu0 0.0
  %422 = vmatprep.subr.mxu0 0.0
  %423 = vmatpush1.msra.mxu0 0.0
  %424 = vmatprep.subr.mxu0 0.0
  %425 = vmatpush1.msra.mxu0 0.0
  %426 = vmatprep.subr.mxu0 0.0
  %427 = vmatpush1.msra.mxu0 0.0
  %428 = vmatprep.subr.mxu0 0.0
  %429 = vmatpush1.msra.mxu0 0.0
  %430 = vmatprep.subr.mxu0 0.0
  %431 = vmatpush1.msra.mxu0 0.0
  %432 = vmatprep.subr.mxu0 0.0
  %433 = vmatpush1.msra.mxu0 0.0
  %434 = vmatprep.subr.mxu0 0.0
  %435 = vmatpush1.msra.mxu0 0.0
  %436 = vmatprep.subr.mxu0 0.0
  %437 = vmatpush1.msra.mxu0 0.0
  %438 = vmatprep.subr.mxu0 0.0
  %439 = vmatpush1.msra.mxu0 0.0
  %440 = vmatprep.subr.mxu0 0.0
  %441 = vmatpush1.msra.mxu0 0.0
  %442 = vmatprep.subr.mxu0 0.0
  %443 = vmatpush1.msra.mxu0 0.0
  %444 = vmatprep.subr.mxu0 0.0
  %445 = vmatpush1.msra.mxu0 0.0
  %446 = vmatprep.subr.mxu0 0.0
  %447 = vmatpush1.msra.mxu0 0.0
  %448 = vmatprep.mubr.f32.mxu0 0.0
  %449 = vmatmul.mubr.f32.gmra.mrb[0].mxu0 %v373
  %v450 = vpop.f32.mrb[0].mxu0
  %v451 = vadd.f32 0.0, %v450
  %v452 = vpop.f32.mrb[0].mxu0
  %v453 = vadd.f32 0.0, %v452
  %454 = vmatprep.mubr.f32.mxu0 0.0
  %455 = vmatmul.mubr.f32.gmra.mrb[0].mxu0 %v376
  %v456 = vpop.f32.mrb[0].mxu0
  %v457 = vadd.f32 0.0, %v456
  %v458 = vpop.f32.mrb[0].mxu0
  %v459 = vadd.f32 0.0, %v458
  %460 = vmatprep.mubr.f32.mxu0 0.0
  %461 = vmatmul.mubr.f32.gmra.mrb[0].mxu0 %v379
  %v462 = vpop.f32.mrb[0].mxu0
  %v463 = vadd.f32 0.0, %v462
  %v464 = vpop.f32.mrb[0].mxu0
  %v465 = vadd.f32 0.0, %v464
  %466 = vmatprep.mubr.f32.mxu0 0.0
  %467 = vmatmul.mubr.f32.gmra.mrb[0].mxu0 %v382
  %v468 = vpop.f32.mrb[0].mxu0
  %v469 = vadd.f32 0.0, %v468
  %v470 = vpop.f32.mrb[0].mxu0
  %v471 = vadd.f32 0.0, %v470
  %472 = vdwg.mxu0
  %v473 = vadd.f32 %v309, %v451
  %v474 = vadd.f32 %v311, %v453
  %v475 = vadd.f32 %v315, %v457
  %v476 = vadd.f32 %v317, %v459
  %v477 = vadd.f32 %v321, %v463
  %v478 = vadd.f32 %v323, %v465
  %v479 = vadd.f32 %v327, %v469
  %v480 = vadd.f32 %v329, %v471
  %481 = vrot.lane.b32.xlu0 %v32, 1
  %v482 = vpop.permute.xlu0 %481
  %483 = vrot.lane.b32.xlu0 %v34, 1
  %v484 = vpop.permute.xlu0 %483
  %485 = vrot.lane.b32.xlu0 %v36, 1
  %v486 = vpop.permute.xlu0 %485
  %487 = vrot.lane.b32.xlu0 %v38, 1
  %v488 = vpop.permute.xlu0 %487
  %489 = vrot.lane.b32.xlu0 %v40, 1
  %v490 = vpop.permute.xlu0 %489
  %491 = vrot.lane.b32.xlu0 %v42, 1
  %v492 = vpop.permute.xlu0 %491
  %493 = vrot.lane.b32.xlu0 %v33, 1
  %v494 = vpop.permute.xlu0 %493
  %495 = vrot.lane.b32.xlu0 %v35, 1
  %v496 = vpop.permute.xlu0 %495
  %497 = vrot.lane.b32.xlu0 %v37, 1
  %v498 = vpop.permute.xlu0 %497
  %499 = vrot.lane.b32.xlu0 %v39, 1
  %v500 = vpop.permute.xlu0 %499
  %501 = vrot.lane.b32.xlu0 %v41, 1
  %v502 = vpop.permute.xlu0 %501
  %503 = vrot.lane.b32.xlu0 %v43, 1
  %v504 = vpop.permute.xlu0 %503
  %vm505 = vcmp.lt.s32.totalorder %v69, 1
  %v506 = vsel %vm505, %v482, %v494
  %v507 = vsel %vm505, %v484, %v496
  %v508 = vsel %vm505, %v486, %v498
  %v509 = vsel %vm505, %v488, %v500
  %v510 = vsel %vm505, %v490, %v502
  %v511 = vsel %vm505, %v492, %v504
  %v512 = vsel %vm505, %v494, %v482
  %v513 = vsel %vm505, %v496, %v484
  %v514 = vsel %vm505, %v498, %v486
  %v515 = vsel %vm505, %v500, %v488
  %v516 = vsel %vm505, %v502, %v490
  %v517 = vsel %vm505, %v504, %v492
  %v518 = vld [vmem:[%s6 + $0x60] sm:$0xff]
  %v519 = vld [vmem:[%s6 + $0x68] sm:$0xff]
  %v520 = vld [vmem:[%s6 + $0x70] sm:$0xff]
  %v521 = vld [vmem:[%s6 + $0x78] sm:$0xff]
  %v523 = vsel %vm128, %v518, 0
  %v526 = vsel %vm128, %v519, 0
  %v529 = vsel %vm128, %v520, 0
  %v532 = vsel %vm128, %v521, 0
  %534 = vmatprep.subr.mxu0 %v506
  %535 = vmatpush1.msra.mxu0 %v512
  %536 = vmatprep.subr.mxu0 %v507
  %537 = vmatpush1.msra.mxu0 %v513
  %538 = vmatprep.subr.mxu0 %v508
  %539 = vmatpush1.msra.mxu0 %v514
  %540 = vmatprep.subr.mxu0 %v509
  %541 = vmatpush1.msra.mxu0 %v515
  %542 = vmatprep.subr.mxu0 %v510
  %543 = vmatpush1.msra.mxu0 %v516
  %544 = vmatprep.subr.mxu0 %v511
  %545 = vmatpush1.msra.mxu0 %v517
  %546 = vmatprep.subr.mxu0 0.0
  %547 = vmatpush1.msra.mxu0 0.0
  %548 = vmatprep.subr.mxu0 0.0
  %549 = vmatpush1.msra.mxu0 0.0
  %550 = vmatprep.subr.mxu0 0.0
  %551 = vmatpush1.msra.mxu0 0.0
  %552 = vmatprep.subr.mxu0 0.0
  %553 = vmatpush1.msra.mxu0 0.0
  %554 = vmatprep.subr.mxu0 0.0
  %555 = vmatpush1.msra.mxu0 0.0
  %556 = vmatprep.subr.mxu0 0.0
  %557 = vmatpush1.msra.mxu0 0.0
  %558 = vmatprep.subr.mxu0 0.0
  %559 = vmatpush1.msra.mxu0 0.0
  %560 = vmatprep.subr.mxu0 0.0
  %561 = vmatpush1.msra.mxu0 0.0
  %562 = vmatprep.subr.mxu0 0.0
  %563 = vmatpush1.msra.mxu0 0.0
  %564 = vmatprep.subr.mxu0 0.0
  %565 = vmatpush1.msra.mxu0 0.0
  %566 = vmatprep.subr.mxu0 0.0
  %567 = vmatpush1.msra.mxu0 0.0
  %568 = vmatprep.subr.mxu0 0.0
  %569 = vmatpush1.msra.mxu0 0.0
  %570 = vmatprep.subr.mxu0 0.0
  %571 = vmatpush1.msra.mxu0 0.0
  %572 = vmatprep.subr.mxu0 0.0
  %573 = vmatpush1.msra.mxu0 0.0
  %574 = vmatprep.subr.mxu0 0.0
  %575 = vmatpush1.msra.mxu0 0.0
  %576 = vmatprep.subr.mxu0 0.0
  %577 = vmatpush1.msra.mxu0 0.0
  %578 = vmatprep.subr.mxu0 0.0
  %579 = vmatpush1.msra.mxu0 0.0
  %580 = vmatprep.subr.mxu0 0.0
  %581 = vmatpush1.msra.mxu0 0.0
  %582 = vmatprep.subr.mxu0 0.0
  %583 = vmatpush1.msra.mxu0 0.0
  %584 = vmatprep.subr.mxu0 0.0
  %585 = vmatpush1.msra.mxu0 0.0
  %586 = vmatprep.subr.mxu0 0.0
  %587 = vmatpush1.msra.mxu0 0.0
  %588 = vmatprep.subr.mxu0 0.0
  %589 = vmatpush1.msra.mxu0 0.0
  %590 = vmatprep.subr.mxu0 0.0
  %591 = vmatpush1.msra.mxu0 0.0
  %592 = vmatprep.subr.mxu0 0.0
  %593 = vmatpush1.msra.mxu0 0.0
  %594 = vmatprep.subr.mxu0 0.0
  %595 = vmatpush1.msra.mxu0 0.0
  %596 = vmatprep.subr.mxu0 0.0
  %597 = vmatpush1.msra.mxu0 0.0
  %598 = vmatprep.mubr.f32.mxu0 0.0
  %599 = vmatmul.mubr.f32.gmra.mrb[0].mxu0 %v523
  %v600 = vpop.f32.mrb[0].mxu0
  %v601 = vadd.f32 0.0, %v600
  %v602 = vpop.f32.mrb[0].mxu0
  %v603 = vadd.f32 0.0, %v602
  %604 = vmatprep.mubr.f32.mxu0 0.0
  %605 = vmatmul.mubr.f32.gmra.mrb[0].mxu0 %v526
  %v606 = vpop.f32.mrb[0].mxu0
  %v607 = vadd.f32 0.0, %v606
  %v608 = vpop.f32.mrb[0].mxu0
  %v609 = vadd.f32 0.0, %v608
  %610 = vmatprep.mubr.f32.mxu0 0.0
  %611 = vmatmul.mubr.f32.gmra.mrb[0].mxu0 %v529
  %v612 = vpop.f32.mrb[0].mxu0
  %v613 = vadd.f32 0.0, %v612
  %v614 = vpop.f32.mrb[0].mxu0
  %v615 = vadd.f32 0.0, %v614
  %616 = vmatprep.mubr.f32.mxu0 0.0
  %617 = vmatmul.mubr.f32.gmra.mrb[0].mxu0 %v532
  %v618 = vpop.f32.mrb[0].mxu0
  %v619 = vadd.f32 0.0, %v618
  %v620 = vpop.f32.mrb[0].mxu0
  %v621 = vadd.f32 0.0, %v620
  %622 = vdwg.mxu0
  %v623 = vadd.f32 %v473, %v601
  %v624 = vadd.f32 %v474, %v603
  %v625 = vadd.f32 %v475, %v607
  %v626 = vadd.f32 %v476, %v609
  %v627 = vadd.f32 %v477, %v613
  %v628 = vadd.f32 %v478, %v615
  %v629 = vadd.f32 %v479, %v619
  %v630 = vadd.f32 %v480, %v621
  %v631 = vld [vmem:[%s6 + $0x80] sm:$0xff]
  %v632 = vld [vmem:[%s6 + $0x88] sm:$0xff]
  %v633 = vld [vmem:[%s6 + $0x90] sm:$0xff]
  %v634 = vld [vmem:[%s6 + $0x98] sm:$0xff]
  %v636 = vsel %vm128, %v631, 0
  %v639 = vsel %vm128, %v632, 0
  %v642 = vsel %vm128, %v633, 0
  %v645 = vsel %vm128, %v634, 0
  %647 = vmatprep.subr.mxu0 %v33
  %648 = vmatpush1.msra.mxu0 %v32
  %649 = vmatprep.subr.mxu0 %v35
  %650 = vmatpush1.msra.mxu0 %v34
  %651 = vmatprep.subr.mxu0 %v37
  %652 = vmatpush1.msra.mxu0 %v36
  %653 = vmatprep.subr.mxu0 %v39
  %654 = vmatpush1.msra.mxu0 %v38
  %655 = vmatprep.subr.mxu0 %v41
  %656 = vmatpush1.msra.mxu0 %v40
  %657 = vmatprep.subr.mxu0 %v43
  %658 = vmatpush1.msra.mxu0 %v42
  %659 = vmatprep.subr.mxu0 0.0
  %660 = vmatpush1.msra.mxu0 0.0
  %661 = vmatprep.subr.mxu0 0.0
  %662 = vmatpush1.msra.mxu0 0.0
  %663 = vmatprep.subr.mxu0 0.0
  %664 = vmatpush1.msra.mxu0 0.0
  %665 = vmatprep.subr.mxu0 0.0
  %666 = vmatpush1.msra.mxu0 0.0
  %667 = vmatprep.subr.mxu0 0.0
  %668 = vmatpush1.msra.mxu0 0.0
  %669 = vmatprep.subr.mxu0 0.0
  %670 = vmatpush1.msra.mxu0 0.0
  %671 = vmatprep.subr.mxu0 0.0
  %672 = vmatpush1.msra.mxu0 0.0
  %673 = vmatprep.subr.mxu0 0.0
  %674 = vmatpush1.msra.mxu0 0.0
  %675 = vmatprep.subr.mxu0 0.0
  %676 = vmatpush1.msra.mxu0 0.0
  %677 = vmatprep.subr.mxu0 0.0
  %678 = vmatpush1.msra.mxu0 0.0
  %679 = vmatprep.subr.mxu0 0.0
  %680 = vmatpush1.msra.mxu0 0.0
  %681 = vmatprep.subr.mxu0 0.0
  %682 = vmatpush1.msra.mxu0 0.0
  %683 = vmatprep.subr.mxu0 0.0
  %684 = vmatpush1.msra.mxu0 0.0
  %685 = vmatprep.subr.mxu0 0.0
  %686 = vmatpush1.msra.mxu0 0.0
  %687 = vmatprep.subr.mxu0 0.0
  %688 = vmatpush1.msra.mxu0 0.0
  %689 = vmatprep.subr.mxu0 0.0
  %690 = vmatpush1.msra.mxu0 0.0
  %691 = vmatprep.subr.mxu0 0.0
  %692 = vmatpush1.msra.mxu0 0.0
  %693 = vmatprep.subr.mxu0 0.0
  %694 = vmatpush1.msra.mxu0 0.0
  %695 = vmatprep.subr.mxu0 0.0
  %696 = vmatpush1.msra.mxu0 0.0
  %697 = vmatprep.subr.mxu0 0.0
  %698 = vmatpush1.msra.mxu0 0.0
  %699 = vmatprep.subr.mxu0 0.0
  %700 = vmatpush1.msra.mxu0 0.0
  %701 = vmatprep.subr.mxu0 0.0
  %702 = vmatpush1.msra.mxu0 0.0
  %703 = vmatprep.subr.mxu0 0.0
  %704 = vmatpush1.msra.mxu0 0.0
  %705 = vmatprep.subr.mxu0 0.0
  %706 = vmatpush1.msra.mxu0 0.0
  %707 = vmatprep.subr.mxu0 0.0
  %708 = vmatpush1.msra.mxu0 0.0
  %709 = vmatprep.subr.mxu0 0.0
  %710 = vmatpush1.msra.mxu0 0.0
  %711 = vmatprep.mubr.f32.mxu0 0.0
  %712 = vmatmul.mubr.f32.gmra.mrb[0].mxu0 %v636
  %v713 = vpop.f32.mrb[0].mxu0
  %v714 = vadd.f32 0.0, %v713
  %v715 = vpop.f32.mrb[0].mxu0
  %v716 = vadd.f32 0.0, %v715
  %717 = vmatprep.mubr.f32.mxu0 0.0
  %718 = vmatmul.mubr.f32.gmra.mrb[0].mxu0 %v639
  %v719 = vpop.f32.mrb[0].mxu0
  %v720 = vadd.f32 0.0, %v719
  %v721 = vpop.f32.mrb[0].mxu0
  %v722 = vadd.f32 0.0, %v721
  %723 = vmatprep.mubr.f32.mxu0 0.0
  %724 = vmatmul.mubr.f32.gmra.mrb[0].mxu0 %v642
  %v725 = vpop.f32.mrb[0].mxu0
  %v726 = vadd.f32 0.0, %v725
  %v727 = vpop.f32.mrb[0].mxu0
  %v728 = vadd.f32 0.0, %v727
  %729 = vmatprep.mubr.f32.mxu0 0.0
  %730 = vmatmul.mubr.f32.gmra.mrb[0].mxu0 %v645
  %v731 = vpop.f32.mrb[0].mxu0
  %v732 = vadd.f32 0.0, %v731
  %v733 = vpop.f32.mrb[0].mxu0
  %v734 = vadd.f32 0.0, %v733
  %735 = vdwg.mxu0
  %v736 = vadd.f32 %v623, %v714
  %v737 = vadd.f32 %v624, %v716
  %v738 = vadd.f32 %v625, %v720
  %v739 = vadd.f32 %v626, %v722
  %v740 = vadd.f32 %v627, %v726
  %v741 = vadd.f32 %v628, %v728
  %v742 = vadd.f32 %v629, %v732
  %v743 = vadd.f32 %v630, %v734
  %744 = vrot.lane.b32.xlu0 %v32, 127
  %v745 = vpop.permute.xlu0 %744
  %746 = vrot.lane.b32.xlu0 %v34, 127
  %v747 = vpop.permute.xlu0 %746
  %748 = vrot.lane.b32.xlu0 %v36, 127
  %v749 = vpop.permute.xlu0 %748
  %750 = vrot.lane.b32.xlu0 %v38, 127
  %v751 = vpop.permute.xlu0 %750
  %752 = vrot.lane.b32.xlu0 %v40, 127
  %v753 = vpop.permute.xlu0 %752
  %754 = vrot.lane.b32.xlu0 %v42, 127
  %v755 = vpop.permute.xlu0 %754
  %756 = vrot.lane.b32.xlu0 %v33, 127
  %v757 = vpop.permute.xlu0 %756
  %758 = vrot.lane.b32.xlu0 %v35, 127
  %v759 = vpop.permute.xlu0 %758
  %760 = vrot.lane.b32.xlu0 %v37, 127
  %v761 = vpop.permute.xlu0 %760
  %762 = vrot.lane.b32.xlu0 %v39, 127
  %v763 = vpop.permute.xlu0 %762
  %764 = vrot.lane.b32.xlu0 %v41, 127
  %v765 = vpop.permute.xlu0 %764
  %766 = vrot.lane.b32.xlu0 %v43, 127
  %v767 = vpop.permute.xlu0 %766
  %vm768 = vcmp.lt.s32.totalorder %v69, 127
  %v769 = vsel %vm768, %v745, %v757
  %v770 = vsel %vm768, %v747, %v759
  %v771 = vsel %vm768, %v749, %v761
  %v772 = vsel %vm768, %v751, %v763
  %v773 = vsel %vm768, %v753, %v765
  %v774 = vsel %vm768, %v755, %v767
  %v775 = vsel %vm768, %v757, %v745
  %v776 = vsel %vm768, %v759, %v747
  %v777 = vsel %vm768, %v761, %v749
  %v778 = vsel %vm768, %v763, %v751
  %v779 = vsel %vm768, %v765, %v753
  %v780 = vsel %vm768, %v767, %v755
  %v781 = vld [vmem:[%s6 + $0xa0] sm:$0xff]
  %v782 = vld [vmem:[%s6 + $0xa8] sm:$0xff]
  %v783 = vld [vmem:[%s6 + $0xb0] sm:$0xff]
  %v784 = vld [vmem:[%s6 + $0xb8] sm:$0xff]
  %v786 = vsel %vm128, %v781, 0
  %v789 = vsel %vm128, %v782, 0
  %v792 = vsel %vm128, %v783, 0
  %v795 = vsel %vm128, %v784, 0
  %797 = vmatprep.subr.mxu0 %v775
  %798 = vmatpush1.msra.mxu0 %v769
  %799 = vmatprep.subr.mxu0 %v776
  %800 = vmatpush1.msra.mxu0 %v770
  %801 = vmatprep.subr.mxu0 %v777
  %802 = vmatpush1.msra.mxu0 %v771
  %803 = vmatprep.subr.mxu0 %v778
  %804 = vmatpush1.msra.mxu0 %v772
  %805 = vmatprep.subr.mxu0 %v779
  %806 = vmatpush1.msra.mxu0 %v773
  %807 = vmatprep.subr.mxu0 %v780
  %808 = vmatpush1.msra.mxu0 %v774
  %809 = vmatprep.subr.mxu0 0.0
  %810 = vmatpush1.msra.mxu0 0.0
  %811 = vmatprep.subr.mxu0 0.0
  %812 = vmatpush1.msra.mxu0 0.0
  %813 = vmatprep.subr.mxu0 0.0
  %814 = vmatpush1.msra.mxu0 0.0
  %815 = vmatprep.subr.mxu0 0.0
  %816 = vmatpush1.msra.mxu0 0.0
  %817 = vmatprep.subr.mxu0 0.0
  %818 = vmatpush1.msra.mxu0 0.0
  %819 = vmatprep.subr.mxu0 0.0
  %820 = vmatpush1.msra.mxu0 0.0
  %821 = vmatprep.subr.mxu0 0.0
  %822 = vmatpush1.msra.mxu0 0.0
  %823 = vmatprep.subr.mxu0 0.0
  %824 = vmatpush1.msra.mxu0 0.0
  %825 = vmatprep.subr.mxu0 0.0
  %826 = vmatpush1.msra.mxu0 0.0
  %827 = vmatprep.subr.mxu0 0.0
  %828 = vmatpush1.msra.mxu0 0.0
  %829 = vmatprep.subr.mxu0 0.0
  %830 = vmatpush1.msra.mxu0 0.0
  %831 = vmatprep.subr.mxu0 0.0
  %832 = vmatpush1.msra.mxu0 0.0
  %833 = vmatprep.subr.mxu0 0.0
  %834 = vmatpush1.msra.mxu0 0.0
  %835 = vmatprep.subr.mxu0 0.0
  %836 = vmatpush1.msra.mxu0 0.0
  %837 = vmatprep.subr.mxu0 0.0
  %838 = vmatpush1.msra.mxu0 0.0
  %839 = vmatprep.subr.mxu0 0.0
  %840 = vmatpush1.msra.mxu0 0.0
  %841 = vmatprep.subr.mxu0 0.0
  %842 = vmatpush1.msra.mxu0 0.0
  %843 = vmatprep.subr.mxu0 0.0
  %844 = vmatpush1.msra.mxu0 0.0
  %845 = vmatprep.subr.mxu0 0.0
  %846 = vmatpush1.msra.mxu0 0.0
  %847 = vmatprep.subr.mxu0 0.0
  %848 = vmatpush1.msra.mxu0 0.0
  %849 = vmatprep.subr.mxu0 0.0
  %850 = vmatpush1.msra.mxu0 0.0
  %851 = vmatprep.subr.mxu0 0.0
  %852 = vmatpush1.msra.mxu0 0.0
  %853 = vmatprep.subr.mxu0 0.0
  %854 = vmatpush1.msra.mxu0 0.0
  %855 = vmatprep.subr.mxu0 0.0
  %856 = vmatpush1.msra.mxu0 0.0
  %857 = vmatprep.subr.mxu0 0.0
  %858 = vmatpush1.msra.mxu0 0.0
  %859 = vmatprep.subr.mxu0 0.0
  %860 = vmatpush1.msra.mxu0 0.0
  %861 = vmatprep.mubr.f32.mxu0 0.0
  %862 = vmatmul.mubr.f32.gmra.mrb[0].mxu0 %v786
  %v863 = vpop.f32.mrb[0].mxu0
  %v864 = vadd.f32 0.0, %v863
  %v865 = vpop.f32.mrb[0].mxu0
  %v866 = vadd.f32 0.0, %v865
  %867 = vmatprep.mubr.f32.mxu0 0.0
  %868 = vmatmul.mubr.f32.gmra.mrb[0].mxu0 %v789
  %v869 = vpop.f32.mrb[0].mxu0
  %v870 = vadd.f32 0.0, %v869
  %v871 = vpop.f32.mrb[0].mxu0
  %v872 = vadd.f32 0.0, %v871
  %873 = vmatprep.mubr.f32.mxu0 0.0
  %874 = vmatmul.mubr.f32.gmra.mrb[0].mxu0 %v792
  %v875 = vpop.f32.mrb[0].mxu0
  %v876 = vadd.f32 0.0, %v875
  %v877 = vpop.f32.mrb[0].mxu0
  %v878 = vadd.f32 0.0, %v877
  %879 = vmatprep.mubr.f32.mxu0 0.0
  %880 = vmatmul.mubr.f32.gmra.mrb[0].mxu0 %v795
  %v881 = vpop.f32.mrb[0].mxu0
  %v882 = vadd.f32 0.0, %v881
  %v883 = vpop.f32.mrb[0].mxu0
  %v884 = vadd.f32 0.0, %v883
  %885 = vdwg.mxu0
  %v886 = vadd.f32 %v736, %v864
  %v887 = vadd.f32 %v737, %v866
  %v888 = vadd.f32 %v738, %v870
  %v889 = vadd.f32 %v739, %v872
  %v890 = vadd.f32 %v740, %v876
  %v891 = vadd.f32 %v741, %v878
  %v892 = vadd.f32 %v742, %v882
  %v893 = vadd.f32 %v743, %v884
  %894 = vrot.lane.b32.xlu0 %v32, 119
  %v895 = vpop.permute.xlu0 %894
  %896 = vrot.lane.b32.xlu0 %v34, 119
  %v897 = vpop.permute.xlu0 %896
  %898 = vrot.lane.b32.xlu0 %v36, 119
  %v899 = vpop.permute.xlu0 %898
  %900 = vrot.lane.b32.xlu0 %v38, 119
  %v901 = vpop.permute.xlu0 %900
  %902 = vrot.lane.b32.xlu0 %v40, 119
  %v903 = vpop.permute.xlu0 %902
  %904 = vrot.lane.b32.xlu0 %v42, 119
  %v905 = vpop.permute.xlu0 %904
  %906 = vrot.lane.b32.xlu0 %v33, 119
  %v907 = vpop.permute.xlu0 %906
  %908 = vrot.lane.b32.xlu0 %v35, 119
  %v909 = vpop.permute.xlu0 %908
  %910 = vrot.lane.b32.xlu0 %v37, 119
  %v911 = vpop.permute.xlu0 %910
  %912 = vrot.lane.b32.xlu0 %v39, 119
  %v913 = vpop.permute.xlu0 %912
  %914 = vrot.lane.b32.xlu0 %v41, 119
  %v915 = vpop.permute.xlu0 %914
  %916 = vrot.lane.b32.xlu0 %v43, 119
  %v917 = vpop.permute.xlu0 %916
  %vm918 = vcmp.lt.s32.totalorder %v69, 119
  %v919 = vsel %vm918, %v895, %v907
  %v920 = vsel %vm918, %v897, %v909
  %v921 = vsel %vm918, %v899, %v911
  %v922 = vsel %vm918, %v901, %v913
  %v923 = vsel %vm918, %v903, %v915
  %v924 = vsel %vm918, %v905, %v917
  %v925 = vsel %vm918, %v907, %v895
  %v926 = vsel %vm918, %v909, %v897
  %v927 = vsel %vm918, %v911, %v899
  %v928 = vsel %vm918, %v913, %v901
  %v929 = vsel %vm918, %v915, %v903
  %v930 = vsel %vm918, %v917, %v905
  %v931 = vld [vmem:[%s6 + $0xc0] sm:$0xff]
  %v932 = vld [vmem:[%s6 + $0xc8] sm:$0xff]
  %v933 = vld [vmem:[%s6 + $0xd0] sm:$0xff]
  %v934 = vld [vmem:[%s6 + $0xd8] sm:$0xff]
  %v936 = vsel %vm128, %v931, 0
  %v939 = vsel %vm128, %v932, 0
  %v942 = vsel %vm128, %v933, 0
  %v945 = vsel %vm128, %v934, 0
  %947 = vmatprep.subr.mxu0 %v925
  %948 = vmatpush1.msra.mxu0 %v919
  %949 = vmatprep.subr.mxu0 %v926
  %950 = vmatpush1.msra.mxu0 %v920
  %951 = vmatprep.subr.mxu0 %v927
  %952 = vmatpush1.msra.mxu0 %v921
  %953 = vmatprep.subr.mxu0 %v928
  %954 = vmatpush1.msra.mxu0 %v922
  %955 = vmatprep.subr.mxu0 %v929
  %956 = vmatpush1.msra.mxu0 %v923
  %957 = vmatprep.subr.mxu0 %v930
  %958 = vmatpush1.msra.mxu0 %v924
  %959 = vmatprep.subr.mxu0 0.0
  %960 = vmatpush1.msra.mxu0 0.0
  %961 = vmatprep.subr.mxu0 0.0
  %962 = vmatpush1.msra.mxu0 0.0
  %963 = vmatprep.subr.mxu0 0.0
  %964 = vmatpush1.msra.mxu0 0.0
  %965 = vmatprep.subr.mxu0 0.0
  %966 = vmatpush1.msra.mxu0 0.0
  %967 = vmatprep.subr.mxu0 0.0
  %968 = vmatpush1.msra.mxu0 0.0
  %969 = vmatprep.subr.mxu0 0.0
  %970 = vmatpush1.msra.mxu0 0.0
  %971 = vmatprep.subr.mxu0 0.0
  %972 = vmatpush1.msra.mxu0 0.0
  %973 = vmatprep.subr.mxu0 0.0
  %974 = vmatpush1.msra.mxu0 0.0
  %975 = vmatprep.subr.mxu0 0.0
  %976 = vmatpush1.msra.mxu0 0.0
  %977 = vmatprep.subr.mxu0 0.0
  %978 = vmatpush1.msra.mxu0 0.0
  %979 = vmatprep.subr.mxu0 0.0
  %980 = vmatpush1.msra.mxu0 0.0
  %981 = vmatprep.subr.mxu0 0.0
  %982 = vmatpush1.msra.mxu0 0.0
  %983 = vmatprep.subr.mxu0 0.0
  %984 = vmatpush1.msra.mxu0 0.0
  %985 = vmatprep.subr.mxu0 0.0
  %986 = vmatpush1.msra.mxu0 0.0
  %987 = vmatprep.subr.mxu0 0.0
  %988 = vmatpush1.msra.mxu0 0.0
  %989 = vmatprep.subr.mxu0 0.0
  %990 = vmatpush1.msra.mxu0 0.0
  %991 = vmatprep.subr.mxu0 0.0
  %992 = vmatpush1.msra.mxu0 0.0
  %993 = vmatprep.subr.mxu0 0.0
  %994 = vmatpush1.msra.mxu0 0.0
  %995 = vmatprep.subr.mxu0 0.0
  %996 = vmatpush1.msra.mxu0 0.0
  %997 = vmatprep.subr.mxu0 0.0
  %998 = vmatpush1.msra.mxu0 0.0
  %999 = vmatprep.subr.mxu0 0.0
  %1000 = vmatpush1.msra.mxu0 0.0
  %1001 = vmatprep.subr.mxu0 0.0
  %1002 = vmatpush1.msra.mxu0 0.0
  %1003 = vmatprep.subr.mxu0 0.0
  %1004 = vmatpush1.msra.mxu0 0.0
  %1005 = vmatprep.subr.mxu0 0.0
  %1006 = vmatpush1.msra.mxu0 0.0
  %1007 = vmatprep.subr.mxu0 0.0
  %1008 = vmatpush1.msra.mxu0 0.0
  %1009 = vmatprep.subr.mxu0 0.0
  %1010 = vmatpush1.msra.mxu0 0.0
  %1011 = vmatprep.mubr.f32.mxu0 0.0
  %1012 = vmatmul.mubr.f32.gmra.mrb[0].mxu0 %v936
  %v1013 = vpop.f32.mrb[0].mxu0
  %v1014 = vadd.f32 0.0, %v1013
  %v1015 = vpop.f32.mrb[0].mxu0
  %v1016 = vadd.f32 0.0, %v1015
  %1017 = vmatprep.mubr.f32.mxu0 0.0
  %1018 = vmatmul.mubr.f32.gmra.mrb[0].mxu0 %v939
  %v1019 = vpop.f32.mrb[0].mxu0
  %v1020 = vadd.f32 0.0, %v1019
  %v1021 = vpop.f32.mrb[0].mxu0
  %v1022 = vadd.f32 0.0, %v1021
  %1023 = vmatprep.mubr.f32.mxu0 0.0
  %1024 = vmatmul.mubr.f32.gmra.mrb[0].mxu0 %v942
  %v1025 = vpop.f32.mrb[0].mxu0
  %v1026 = vadd.f32 0.0, %v1025
  %v1027 = vpop.f32.mrb[0].mxu0
  %v1028 = vadd.f32 0.0, %v1027
  %1029 = vmatprep.mubr.f32.mxu0 0.0
  %1030 = vmatmul.mubr.f32.gmra.mrb[0].mxu0 %v945
  %v1031 = vpop.f32.mrb[0].mxu0
  %v1032 = vadd.f32 0.0, %v1031
  %v1033 = vpop.f32.mrb[0].mxu0
  %v1034 = vadd.f32 0.0, %v1033
  %1035 = vdwg.mxu0
  %v1036 = vadd.f32 %v886, %v1014
  %v1037 = vadd.f32 %v887, %v1016
  %v1038 = vadd.f32 %v888, %v1020
  %v1039 = vadd.f32 %v889, %v1022
  %v1040 = vadd.f32 %v890, %v1026
  %v1041 = vadd.f32 %v891, %v1028
  %v1042 = vadd.f32 %v892, %v1032
  %v1043 = vadd.f32 %v893, %v1034
  %1044 = vrot.lane.b32.xlu0 %v32, 118
  %v1045 = vpop.permute.xlu0 %1044
  %1046 = vrot.lane.b32.xlu0 %v34, 118
  %v1047 = vpop.permute.xlu0 %1046
  %1048 = vrot.lane.b32.xlu0 %v36, 118
  %v1049 = vpop.permute.xlu0 %1048
  %1050 = vrot.lane.b32.xlu0 %v38, 118
  %v1051 = vpop.permute.xlu0 %1050
  %1052 = vrot.lane.b32.xlu0 %v40, 118
  %v1053 = vpop.permute.xlu0 %1052
  %1054 = vrot.lane.b32.xlu0 %v42, 118
  %v1055 = vpop.permute.xlu0 %1054
  %1056 = vrot.lane.b32.xlu0 %v33, 118
  %v1057 = vpop.permute.xlu0 %1056
  %1058 = vrot.lane.b32.xlu0 %v35, 118
  %v1059 = vpop.permute.xlu0 %1058
  %1060 = vrot.lane.b32.xlu0 %v37, 118
  %v1061 = vpop.permute.xlu0 %1060
  %1062 = vrot.lane.b32.xlu0 %v39, 118
  %v1063 = vpop.permute.xlu0 %1062
  %1064 = vrot.lane.b32.xlu0 %v41, 118
  %v1065 = vpop.permute.xlu0 %1064
  %1066 = vrot.lane.b32.xlu0 %v43, 118
  %v1067 = vpop.permute.xlu0 %1066
  %vm1068 = vcmp.lt.s32.totalorder %v69, 118
  %v1069 = vsel %vm1068, %v1045, %v1057
  %v1070 = vsel %vm1068, %v1047, %v1059
  %v1071 = vsel %vm1068, %v1049, %v1061
  %v1072 = vsel %vm1068, %v1051, %v1063
  %v1073 = vsel %vm1068, %v1053, %v1065
  %v1074 = vsel %vm1068, %v1055, %v1067
  %v1075 = vsel %vm1068, %v1057, %v1045
  %v1076 = vsel %vm1068, %v1059, %v1047
  %v1077 = vsel %vm1068, %v1061, %v1049
  %v1078 = vsel %vm1068, %v1063, %v1051
  %v1079 = vsel %vm1068, %v1065, %v1053
  %v1080 = vsel %vm1068, %v1067, %v1055
  %v1081 = vld [vmem:[%s6 + $0xe0] sm:$0xff]
  %v1082 = vld [vmem:[%s6 + $0xe8] sm:$0xff]
  %v1083 = vld [vmem:[%s6 + $0xf0] sm:$0xff]
  %v1084 = vld [vmem:[%s6 + $0xf8] sm:$0xff]
  %v1086 = vsel %vm128, %v1081, 0
  %v1089 = vsel %vm128, %v1082, 0
  %v1092 = vsel %vm128, %v1083, 0
  %v1095 = vsel %vm128, %v1084, 0
  %1097 = vmatprep.subr.mxu0 %v1075
  %1098 = vmatpush1.msra.mxu0 %v1069
  %1099 = vmatprep.subr.mxu0 %v1076
  %1100 = vmatpush1.msra.mxu0 %v1070
  %1101 = vmatprep.subr.mxu0 %v1077
  %1102 = vmatpush1.msra.mxu0 %v1071
  %1103 = vmatprep.subr.mxu0 %v1078
  %1104 = vmatpush1.msra.mxu0 %v1072
  %1105 = vmatprep.subr.mxu0 %v1079
  %1106 = vmatpush1.msra.mxu0 %v1073
  %1107 = vmatprep.subr.mxu0 %v1080
  %1108 = vmatpush1.msra.mxu0 %v1074
  %1109 = vmatprep.subr.mxu0 0.0
  %1110 = vmatpush1.msra.mxu0 0.0
  %1111 = vmatprep.subr.mxu0 0.0
  %1112 = vmatpush1.msra.mxu0 0.0
  %1113 = vmatprep.subr.mxu0 0.0
  %1114 = vmatpush1.msra.mxu0 0.0
  %1115 = vmatprep.subr.mxu0 0.0
  %1116 = vmatpush1.msra.mxu0 0.0
  %1117 = vmatprep.subr.mxu0 0.0
  %1118 = vmatpush1.msra.mxu0 0.0
  %1119 = vmatprep.subr.mxu0 0.0
  %1120 = vmatpush1.msra.mxu0 0.0
  %1121 = vmatprep.subr.mxu0 0.0
  %1122 = vmatpush1.msra.mxu0 0.0
  %1123 = vmatprep.subr.mxu0 0.0
  %1124 = vmatpush1.msra.mxu0 0.0
  %1125 = vmatprep.subr.mxu0 0.0
  %1126 = vmatpush1.msra.mxu0 0.0
  %1127 = vmatprep.subr.mxu0 0.0
  %1128 = vmatpush1.msra.mxu0 0.0
  %1129 = vmatprep.subr.mxu0 0.0
  %1130 = vmatpush1.msra.mxu0 0.0
  %1131 = vmatprep.subr.mxu0 0.0
  %1132 = vmatpush1.msra.mxu0 0.0
  %1133 = vmatprep.subr.mxu0 0.0
  %1134 = vmatpush1.msra.mxu0 0.0
  %1135 = vmatprep.subr.mxu0 0.0
  %1136 = vmatpush1.msra.mxu0 0.0
  %1137 = vmatprep.subr.mxu0 0.0
  %1138 = vmatpush1.msra.mxu0 0.0
  %1139 = vmatprep.subr.mxu0 0.0
  %1140 = vmatpush1.msra.mxu0 0.0
  %1141 = vmatprep.subr.mxu0 0.0
  %1142 = vmatpush1.msra.mxu0 0.0
  %1143 = vmatprep.subr.mxu0 0.0
  %1144 = vmatpush1.msra.mxu0 0.0
  %1145 = vmatprep.subr.mxu0 0.0
  %1146 = vmatpush1.msra.mxu0 0.0
  %1147 = vmatprep.subr.mxu0 0.0
  %1148 = vmatpush1.msra.mxu0 0.0
  %1149 = vmatprep.subr.mxu0 0.0
  %1150 = vmatpush1.msra.mxu0 0.0
  %1151 = vmatprep.subr.mxu0 0.0
  %1152 = vmatpush1.msra.mxu0 0.0
  %1153 = vmatprep.subr.mxu0 0.0
  %1154 = vmatpush1.msra.mxu0 0.0
  %1155 = vmatprep.subr.mxu0 0.0
  %1156 = vmatpush1.msra.mxu0 0.0
  %1157 = vmatprep.subr.mxu0 0.0
  %1158 = vmatpush1.msra.mxu0 0.0
  %1159 = vmatprep.subr.mxu0 0.0
  %1160 = vmatpush1.msra.mxu0 0.0
  %1161 = vmatprep.mubr.f32.mxu0 0.0
  %1162 = vmatmul.mubr.f32.gmra.mrb[0].mxu0 %v1086
  %v1163 = vpop.f32.mrb[0].mxu0
  %v1164 = vadd.f32 0.0, %v1163
  %v1165 = vpop.f32.mrb[0].mxu0
  %v1166 = vadd.f32 0.0, %v1165
  %1167 = vmatprep.mubr.f32.mxu0 0.0
  %1168 = vmatmul.mubr.f32.gmra.mrb[0].mxu0 %v1089
  %v1169 = vpop.f32.mrb[0].mxu0
  %v1170 = vadd.f32 0.0, %v1169
  %v1171 = vpop.f32.mrb[0].mxu0
  %v1172 = vadd.f32 0.0, %v1171
  %1173 = vmatprep.mubr.f32.mxu0 0.0
  %1174 = vmatmul.mubr.f32.gmra.mrb[0].mxu0 %v1092
  %v1175 = vpop.f32.mrb[0].mxu0
  %v1176 = vadd.f32 0.0, %v1175
  %v1177 = vpop.f32.mrb[0].mxu0
  %v1178 = vadd.f32 0.0, %v1177
  %1179 = vmatprep.mubr.f32.mxu0 0.0
  %1180 = vmatmul.mubr.f32.gmra.mrb[0].mxu0 %v1095
  %v1181 = vpop.f32.mrb[0].mxu0
  %v1182 = vadd.f32 0.0, %v1181
  %v1183 = vpop.f32.mrb[0].mxu0
  %v1184 = vadd.f32 0.0, %v1183
  %1185 = vdwg.mxu0
  %v1186 = vadd.f32 %v1036, %v1164
  %v1187 = vadd.f32 %v1037, %v1166
  %v1188 = vadd.f32 %v1038, %v1170
  %v1189 = vadd.f32 %v1039, %v1172
  %v1190 = vadd.f32 %v1040, %v1176
  %v1191 = vadd.f32 %v1041, %v1178
  %v1192 = vadd.f32 %v1042, %v1182
  %v1193 = vadd.f32 %v1043, %v1184
  %1194 = vrot.lane.b32.xlu0 %v32, 117
  %v1195 = vpop.permute.xlu0 %1194
  %1196 = vrot.lane.b32.xlu0 %v34, 117
  %v1197 = vpop.permute.xlu0 %1196
  %1198 = vrot.lane.b32.xlu0 %v36, 117
  %v1199 = vpop.permute.xlu0 %1198
  %1200 = vrot.lane.b32.xlu0 %v38, 117
  %v1201 = vpop.permute.xlu0 %1200
  %1202 = vrot.lane.b32.xlu0 %v40, 117
  %v1203 = vpop.permute.xlu0 %1202
  %1204 = vrot.lane.b32.xlu0 %v42, 117
  %v1205 = vpop.permute.xlu0 %1204
  %1206 = vrot.lane.b32.xlu0 %v33, 117
  %v1207 = vpop.permute.xlu0 %1206
  %1208 = vrot.lane.b32.xlu0 %v35, 117
  %v1209 = vpop.permute.xlu0 %1208
  %1210 = vrot.lane.b32.xlu0 %v37, 117
  %v1211 = vpop.permute.xlu0 %1210
  %1212 = vrot.lane.b32.xlu0 %v39, 117
  %v1213 = vpop.permute.xlu0 %1212
  %1214 = vrot.lane.b32.xlu0 %v41, 117
  %v1215 = vpop.permute.xlu0 %1214
  %1216 = vrot.lane.b32.xlu0 %v43, 117
  %v1217 = vpop.permute.xlu0 %1216
  %vm1218 = vcmp.lt.s32.totalorder %v69, 117
  %v1219 = vsel %vm1218, %v1195, %v1207
  %v1220 = vsel %vm1218, %v1197, %v1209
  %v1221 = vsel %vm1218, %v1199, %v1211
  %v1222 = vsel %vm1218, %v1201, %v1213
  %v1223 = vsel %vm1218, %v1203, %v1215
  %v1224 = vsel %vm1218, %v1205, %v1217
  %v1225 = vsel %vm1218, %v1207, %v1195
  %v1226 = vsel %vm1218, %v1209, %v1197
  %v1227 = vsel %vm1218, %v1211, %v1199
  %v1228 = vsel %vm1218, %v1213, %v1201
  %v1229 = vsel %vm1218, %v1215, %v1203
  %v1230 = vsel %vm1218, %v1217, %v1205
  %v1231 = vld [vmem:[%s6 + $0x100] sm:$0xff]
  %v1232 = vld [vmem:[%s6 + $0x108] sm:$0xff]
  %v1233 = vld [vmem:[%s6 + $0x110] sm:$0xff]
  %v1234 = vld [vmem:[%s6 + $0x118] sm:$0xff]
  %v1236 = vsel %vm128, %v1231, 0
  %v1239 = vsel %vm128, %v1232, 0
  %v1242 = vsel %vm128, %v1233, 0
  %v1245 = vsel %vm128, %v1234, 0
  %1247 = vmatprep.subr.mxu0 %v1225
  %1248 = vmatpush1.msra.mxu0 %v1219
  %1249 = vmatprep.subr.mxu0 %v1226
  %1250 = vmatpush1.msra.mxu0 %v1220
  %1251 = vmatprep.subr.mxu0 %v1227
  %1252 = vmatpush1.msra.mxu0 %v1221
  %1253 = vmatprep.subr.mxu0 %v1228
  %1254 = vmatpush1.msra.mxu0 %v1222
  %1255 = vmatprep.subr.mxu0 %v1229
  %1256 = vmatpush1.msra.mxu0 %v1223
  %1257 = vmatprep.subr.mxu0 %v1230
  %1258 = vmatpush1.msra.mxu0 %v1224
  %1259 = vmatprep.subr.mxu0 0.0
  %1260 = vmatpush1.msra.mxu0 0.0
  %1261 = vmatprep.subr.mxu0 0.0
  %1262 = vmatpush1.msra.mxu0 0.0
  %1263 = vmatprep.subr.mxu0 0.0
  %1264 = vmatpush1.msra.mxu0 0.0
  %1265 = vmatprep.subr.mxu0 0.0
  %1266 = vmatpush1.msra.mxu0 0.0
  %1267 = vmatprep.subr.mxu0 0.0
  %1268 = vmatpush1.msra.mxu0 0.0
  %1269 = vmatprep.subr.mxu0 0.0
  %1270 = vmatpush1.msra.mxu0 0.0
  %1271 = vmatprep.subr.mxu0 0.0
  %1272 = vmatpush1.msra.mxu0 0.0
  %1273 = vmatprep.subr.mxu0 0.0
  %1274 = vmatpush1.msra.mxu0 0.0
  %1275 = vmatprep.subr.mxu0 0.0
  %1276 = vmatpush1.msra.mxu0 0.0
  %1277 = vmatprep.subr.mxu0 0.0
  %1278 = vmatpush1.msra.mxu0 0.0
  %1279 = vmatprep.subr.mxu0 0.0
  %1280 = vmatpush1.msra.mxu0 0.0
  %1281 = vmatprep.subr.mxu0 0.0
  %1282 = vmatpush1.msra.mxu0 0.0
  %1283 = vmatprep.subr.mxu0 0.0
  %1284 = vmatpush1.msra.mxu0 0.0
  %1285 = vmatprep.subr.mxu0 0.0
  %1286 = vmatpush1.msra.mxu0 0.0
  %1287 = vmatprep.subr.mxu0 0.0
  %1288 = vmatpush1.msra.mxu0 0.0
  %1289 = vmatprep.subr.mxu0 0.0
  %1290 = vmatpush1.msra.mxu0 0.0
  %1291 = vmatprep.subr.mxu0 0.0
  %1292 = vmatpush1.msra.mxu0 0.0
  %1293 = vmatprep.subr.mxu0 0.0
  %1294 = vmatpush1.msra.mxu0 0.0
  %1295 = vmatprep.subr.mxu0 0.0
  %1296 = vmatpush1.msra.mxu0 0.0
  %1297 = vmatprep.subr.mxu0 0.0
  %1298 = vmatpush1.msra.mxu0 0.0
  %1299 = vmatprep.subr.mxu0 0.0
  %1300 = vmatpush1.msra.mxu0 0.0
  %1301 = vmatprep.subr.mxu0 0.0
  %1302 = vmatpush1.msra.mxu0 0.0
  %1303 = vmatprep.subr.mxu0 0.0
  %1304 = vmatpush1.msra.mxu0 0.0
  %1305 = vmatprep.subr.mxu0 0.0
  %1306 = vmatpush1.msra.mxu0 0.0
  %1307 = vmatprep.subr.mxu0 0.0
  %1308 = vmatpush1.msra.mxu0 0.0
  %1309 = vmatprep.subr.mxu0 0.0
  %1310 = vmatpush1.msra.mxu0 0.0
  %1311 = vmatprep.mubr.f32.mxu0 0.0
  %1312 = vmatmul.mubr.f32.gmra.mrb[0].mxu0 %v1236
  %v1313 = vpop.f32.mrb[0].mxu0
  %v1314 = vadd.f32 0.0, %v1313
  %v1315 = vpop.f32.mrb[0].mxu0
  %v1316 = vadd.f32 0.0, %v1315
  %1317 = vmatprep.mubr.f32.mxu0 0.0
  %1318 = vmatmul.mubr.f32.gmra.mrb[0].mxu0 %v1239
  %v1319 = vpop.f32.mrb[0].mxu0
  %v1320 = vadd.f32 0.0, %v1319
  %v1321 = vpop.f32.mrb[0].mxu0
  %v1322 = vadd.f32 0.0, %v1321
  %1323 = vmatprep.mubr.f32.mxu0 0.0
  %1324 = vmatmul.mubr.f32.gmra.mrb[0].mxu0 %v1242
  %v1325 = vpop.f32.mrb[0].mxu0
  %v1326 = vadd.f32 0.0, %v1325
  %v1327 = vpop.f32.mrb[0].mxu0
  %v1328 = vadd.f32 0.0, %v1327
  %1329 = vmatprep.mubr.f32.mxu0 0.0
  %1330 = vmatmul.mubr.f32.gmra.mrb[0].mxu0 %v1245
  %v1331 = vpop.f32.mrb[0].mxu0
  %v1332 = vadd.f32 0.0, %v1331
  %v1333 = vpop.f32.mrb[0].mxu0
  %v1334 = vadd.f32 0.0, %v1333
  %1335 = vdwg.mxu0
  %v1336 = vadd.f32 %v1186, %v1314
  %v1337 = vadd.f32 %v1187, %v1316
  %v1338 = vadd.f32 %v1188, %v1320
  %v1339 = vadd.f32 %v1189, %v1322
  %v1340 = vadd.f32 %v1190, %v1326
  %v1341 = vadd.f32 %v1191, %v1328
  %v1342 = vadd.f32 %v1192, %v1332
  %v1343 = vadd.f32 %v1193, %v1334
  %v1344 = vld [vmem:[%s6 + $0x200] sm:$0xff]
  %v1345 = vld [vmem:[%s6 + $0x208] sm:$0xff]
  %v1346 = vld [vmem:[%s6 + $0x210] sm:$0xff]
  %v1347 = vld [vmem:[%s6 + $0x218] sm:$0xff]
  %1349 = vset.pattern.permute.xlu0 0
  %1350 = vperm.xlu0 %1349, %v1344
  %v1351 = vpop.permute.xlu0 %1350
  %1354 = vset.pattern.permute.xlu0 0
  %1355 = vperm.xlu0 %1354, %v1345
  %v1356 = vpop.permute.xlu0 %1355
  %1359 = vset.pattern.permute.xlu0 0
  %1360 = vperm.xlu0 %1359, %v1346
  %v1361 = vpop.permute.xlu0 %1360
  %1364 = vset.pattern.permute.xlu0 0
  %1365 = vperm.xlu0 %1364, %v1347
  %v1366 = vpop.permute.xlu0 %1365
  %v1368 = vadd.f32 %v1336, %v1351
  %v1369 = vadd.f32 %v1337, %v1351
  %v1370 = vadd.f32 %v1338, %v1356
  %v1371 = vadd.f32 %v1339, %v1356
  %v1372 = vadd.f32 %v1340, %v1361
  %v1373 = vadd.f32 %v1341, %v1361
  %v1374 = vadd.f32 %v1342, %v1366
  %v1375 = vadd.f32 %v1343, %v1366
  %v1376 = vmax.f32 %v1368, 0.0
  %v1377 = vmax.f32 %v1369, 0.0
  %v1378 = vmax.f32 %v1370, 0.0
  %v1379 = vmax.f32 %v1371, 0.0
  %v1380 = vmax.f32 %v1372, 0.0
  %v1381 = vmax.f32 %v1373, 0.0
  %v1382 = vmax.f32 %v1374, 0.0
  %v1383 = vmax.f32 %v1375, 0.0
  %v1385 = vlaneseq
  %v1386 = vshrl.u32 %v1385, 7
  %v1387 = vsub.s32 0, %v1386
  %v1388 = vrot.slane %v31, %v1387
  %v1389 = vlaneseq
  %v1390 = vshrl.u32 %v1389, 7
  %v1391 = vsub.s32 1, %v1390
  %v1392 = vrot.slane %v31, %v1391
  %v1395 = vmul.f32 %v1376, %v1388
  %v1396 = vmul.f32 %v1377, %v1392
  %v1397 = vmul.f32 %v1378, %v1388
  %v1398 = vmul.f32 %v1379, %v1392
  %v1399 = vmul.f32 %v1380, %v1388
  %v1400 = vmul.f32 %v1381, %v1392
  %v1401 = vmul.f32 %v1382, %v1388
  %v1402 = vmul.f32 %v1383, %v1392
  %1403 = vrot.lane.b32.xlu0 %v1395, 11
  %v1404 = vpop.permute.xlu0 %1403
  %1405 = vrot.lane.b32.xlu0 %v1397, 11
  %v1406 = vpop.permute.xlu0 %1405
  %1407 = vrot.lane.b32.xlu0 %v1399, 11
  %v1408 = vpop.permute.xlu0 %1407
  %1409 = vrot.lane.b32.xlu0 %v1401, 11
  %v1410 = vpop.permute.xlu0 %1409
  %1411 = vrot.lane.b32.xlu0 %v1396, 11
  %v1412 = vpop.permute.xlu0 %1411
  %1413 = vrot.lane.b32.xlu0 %v1398, 11
  %v1414 = vpop.permute.xlu0 %1413
  %1415 = vrot.lane.b32.xlu0 %v1400, 11
  %v1416 = vpop.permute.xlu0 %1415
  %1417 = vrot.lane.b32.xlu0 %v1402, 11
  %v1418 = vpop.permute.xlu0 %1417
  %v1419 = vsel %vm70, %v1404, %v1412
  %v1420 = vsel %vm70, %v1406, %v1414
  %v1421 = vsel %vm70, %v1408, %v1416
  %v1422 = vsel %vm70, %v1410, %v1418
  %v1423 = vsel %vm70, %v1412, %v1404
  %v1424 = vsel %vm70, %v1414, %v1406
  %v1425 = vsel %vm70, %v1416, %v1408
  %v1426 = vsel %vm70, %v1418, %v1410
  %v1427 = vld [vmem:[%s6 + $0x120] sm:$0xff]
  %v1428 = vld [vmem:[%s6 + $0x128] sm:$0xff]
  %1429 = vrot.lane.b32.xlu0 %v1395, 10
  %v1430 = vpop.permute.xlu0 %1429
  %1431 = vrot.lane.b32.xlu0 %v1397, 10
  %v1432 = vpop.permute.xlu0 %1431
  %1433 = vrot.lane.b32.xlu0 %v1399, 10
  %v1434 = vpop.permute.xlu0 %1433
  %1435 = vrot.lane.b32.xlu0 %v1401, 10
  %v1436 = vpop.permute.xlu0 %1435
  %1437 = vrot.lane.b32.xlu0 %v1396, 10
  %v1438 = vpop.permute.xlu0 %1437
  %1439 = vrot.lane.b32.xlu0 %v1398, 10
  %v1440 = vpop.permute.xlu0 %1439
  %1441 = vrot.lane.b32.xlu0 %v1400, 10
  %v1442 = vpop.permute.xlu0 %1441
  %1443 = vrot.lane.b32.xlu0 %v1402, 10
  %v1444 = vpop.permute.xlu0 %1443
  %v1445 = vsel %vm111, %v1430, %v1438
  %v1446 = vsel %vm111, %v1432, %v1440
  %v1447 = vsel %vm111, %v1434, %v1442
  %v1448 = vsel %vm111, %v1436, %v1444
  %v1449 = vsel %vm111, %v1438, %v1430
  %v1450 = vsel %vm111, %v1440, %v1432
  %v1451 = vsel %vm111, %v1442, %v1434
  %v1452 = vsel %vm111, %v1444, %v1436
  %v1453 = vld [vmem:[%s6 + $0x130] sm:$0xff]
  %v1454 = vld [vmem:[%s6 + $0x138] sm:$0xff]
  %vm1455 = vcmask 261120
  %v1457 = vsel %vm1455, %v1453, 0
  %v1460 = vsel %vm1455, %v1454, 0
  %1462 = vmatprep.subr.mxu0 %v1445
  %1463 = vmatpush1.msra.mxu0 %v1449
  %1464 = vmatprep.subr.mxu0 %v1446
  %1465 = vmatpush1.msra.mxu0 %v1450
  %1466 = vmatprep.subr.mxu0 %v1447
  %1467 = vmatpush1.msra.mxu0 %v1451
  %1468 = vmatprep.subr.mxu0 %v1448
  %1469 = vmatpush1.msra.mxu0 %v1452
  %1470 = vmatprep.subr.mxu0 0.0
  %1471 = vmatpush1.msra.mxu0 0.0
  %1472 = vmatprep.subr.mxu0 0.0
  %1473 = vmatpush1.msra.mxu0 0.0
  %1474 = vmatprep.subr.mxu0 0.0
  %1475 = vmatpush1.msra.mxu0 0.0
  %1476 = vmatprep.subr.mxu0 0.0
  %1477 = vmatpush1.msra.mxu0 0.0
  %1478 = vmatprep.subr.mxu0 0.0
  %1479 = vmatpush1.msra.mxu0 0.0
  %1480 = vmatprep.subr.mxu0 0.0
  %1481 = vmatpush1.msra.mxu0 0.0
  %1482 = vmatprep.subr.mxu0 0.0
  %1483 = vmatpush1.msra.mxu0 0.0
  %1484 = vmatprep.subr.mxu0 0.0
  %1485 = vmatpush1.msra.mxu0 0.0
  %1486 = vmatprep.subr.mxu0 0.0
  %1487 = vmatpush1.msra.mxu0 0.0
  %1488 = vmatprep.subr.mxu0 0.0
  %1489 = vmatpush1.msra.mxu0 0.0
  %1490 = vmatprep.subr.mxu0 0.0
  %1491 = vmatpush1.msra.mxu0 0.0
  %1492 = vmatprep.subr.mxu0 0.0
  %1493 = vmatpush1.msra.mxu0 0.0
  %1494 = vmatprep.subr.mxu0 0.0
  %1495 = vmatpush1.msra.mxu0 0.0
  %1496 = vmatprep.subr.mxu0 0.0
  %1497 = vmatpush1.msra.mxu0 0.0
  %1498 = vmatprep.subr.mxu0 0.0
  %1499 = vmatpush1.msra.mxu0 0.0
  %1500 = vmatprep.subr.mxu0 0.0
  %1501 = vmatpush1.msra.mxu0 0.0
  %1502 = vmatprep.subr.mxu0 0.0
  %1503 = vmatpush1.msra.mxu0 0.0
  %1504 = vmatprep.subr.mxu0 0.0
  %1505 = vmatpush1.msra.mxu0 0.0
  %1506 = vmatprep.subr.mxu0 0.0
  %1507 = vmatpush1.msra.mxu0 0.0
  %1508 = vmatprep.subr.mxu0 0.0
  %1509 = vmatpush1.msra.mxu0 0.0
  %1510 = vmatprep.subr.mxu0 0.0
  %1511 = vmatpush1.msra.mxu0 0.0
  %1512 = vmatprep.subr.mxu0 0.0
  %1513 = vmatpush1.msra.mxu0 0.0
  %1514 = vmatprep.subr.mxu0 0.0
  %1515 = vmatpush1.msra.mxu0 0.0
  %1516 = vmatprep.subr.mxu0 0.0
  %1517 = vmatpush1.msra.mxu0 0.0
  %1518 = vmatprep.subr.mxu0 0.0
  %1519 = vmatpush1.msra.mxu0 0.0
  %1520 = vmatprep.subr.mxu0 0.0
  %1521 = vmatpush1.msra.mxu0 0.0
  %1522 = vmatprep.subr.mxu0 0.0
  %1523 = vmatpush1.msra.mxu0 0.0
  %1524 = vmatprep.subr.mxu0 0.0
  %1525 = vmatpush1.msra.mxu0 0.0
  %1526 = vmatprep.mubr.f32.mxu0 0.0
  %1527 = vmatmul.mubr.f32.gmra.mrb[0].mxu0 %v1457
  %v1528 = vpop.f32.mrb[0].mxu0
  %v1529 = vadd.f32 0.0, %v1528
  %v1530 = vpop.f32.mrb[0].mxu0
  %v1531 = vadd.f32 0.0, %v1530
  %1532 = vmatprep.mubr.f32.mxu0 0.0
  %1533 = vmatmul.mubr.f32.gmra.mrb[0].mxu0 %v1460
  %v1534 = vpop.f32.mrb[0].mxu0
  %v1535 = vadd.f32 0.0, %v1534
  %v1536 = vpop.f32.mrb[0].mxu0
  %v1537 = vadd.f32 0.0, %v1536
  %1538 = vdwg.mxu0
  %v1540 = vsel %vm1455, %v1427, 0
  %v1543 = vsel %vm1455, %v1428, 0
  %1545 = vmatprep.subr.mxu0 %v1419
  %1546 = vmatpush1.msra.mxu0 %v1423
  %1547 = vmatprep.subr.mxu0 %v1420
  %1548 = vmatpush1.msra.mxu0 %v1424
  %1549 = vmatprep.subr.mxu0 %v1421
  %1550 = vmatpush1.msra.mxu0 %v1425
  %1551 = vmatprep.subr.mxu0 %v1422
  %1552 = vmatpush1.msra.mxu0 %v1426
  %1553 = vmatprep.subr.mxu0 0.0
  %1554 = vmatpush1.msra.mxu0 0.0
  %1555 = vmatprep.subr.mxu0 0.0
  %1556 = vmatpush1.msra.mxu0 0.0
  %1557 = vmatprep.subr.mxu0 0.0
  %1558 = vmatpush1.msra.mxu0 0.0
  %1559 = vmatprep.subr.mxu0 0.0
  %1560 = vmatpush1.msra.mxu0 0.0
  %1561 = vmatprep.subr.mxu0 0.0
  %1562 = vmatpush1.msra.mxu0 0.0
  %1563 = vmatprep.subr.mxu0 0.0
  %1564 = vmatpush1.msra.mxu0 0.0
  %1565 = vmatprep.subr.mxu0 0.0
  %1566 = vmatpush1.msra.mxu0 0.0
  %1567 = vmatprep.subr.mxu0 0.0
  %1568 = vmatpush1.msra.mxu0 0.0
  %1569 = vmatprep.subr.mxu0 0.0
  %1570 = vmatpush1.msra.mxu0 0.0
  %1571 = vmatprep.subr.mxu0 0.0
  %1572 = vmatpush1.msra.mxu0 0.0
  %1573 = vmatprep.subr.mxu0 0.0
  %1574 = vmatpush1.msra.mxu0 0.0
  %1575 = vmatprep.subr.mxu0 0.0
  %1576 = vmatpush1.msra.mxu0 0.0
  %1577 = vmatprep.subr.mxu0 0.0
  %1578 = vmatpush1.msra.mxu0 0.0
  %1579 = vmatprep.subr.mxu0 0.0
  %1580 = vmatpush1.msra.mxu0 0.0
  %1581 = vmatprep.subr.mxu0 0.0
  %1582 = vmatpush1.msra.mxu0 0.0
  %1583 = vmatprep.subr.mxu0 0.0
  %1584 = vmatpush1.msra.mxu0 0.0
  %1585 = vmatprep.subr.mxu0 0.0
  %1586 = vmatpush1.msra.mxu0 0.0
  %1587 = vmatprep.subr.mxu0 0.0
  %1588 = vmatpush1.msra.mxu0 0.0
  %1589 = vmatprep.subr.mxu0 0.0
  %1590 = vmatpush1.msra.mxu0 0.0
  %1591 = vmatprep.subr.mxu0 0.0
  %1592 = vmatpush1.msra.mxu0 0.0
  %1593 = vmatprep.subr.mxu0 0.0
  %1594 = vmatpush1.msra.mxu0 0.0
  %1595 = vmatprep.subr.mxu0 0.0
  %1596 = vmatpush1.msra.mxu0 0.0
  %1597 = vmatprep.subr.mxu0 0.0
  %1598 = vmatpush1.msra.mxu0 0.0
  %1599 = vmatprep.subr.mxu0 0.0
  %1600 = vmatpush1.msra.mxu0 0.0
  %1601 = vmatprep.subr.mxu0 0.0
  %1602 = vmatpush1.msra.mxu0 0.0
  %1603 = vmatprep.subr.mxu0 0.0
  %1604 = vmatpush1.msra.mxu0 0.0
  %1605 = vmatprep.subr.mxu0 0.0
  %1606 = vmatpush1.msra.mxu0 0.0
  %1607 = vmatprep.subr.mxu0 0.0
  %1608 = vmatpush1.msra.mxu0 0.0
  %1609 = vmatprep.mubr.f32.mxu0 0.0
  %1610 = vmatmul.mubr.f32.gmra.mrb[0].mxu0 %v1540
  %v1611 = vpop.f32.mrb[0].mxu0
  %v1612 = vadd.f32 %v1529, %v1611
  %v1613 = vpop.f32.mrb[0].mxu0
  %v1614 = vadd.f32 %v1531, %v1613
  %1615 = vmatprep.mubr.f32.mxu0 0.0
  %1616 = vmatmul.mubr.f32.gmra.mrb[0].mxu0 %v1543
  %v1617 = vpop.f32.mrb[0].mxu0
  %v1618 = vadd.f32 %v1535, %v1617
  %v1619 = vpop.f32.mrb[0].mxu0
  %v1620 = vadd.f32 %v1537, %v1619
  %1621 = vdwg.mxu0
  %1622 = vrot.lane.b32.xlu0 %v1395, 9
  %v1623 = vpop.permute.xlu0 %1622
  %1624 = vrot.lane.b32.xlu0 %v1397, 9
  %v1625 = vpop.permute.xlu0 %1624
  %1626 = vrot.lane.b32.xlu0 %v1399, 9
  %v1627 = vpop.permute.xlu0 %1626
  %1628 = vrot.lane.b32.xlu0 %v1401, 9
  %v1629 = vpop.permute.xlu0 %1628
  %1630 = vrot.lane.b32.xlu0 %v1396, 9
  %v1631 = vpop.permute.xlu0 %1630
  %1632 = vrot.lane.b32.xlu0 %v1398, 9
  %v1633 = vpop.permute.xlu0 %1632
  %1634 = vrot.lane.b32.xlu0 %v1400, 9
  %v1635 = vpop.permute.xlu0 %1634
  %1636 = vrot.lane.b32.xlu0 %v1402, 9
  %v1637 = vpop.permute.xlu0 %1636
  %v1638 = vsel %vm355, %v1623, %v1631
  %v1639 = vsel %vm355, %v1625, %v1633
  %v1640 = vsel %vm355, %v1627, %v1635
  %v1641 = vsel %vm355, %v1629, %v1637
  %v1642 = vsel %vm355, %v1631, %v1623
  %v1643 = vsel %vm355, %v1633, %v1625
  %v1644 = vsel %vm355, %v1635, %v1627
  %v1645 = vsel %vm355, %v1637, %v1629
  %v1646 = vld [vmem:[%s6 + $0x140] sm:$0xff]
  %v1647 = vld [vmem:[%s6 + $0x148] sm:$0xff]
  %v1649 = vsel %vm1455, %v1646, 0
  %v1652 = vsel %vm1455, %v1647, 0
  %1654 = vmatprep.subr.mxu0 %v1638
  %1655 = vmatpush1.msra.mxu0 %v1642
  %1656 = vmatprep.subr.mxu0 %v1639
  %1657 = vmatpush1.msra.mxu0 %v1643
  %1658 = vmatprep.subr.mxu0 %v1640
  %1659 = vmatpush1.msra.mxu0 %v1644
  %1660 = vmatprep.subr.mxu0 %v1641
  %1661 = vmatpush1.msra.mxu0 %v1645
  %1662 = vmatprep.subr.mxu0 0.0
  %1663 = vmatpush1.msra.mxu0 0.0
  %1664 = vmatprep.subr.mxu0 0.0
  %1665 = vmatpush1.msra.mxu0 0.0
  %1666 = vmatprep.subr.mxu0 0.0
  %1667 = vmatpush1.msra.mxu0 0.0
  %1668 = vmatprep.subr.mxu0 0.0
  %1669 = vmatpush1.msra.mxu0 0.0
  %1670 = vmatprep.subr.mxu0 0.0
  %1671 = vmatpush1.msra.mxu0 0.0
  %1672 = vmatprep.subr.mxu0 0.0
  %1673 = vmatpush1.msra.mxu0 0.0
  %1674 = vmatprep.subr.mxu0 0.0
  %1675 = vmatpush1.msra.mxu0 0.0
  %1676 = vmatprep.subr.mxu0 0.0
  %1677 = vmatpush1.msra.mxu0 0.0
  %1678 = vmatprep.subr.mxu0 0.0
  %1679 = vmatpush1.msra.mxu0 0.0
  %1680 = vmatprep.subr.mxu0 0.0
  %1681 = vmatpush1.msra.mxu0 0.0
  %1682 = vmatprep.subr.mxu0 0.0
  %1683 = vmatpush1.msra.mxu0 0.0
  %1684 = vmatprep.subr.mxu0 0.0
  %1685 = vmatpush1.msra.mxu0 0.0
  %1686 = vmatprep.subr.mxu0 0.0
  %1687 = vmatpush1.msra.mxu0 0.0
  %1688 = vmatprep.subr.mxu0 0.0
  %1689 = vmatpush1.msra.mxu0 0.0
  %1690 = vmatprep.subr.mxu0 0.0
  %1691 = vmatpush1.msra.mxu0 0.0
  %1692 = vmatprep.subr.mxu0 0.0
  %1693 = vmatpush1.msra.mxu0 0.0
  %1694 = vmatprep.subr.mxu0 0.0
  %1695 = vmatpush1.msra.mxu0 0.0
  %1696 = vmatprep.subr.mxu0 0.0
  %1697 = vmatpush1.msra.mxu0 0.0
  %1698 = vmatprep.subr.mxu0 0.0
  %1699 = vmatpush1.msra.mxu0 0.0
  %1700 = vmatprep.subr.mxu0 0.0
  %1701 = vmatpush1.msra.mxu0 0.0
  %1702 = vmatprep.subr.mxu0 0.0
  %1703 = vmatpush1.msra.mxu0 0.0
  %1704 = vmatprep.subr.mxu0 0.0
  %1705 = vmatpush1.msra.mxu0 0.0
  %1706 = vmatprep.subr.mxu0 0.0
  %1707 = vmatpush1.msra.mxu0 0.0
  %1708 = vmatprep.subr.mxu0 0.0
  %1709 = vmatpush1.msra.mxu0 0.0
  %1710 = vmatprep.subr.mxu0 0.0
  %1711 = vmatpush1.msra.mxu0 0.0
  %1712 = vmatprep.subr.mxu0 0.0
  %1713 = vmatpush1.msra.mxu0 0.0
  %1714 = vmatprep.subr.mxu0 0.0
  %1715 = vmatpush1.msra.mxu0 0.0
  %1716 = vmatprep.subr.mxu0 0.0
  %1717 = vmatpush1.msra.mxu0 0.0
  %1718 = vmatprep.mubr.f32.mxu0 0.0
  %1719 = vmatmul.mubr.f32.gmra.mrb[0].mxu0 %v1649
  %v1720 = vpop.f32.mrb[0].mxu0
  %v1721 = vadd.f32 0.0, %v1720
  %v1722 = vpop.f32.mrb[0].mxu0
  %v1723 = vadd.f32 0.0, %v1722
  %1724 = vmatprep.mubr.f32.mxu0 0.0
  %1725 = vmatmul.mubr.f32.gmra.mrb[0].mxu0 %v1652
  %v1726 = vpop.f32.mrb[0].mxu0
  %v1727 = vadd.f32 0.0, %v1726
  %v1728 = vpop.f32.mrb[0].mxu0
  %v1729 = vadd.f32 0.0, %v1728
  %1730 = vdwg.mxu0
  %v1731 = vadd.f32 %v1612, %v1721
  %v1732 = vadd.f32 %v1614, %v1723
  %v1733 = vadd.f32 %v1618, %v1727
  %v1734 = vadd.f32 %v1620, %v1729
  %1735 = vrot.lane.b32.xlu0 %v1395, 1
  %v1736 = vpop.permute.xlu0 %1735
  %1737 = vrot.lane.b32.xlu0 %v1397, 1
  %v1738 = vpop.permute.xlu0 %1737
  %1739 = vrot.lane.b32.xlu0 %v1399, 1
  %v1740 = vpop.permute.xlu0 %1739
  %1741 = vrot.lane.b32.xlu0 %v1401, 1
  %v1742 = vpop.permute.xlu0 %1741
  %1743 = vrot.lane.b32.xlu0 %v1396, 1
  %v1744 = vpop.permute.xlu0 %1743
  %1745 = vrot.lane.b32.xlu0 %v1398, 1
  %v1746 = vpop.permute.xlu0 %1745
  %1747 = vrot.lane.b32.xlu0 %v1400, 1
  %v1748 = vpop.permute.xlu0 %1747
  %1749 = vrot.lane.b32.xlu0 %v1402, 1
  %v1750 = vpop.permute.xlu0 %1749
  %v1751 = vsel %vm505, %v1736, %v1744
  %v1752 = vsel %vm505, %v1738, %v1746
  %v1753 = vsel %vm505, %v1740, %v1748
  %v1754 = vsel %vm505, %v1742, %v1750
  %v1755 = vsel %vm505, %v1744, %v1736
  %v1756 = vsel %vm505, %v1746, %v1738
  %v1757 = vsel %vm505, %v1748, %v1740
  %v1758 = vsel %vm505, %v1750, %v1742
  %v1759 = vld [vmem:[%s6 + $0x150] sm:$0xff]
  %v1760 = vld [vmem:[%s6 + $0x158] sm:$0xff]
  %v1762 = vsel %vm1455, %v1759, 0
  %v1765 = vsel %vm1455, %v1760, 0
  %1767 = vmatprep.subr.mxu0 %v1751
  %1768 = vmatpush1.msra.mxu0 %v1755
  %1769 = vmatprep.subr.mxu0 %v1752
  %1770 = vmatpush1.msra.mxu0 %v1756
  %1771 = vmatprep.subr.mxu0 %v1753
  %1772 = vmatpush1.msra.mxu0 %v1757
  %1773 = vmatprep.subr.mxu0 %v1754
  %1774 = vmatpush1.msra.mxu0 %v1758
  %1775 = vmatprep.subr.mxu0 0.0
  %1776 = vmatpush1.msra.mxu0 0.0
  %1777 = vmatprep.subr.mxu0 0.0
  %1778 = vmatpush1.msra.mxu0 0.0
  %1779 = vmatprep.subr.mxu0 0.0
  %1780 = vmatpush1.msra.mxu0 0.0
  %1781 = vmatprep.subr.mxu0 0.0
  %1782 = vmatpush1.msra.mxu0 0.0
  %1783 = vmatprep.subr.mxu0 0.0
  %1784 = vmatpush1.msra.mxu0 0.0
  %1785 = vmatprep.subr.mxu0 0.0
  %1786 = vmatpush1.msra.mxu0 0.0
  %1787 = vmatprep.subr.mxu0 0.0
  %1788 = vmatpush1.msra.mxu0 0.0
  %1789 = vmatprep.subr.mxu0 0.0
  %1790 = vmatpush1.msra.mxu0 0.0
  %1791 = vmatprep.subr.mxu0 0.0
  %1792 = vmatpush1.msra.mxu0 0.0
  %1793 = vmatprep.subr.mxu0 0.0
  %1794 = vmatpush1.msra.mxu0 0.0
  %1795 = vmatprep.subr.mxu0 0.0
  %1796 = vmatpush1.msra.mxu0 0.0
  %1797 = vmatprep.subr.mxu0 0.0
  %1798 = vmatpush1.msra.mxu0 0.0
  %1799 = vmatprep.subr.mxu0 0.0
  %1800 = vmatpush1.msra.mxu0 0.0
  %1801 = vmatprep.subr.mxu0 0.0
  %1802 = vmatpush1.msra.mxu0 0.0
  %1803 = vmatprep.subr.mxu0 0.0
  %1804 = vmatpush1.msra.mxu0 0.0
  %1805 = vmatprep.subr.mxu0 0.0
  %1806 = vmatpush1.msra.mxu0 0.0
  %1807 = vmatprep.subr.mxu0 0.0
  %1808 = vmatpush1.msra.mxu0 0.0
  %1809 = vmatprep.subr.mxu0 0.0
  %1810 = vmatpush1.msra.mxu0 0.0
  %1811 = vmatprep.subr.mxu0 0.0
  %1812 = vmatpush1.msra.mxu0 0.0
  %1813 = vmatprep.subr.mxu0 0.0
  %1814 = vmatpush1.msra.mxu0 0.0
  %1815 = vmatprep.subr.mxu0 0.0
  %1816 = vmatpush1.msra.mxu0 0.0
  %1817 = vmatprep.subr.mxu0 0.0
  %1818 = vmatpush1.msra.mxu0 0.0
  %1819 = vmatprep.subr.mxu0 0.0
  %1820 = vmatpush1.msra.mxu0 0.0
  %1821 = vmatprep.subr.mxu0 0.0
  %1822 = vmatpush1.msra.mxu0 0.0
  %1823 = vmatprep.subr.mxu0 0.0
  %1824 = vmatpush1.msra.mxu0 0.0
  %1825 = vmatprep.subr.mxu0 0.0
  %1826 = vmatpush1.msra.mxu0 0.0
  %1827 = vmatprep.subr.mxu0 0.0
  %1828 = vmatpush1.msra.mxu0 0.0
  %1829 = vmatprep.subr.mxu0 0.0
  %1830 = vmatpush1.msra.mxu0 0.0
  %1831 = vmatprep.mubr.f32.mxu0 0.0
  %1832 = vmatmul.mubr.f32.gmra.mrb[0].mxu0 %v1762
  %v1833 = vpop.f32.mrb[0].mxu0
  %v1834 = vadd.f32 0.0, %v1833
  %v1835 = vpop.f32.mrb[0].mxu0
  %v1836 = vadd.f32 0.0, %v1835
  %1837 = vmatprep.mubr.f32.mxu0 0.0
  %1838 = vmatmul.mubr.f32.gmra.mrb[0].mxu0 %v1765
  %v1839 = vpop.f32.mrb[0].mxu0
  %v1840 = vadd.f32 0.0, %v1839
  %v1841 = vpop.f32.mrb[0].mxu0
  %v1842 = vadd.f32 0.0, %v1841
  %1843 = vdwg.mxu0
  %v1844 = vadd.f32 %v1731, %v1834
  %v1845 = vadd.f32 %v1732, %v1836
  %v1846 = vadd.f32 %v1733, %v1840
  %v1847 = vadd.f32 %v1734, %v1842
  %v1848 = vld [vmem:[%s6 + $0x160] sm:$0xff]
  %v1849 = vld [vmem:[%s6 + $0x168] sm:$0xff]
  %v1851 = vsel %vm1455, %v1848, 0
  %v1854 = vsel %vm1455, %v1849, 0
  %1856 = vmatprep.subr.mxu0 %v1396
  %1857 = vmatpush1.msra.mxu0 %v1395
  %1858 = vmatprep.subr.mxu0 %v1398
  %1859 = vmatpush1.msra.mxu0 %v1397
  %1860 = vmatprep.subr.mxu0 %v1400
  %1861 = vmatpush1.msra.mxu0 %v1399
  %1862 = vmatprep.subr.mxu0 %v1402
  %1863 = vmatpush1.msra.mxu0 %v1401
  %1864 = vmatprep.subr.mxu0 0.0
  %1865 = vmatpush1.msra.mxu0 0.0
  %1866 = vmatprep.subr.mxu0 0.0
  %1867 = vmatpush1.msra.mxu0 0.0
  %1868 = vmatprep.subr.mxu0 0.0
  %1869 = vmatpush1.msra.mxu0 0.0
  %1870 = vmatprep.subr.mxu0 0.0
  %1871 = vmatpush1.msra.mxu0 0.0
  %1872 = vmatprep.subr.mxu0 0.0
  %1873 = vmatpush1.msra.mxu0 0.0
  %1874 = vmatprep.subr.mxu0 0.0
  %1875 = vmatpush1.msra.mxu0 0.0
  %1876 = vmatprep.subr.mxu0 0.0
  %1877 = vmatpush1.msra.mxu0 0.0
  %1878 = vmatprep.subr.mxu0 0.0
  %1879 = vmatpush1.msra.mxu0 0.0
  %1880 = vmatprep.subr.mxu0 0.0
  %1881 = vmatpush1.msra.mxu0 0.0
  %1882 = vmatprep.subr.mxu0 0.0
  %1883 = vmatpush1.msra.mxu0 0.0
  %1884 = vmatprep.subr.mxu0 0.0
  %1885 = vmatpush1.msra.mxu0 0.0
  %1886 = vmatprep.subr.mxu0 0.0
  %1887 = vmatpush1.msra.mxu0 0.0
  %1888 = vmatprep.subr.mxu0 0.0
  %1889 = vmatpush1.msra.mxu0 0.0
  %1890 = vmatprep.subr.mxu0 0.0
  %1891 = vmatpush1.msra.mxu0 0.0
  %1892 = vmatprep.subr.mxu0 0.0
  %1893 = vmatpush1.msra.mxu0 0.0
  %1894 = vmatprep.subr.mxu0 0.0
  %1895 = vmatpush1.msra.mxu0 0.0
  %1896 = vmatprep.subr.mxu0 0.0
  %1897 = vmatpush1.msra.mxu0 0.0
  %1898 = vmatprep.subr.mxu0 0.0
  %1899 = vmatpush1.msra.mxu0 0.0
  %1900 = vmatprep.subr.mxu0 0.0
  %1901 = vmatpush1.msra.mxu0 0.0
  %1902 = vmatprep.subr.mxu0 0.0
  %1903 = vmatpush1.msra.mxu0 0.0
  %1904 = vmatprep.subr.mxu0 0.0
  %1905 = vmatpush1.msra.mxu0 0.0
  %1906 = vmatprep.subr.mxu0 0.0
  %1907 = vmatpush1.msra.mxu0 0.0
  %1908 = vmatprep.subr.mxu0 0.0
  %1909 = vmatpush1.msra.mxu0 0.0
  %1910 = vmatprep.subr.mxu0 0.0
  %1911 = vmatpush1.msra.mxu0 0.0
  %1912 = vmatprep.subr.mxu0 0.0
  %1913 = vmatpush1.msra.mxu0 0.0
  %1914 = vmatprep.subr.mxu0 0.0
  %1915 = vmatpush1.msra.mxu0 0.0
  %1916 = vmatprep.subr.mxu0 0.0
  %1917 = vmatpush1.msra.mxu0 0.0
  %1918 = vmatprep.subr.mxu0 0.0
  %1919 = vmatpush1.msra.mxu0 0.0
  %1920 = vmatprep.mubr.f32.mxu0 0.0
  %1921 = vmatmul.mubr.f32.gmra.mrb[0].mxu0 %v1851
  %v1922 = vpop.f32.mrb[0].mxu0
  %v1923 = vadd.f32 0.0, %v1922
  %v1924 = vpop.f32.mrb[0].mxu0
  %v1925 = vadd.f32 0.0, %v1924
  %1926 = vmatprep.mubr.f32.mxu0 0.0
  %1927 = vmatmul.mubr.f32.gmra.mrb[0].mxu0 %v1854
  %v1928 = vpop.f32.mrb[0].mxu0
  %v1929 = vadd.f32 0.0, %v1928
  %v1930 = vpop.f32.mrb[0].mxu0
  %v1931 = vadd.f32 0.0, %v1930
  %1932 = vdwg.mxu0
  %v1933 = vadd.f32 %v1844, %v1923
  %v1934 = vadd.f32 %v1845, %v1925
  %v1935 = vadd.f32 %v1846, %v1929
  %v1936 = vadd.f32 %v1847, %v1931
  %1937 = vrot.lane.b32.xlu0 %v1395, 127
  %v1938 = vpop.permute.xlu0 %1937
  %1939 = vrot.lane.b32.xlu0 %v1397, 127
  %v1940 = vpop.permute.xlu0 %1939
  %1941 = vrot.lane.b32.xlu0 %v1399, 127
  %v1942 = vpop.permute.xlu0 %1941
  %1943 = vrot.lane.b32.xlu0 %v1401, 127
  %v1944 = vpop.permute.xlu0 %1943
  %1945 = vrot.lane.b32.xlu0 %v1396, 127
  %v1946 = vpop.permute.xlu0 %1945
  %1947 = vrot.lane.b32.xlu0 %v1398, 127
  %v1948 = vpop.permute.xlu0 %1947
  %1949 = vrot.lane.b32.xlu0 %v1400, 127
  %v1950 = vpop.permute.xlu0 %1949
  %1951 = vrot.lane.b32.xlu0 %v1402, 127
  %v1952 = vpop.permute.xlu0 %1951
  %v1953 = vsel %vm768, %v1938, %v1946
  %v1954 = vsel %vm768, %v1940, %v1948
  %v1955 = vsel %vm768, %v1942, %v1950
  %v1956 = vsel %vm768, %v1944, %v1952
  %v1957 = vsel %vm768, %v1946, %v1938
  %v1958 = vsel %vm768, %v1948, %v1940
  %v1959 = vsel %vm768, %v1950, %v1942
  %v1960 = vsel %vm768, %v1952, %v1944
  %v1961 = vld [vmem:[%s6 + $0x170] sm:$0xff]
  %v1962 = vld [vmem:[%s6 + $0x178] sm:$0xff]
  %v1964 = vsel %vm1455, %v1961, 0
  %v1967 = vsel %vm1455, %v1962, 0
  %1969 = vmatprep.subr.mxu0 %v1957
  %1970 = vmatpush1.msra.mxu0 %v1953
  %1971 = vmatprep.subr.mxu0 %v1958
  %1972 = vmatpush1.msra.mxu0 %v1954
  %1973 = vmatprep.subr.mxu0 %v1959
  %1974 = vmatpush1.msra.mxu0 %v1955
  %1975 = vmatprep.subr.mxu0 %v1960
  %1976 = vmatpush1.msra.mxu0 %v1956
  %1977 = vmatprep.subr.mxu0 0.0
  %1978 = vmatpush1.msra.mxu0 0.0
  %1979 = vmatprep.subr.mxu0 0.0
  %1980 = vmatpush1.msra.mxu0 0.0
  %1981 = vmatprep.subr.mxu0 0.0
  %1982 = vmatpush1.msra.mxu0 0.0
  %1983 = vmatprep.subr.mxu0 0.0
  %1984 = vmatpush1.msra.mxu0 0.0
  %1985 = vmatprep.subr.mxu0 0.0
  %1986 = vmatpush1.msra.mxu0 0.0
  %1987 = vmatprep.subr.mxu0 0.0
  %1988 = vmatpush1.msra.mxu0 0.0
  %1989 = vmatprep.subr.mxu0 0.0
  %1990 = vmatpush1.msra.mxu0 0.0
  %1991 = vmatprep.subr.mxu0 0.0
  %1992 = vmatpush1.msra.mxu0 0.0
  %1993 = vmatprep.subr.mxu0 0.0
  %1994 = vmatpush1.msra.mxu0 0.0
  %1995 = vmatprep.subr.mxu0 0.0
  %1996 = vmatpush1.msra.mxu0 0.0
  %1997 = vmatprep.subr.mxu0 0.0
  %1998 = vmatpush1.msra.mxu0 0.0
  %1999 = vmatprep.subr.mxu0 0.0
  %2000 = vmatpush1.msra.mxu0 0.0
  %2001 = vmatprep.subr.mxu0 0.0
  %2002 = vmatpush1.msra.mxu0 0.0
  %2003 = vmatprep.subr.mxu0 0.0
  %2004 = vmatpush1.msra.mxu0 0.0
  %2005 = vmatprep.subr.mxu0 0.0
  %2006 = vmatpush1.msra.mxu0 0.0
  %2007 = vmatprep.subr.mxu0 0.0
  %2008 = vmatpush1.msra.mxu0 0.0
  %2009 = vmatprep.subr.mxu0 0.0
  %2010 = vmatpush1.msra.mxu0 0.0
  %2011 = vmatprep.subr.mxu0 0.0
  %2012 = vmatpush1.msra.mxu0 0.0
  %2013 = vmatprep.subr.mxu0 0.0
  %2014 = vmatpush1.msra.mxu0 0.0
  %2015 = vmatprep.subr.mxu0 0.0
  %2016 = vmatpush1.msra.mxu0 0.0
  %2017 = vmatprep.subr.mxu0 0.0
  %2018 = vmatpush1.msra.mxu0 0.0
  %2019 = vmatprep.subr.mxu0 0.0
  %2020 = vmatpush1.msra.mxu0 0.0
  %2021 = vmatprep.subr.mxu0 0.0
  %2022 = vmatpush1.msra.mxu0 0.0
  %2023 = vmatprep.subr.mxu0 0.0
  %2024 = vmatpush1.msra.mxu0 0.0
  %2025 = vmatprep.subr.mxu0 0.0
  %2026 = vmatpush1.msra.mxu0 0.0
  %2027 = vmatprep.subr.mxu0 0.0
  %2028 = vmatpush1.msra.mxu0 0.0
  %2029 = vmatprep.subr.mxu0 0.0
  %2030 = vmatpush1.msra.mxu0 0.0
  %2031 = vmatprep.subr.mxu0 0.0
  %2032 = vmatpush1.msra.mxu0 0.0
  %2033 = vmatprep.mubr.f32.mxu0 0.0
  %2034 = vmatmul.mubr.f32.gmra.mrb[0].mxu0 %v1964
  %v2035 = vpop.f32.mrb[0].mxu0
  %v2036 = vadd.f32 0.0, %v2035
  %v2037 = vpop.f32.mrb[0].mxu0
  %v2038 = vadd.f32 0.0, %v2037
  %2039 = vmatprep.mubr.f32.mxu0 0.0
  %2040 = vmatmul.mubr.f32.gmra.mrb[0].mxu0 %v1967
  %v2041 = vpop.f32.mrb[0].mxu0
  %v2042 = vadd.f32 0.0, %v2041
  %v2043 = vpop.f32.mrb[0].mxu0
  %v2044 = vadd.f32 0.0, %v2043
  %2045 = vdwg.mxu0
  %v2046 = vadd.f32 %v1933, %v2036
  %v2047 = vadd.f32 %v1934, %v2038
  %v2048 = vadd.f32 %v1935, %v2042
  %v2049 = vadd.f32 %v1936, %v2044
  %2050 = vrot.lane.b32.xlu0 %v1395, 119
  %v2051 = vpop.permute.xlu0 %2050
  %2052 = vrot.lane.b32.xlu0 %v1397, 119
  %v2053 = vpop.permute.xlu0 %2052
  %2054 = vrot.lane.b32.xlu0 %v1399, 119
  %v2055 = vpop.permute.xlu0 %2054
  %2056 = vrot.lane.b32.xlu0 %v1401, 119
  %v2057 = vpop.permute.xlu0 %2056
  %2058 = vrot.lane.b32.xlu0 %v1396, 119
  %v2059 = vpop.permute.xlu0 %2058
  %2060 = vrot.lane.b32.xlu0 %v1398, 119
  %v2061 = vpop.permute.xlu0 %2060
  %2062 = vrot.lane.b32.xlu0 %v1400, 119
  %v2063 = vpop.permute.xlu0 %2062
  %2064 = vrot.lane.b32.xlu0 %v1402, 119
  %v2065 = vpop.permute.xlu0 %2064
  %v2066 = vsel %vm918, %v2051, %v2059
  %v2067 = vsel %vm918, %v2053, %v2061
  %v2068 = vsel %vm918, %v2055, %v2063
  %v2069 = vsel %vm918, %v2057, %v2065
  %v2070 = vsel %vm918, %v2059, %v2051
  %v2071 = vsel %vm918, %v2061, %v2053
  %v2072 = vsel %vm918, %v2063, %v2055
  %v2073 = vsel %vm918, %v2065, %v2057
  %v2074 = vld [vmem:[%s6 + $0x180] sm:$0xff]
  %v2075 = vld [vmem:[%s6 + $0x188] sm:$0xff]
  %v2077 = vsel %vm1455, %v2074, 0
  %v2080 = vsel %vm1455, %v2075, 0
  %2082 = vmatprep.subr.mxu0 %v2070
  %2083 = vmatpush1.msra.mxu0 %v2066
  %2084 = vmatprep.subr.mxu0 %v2071
  %2085 = vmatpush1.msra.mxu0 %v2067
  %2086 = vmatprep.subr.mxu0 %v2072
  %2087 = vmatpush1.msra.mxu0 %v2068
  %2088 = vmatprep.subr.mxu0 %v2073
  %2089 = vmatpush1.msra.mxu0 %v2069
  %2090 = vmatprep.subr.mxu0 0.0
  %2091 = vmatpush1.msra.mxu0 0.0
  %2092 = vmatprep.subr.mxu0 0.0
  %2093 = vmatpush1.msra.mxu0 0.0
  %2094 = vmatprep.subr.mxu0 0.0
  %2095 = vmatpush1.msra.mxu0 0.0
  %2096 = vmatprep.subr.mxu0 0.0
  %2097 = vmatpush1.msra.mxu0 0.0
  %2098 = vmatprep.subr.mxu0 0.0
  %2099 = vmatpush1.msra.mxu0 0.0
  %2100 = vmatprep.subr.mxu0 0.0
  %2101 = vmatpush1.msra.mxu0 0.0
  %2102 = vmatprep.subr.mxu0 0.0
  %2103 = vmatpush1.msra.mxu0 0.0
  %2104 = vmatprep.subr.mxu0 0.0
  %2105 = vmatpush1.msra.mxu0 0.0
  %2106 = vmatprep.subr.mxu0 0.0
  %2107 = vmatpush1.msra.mxu0 0.0
  %2108 = vmatprep.subr.mxu0 0.0
  %2109 = vmatpush1.msra.mxu0 0.0
  %2110 = vmatprep.subr.mxu0 0.0
  %2111 = vmatpush1.msra.mxu0 0.0
  %2112 = vmatprep.subr.mxu0 0.0
  %2113 = vmatpush1.msra.mxu0 0.0
  %2114 = vmatprep.subr.mxu0 0.0
  %2115 = vmatpush1.msra.mxu0 0.0
  %2116 = vmatprep.subr.mxu0 0.0
  %2117 = vmatpush1.msra.mxu0 0.0
  %2118 = vmatprep.subr.mxu0 0.0
  %2119 = vmatpush1.msra.mxu0 0.0
  %2120 = vmatprep.subr.mxu0 0.0
  %2121 = vmatpush1.msra.mxu0 0.0
  %2122 = vmatprep.subr.mxu0 0.0
  %2123 = vmatpush1.msra.mxu0 0.0
  %2124 = vmatprep.subr.mxu0 0.0
  %2125 = vmatpush1.msra.mxu0 0.0
  %2126 = vmatprep.subr.mxu0 0.0
  %2127 = vmatpush1.msra.mxu0 0.0
  %2128 = vmatprep.subr.mxu0 0.0
  %2129 = vmatpush1.msra.mxu0 0.0
  %2130 = vmatprep.subr.mxu0 0.0
  %2131 = vmatpush1.msra.mxu0 0.0
  %2132 = vmatprep.subr.mxu0 0.0
  %2133 = vmatpush1.msra.mxu0 0.0
  %2134 = vmatprep.subr.mxu0 0.0
  %2135 = vmatpush1.msra.mxu0 0.0
  %2136 = vmatprep.subr.mxu0 0.0
  %2137 = vmatpush1.msra.mxu0 0.0
  %2138 = vmatprep.subr.mxu0 0.0
  %2139 = vmatpush1.msra.mxu0 0.0
  %2140 = vmatprep.subr.mxu0 0.0
  %2141 = vmatpush1.msra.mxu0 0.0
  %2142 = vmatprep.subr.mxu0 0.0
  %2143 = vmatpush1.msra.mxu0 0.0
  %2144 = vmatprep.subr.mxu0 0.0
  %2145 = vmatpush1.msra.mxu0 0.0
  %2146 = vmatprep.mubr.f32.mxu0 0.0
  %2147 = vmatmul.mubr.f32.gmra.mrb[0].mxu0 %v2077
  %v2148 = vpop.f32.mrb[0].mxu0
  %v2149 = vadd.f32 0.0, %v2148
  %v2150 = vpop.f32.mrb[0].mxu0
  %v2151 = vadd.f32 0.0, %v2150
  %2152 = vmatprep.mubr.f32.mxu0 0.0
  %2153 = vmatmul.mubr.f32.gmra.mrb[0].mxu0 %v2080
  %v2154 = vpop.f32.mrb[0].mxu0
  %v2155 = vadd.f32 0.0, %v2154
  %v2156 = vpop.f32.mrb[0].mxu0
  %v2157 = vadd.f32 0.0, %v2156
  %2158 = vdwg.mxu0
  %v2159 = vadd.f32 %v2046, %v2149
  %v2160 = vadd.f32 %v2047, %v2151
  %v2161 = vadd.f32 %v2048, %v2155
  %v2162 = vadd.f32 %v2049, %v2157
  %2163 = vrot.lane.b32.xlu0 %v1395, 118
  %v2164 = vpop.permute.xlu0 %2163
  %2165 = vrot.lane.b32.xlu0 %v1397, 118
  %v2166 = vpop.permute.xlu0 %2165
  %2167 = vrot.lane.b32.xlu0 %v1399, 118
  %v2168 = vpop.permute.xlu0 %2167
  %2169 = vrot.lane.b32.xlu0 %v1401, 118
  %v2170 = vpop.permute.xlu0 %2169
  %2171 = vrot.lane.b32.xlu0 %v1396, 118
  %v2172 = vpop.permute.xlu0 %2171
  %2173 = vrot.lane.b32.xlu0 %v1398, 118
  %v2174 = vpop.permute.xlu0 %2173
  %2175 = vrot.lane.b32.xlu0 %v1400, 118
  %v2176 = vpop.permute.xlu0 %2175
  %2177 = vrot.lane.b32.xlu0 %v1402, 118
  %v2178 = vpop.permute.xlu0 %2177
  %v2179 = vsel %vm1068, %v2164, %v2172
  %v2180 = vsel %vm1068, %v2166, %v2174
  %v2181 = vsel %vm1068, %v2168, %v2176
  %v2182 = vsel %vm1068, %v2170, %v2178
  %v2183 = vsel %vm1068, %v2172, %v2164
  %v2184 = vsel %vm1068, %v2174, %v2166
  %v2185 = vsel %vm1068, %v2176, %v2168
  %v2186 = vsel %vm1068, %v2178, %v2170
  %v2187 = vld [vmem:[%s6 + $0x190] sm:$0xff]
  %v2188 = vld [vmem:[%s6 + $0x198] sm:$0xff]
  %v2190 = vsel %vm1455, %v2187, 0
  %v2193 = vsel %vm1455, %v2188, 0
  %2195 = vmatprep.subr.mxu0 %v2183
  %2196 = vmatpush1.msra.mxu0 %v2179
  %2197 = vmatprep.subr.mxu0 %v2184
  %2198 = vmatpush1.msra.mxu0 %v2180
  %2199 = vmatprep.subr.mxu0 %v2185
  %2200 = vmatpush1.msra.mxu0 %v2181
  %2201 = vmatprep.subr.mxu0 %v2186
  %2202 = vmatpush1.msra.mxu0 %v2182
  %2203 = vmatprep.subr.mxu0 0.0
  %2204 = vmatpush1.msra.mxu0 0.0
  %2205 = vmatprep.subr.mxu0 0.0
  %2206 = vmatpush1.msra.mxu0 0.0
  %2207 = vmatprep.subr.mxu0 0.0
  %2208 = vmatpush1.msra.mxu0 0.0
  %2209 = vmatprep.subr.mxu0 0.0
  %2210 = vmatpush1.msra.mxu0 0.0
  %2211 = vmatprep.subr.mxu0 0.0
  %2212 = vmatpush1.msra.mxu0 0.0
  %2213 = vmatprep.subr.mxu0 0.0
  %2214 = vmatpush1.msra.mxu0 0.0
  %2215 = vmatprep.subr.mxu0 0.0
  %2216 = vmatpush1.msra.mxu0 0.0
  %2217 = vmatprep.subr.mxu0 0.0
  %2218 = vmatpush1.msra.mxu0 0.0
  %2219 = vmatprep.subr.mxu0 0.0
  %2220 = vmatpush1.msra.mxu0 0.0
  %2221 = vmatprep.subr.mxu0 0.0
  %2222 = vmatpush1.msra.mxu0 0.0
  %2223 = vmatprep.subr.mxu0 0.0
  %2224 = vmatpush1.msra.mxu0 0.0
  %2225 = vmatprep.subr.mxu0 0.0
  %2226 = vmatpush1.msra.mxu0 0.0
  %2227 = vmatprep.subr.mxu0 0.0
  %2228 = vmatpush1.msra.mxu0 0.0
  %2229 = vmatprep.subr.mxu0 0.0
  %2230 = vmatpush1.msra.mxu0 0.0
  %2231 = vmatprep.subr.mxu0 0.0
  %2232 = vmatpush1.msra.mxu0 0.0
  %2233 = vmatprep.subr.mxu0 0.0
  %2234 = vmatpush1.msra.mxu0 0.0
  %2235 = vmatprep.subr.mxu0 0.0
  %2236 = vmatpush1.msra.mxu0 0.0
  %2237 = vmatprep.subr.mxu0 0.0
  %2238 = vmatpush1.msra.mxu0 0.0
  %2239 = vmatprep.subr.mxu0 0.0
  %2240 = vmatpush1.msra.mxu0 0.0
  %2241 = vmatprep.subr.mxu0 0.0
  %2242 = vmatpush1.msra.mxu0 0.0
  %2243 = vmatprep.subr.mxu0 0.0
  %2244 = vmatpush1.msra.mxu0 0.0
  %2245 = vmatprep.subr.mxu0 0.0
  %2246 = vmatpush1.msra.mxu0 0.0
  %2247 = vmatprep.subr.mxu0 0.0
  %2248 = vmatpush1.msra.mxu0 0.0
  %2249 = vmatprep.subr.mxu0 0.0
  %2250 = vmatpush1.msra.mxu0 0.0
  %2251 = vmatprep.subr.mxu0 0.0
  %2252 = vmatpush1.msra.mxu0 0.0
  %2253 = vmatprep.subr.mxu0 0.0
  %2254 = vmatpush1.msra.mxu0 0.0
  %2255 = vmatprep.subr.mxu0 0.0
  %2256 = vmatpush1.msra.mxu0 0.0
  %2257 = vmatprep.subr.mxu0 0.0
  %2258 = vmatpush1.msra.mxu0 0.0
  %2259 = vmatprep.mubr.f32.mxu0 0.0
  %2260 = vmatmul.mubr.f32.gmra.mrb[0].mxu0 %v2190
  %v2261 = vpop.f32.mrb[0].mxu0
  %v2262 = vadd.f32 0.0, %v2261
  %v2263 = vpop.f32.mrb[0].mxu0
  %v2264 = vadd.f32 0.0, %v2263
  %2265 = vmatprep.mubr.f32.mxu0 0.0
  %2266 = vmatmul.mubr.f32.gmra.mrb[0].mxu0 %v2193
  %v2267 = vpop.f32.mrb[0].mxu0
  %v2268 = vadd.f32 0.0, %v2267
  %v2269 = vpop.f32.mrb[0].mxu0
  %v2270 = vadd.f32 0.0, %v2269
  %2271 = vdwg.mxu0
  %v2272 = vadd.f32 %v2159, %v2262
  %v2273 = vadd.f32 %v2160, %v2264
  %v2274 = vadd.f32 %v2161, %v2268
  %v2275 = vadd.f32 %v2162, %v2270
  %2276 = vrot.lane.b32.xlu0 %v1395, 117
  %v2277 = vpop.permute.xlu0 %2276
  %2278 = vrot.lane.b32.xlu0 %v1397, 117
  %v2279 = vpop.permute.xlu0 %2278
  %2280 = vrot.lane.b32.xlu0 %v1399, 117
  %v2281 = vpop.permute.xlu0 %2280
  %2282 = vrot.lane.b32.xlu0 %v1401, 117
  %v2283 = vpop.permute.xlu0 %2282
  %2284 = vrot.lane.b32.xlu0 %v1396, 117
  %v2285 = vpop.permute.xlu0 %2284
  %2286 = vrot.lane.b32.xlu0 %v1398, 117
  %v2287 = vpop.permute.xlu0 %2286
  %2288 = vrot.lane.b32.xlu0 %v1400, 117
  %v2289 = vpop.permute.xlu0 %2288
  %2290 = vrot.lane.b32.xlu0 %v1402, 117
  %v2291 = vpop.permute.xlu0 %2290
  %v2292 = vsel %vm1218, %v2277, %v2285
  %v2293 = vsel %vm1218, %v2279, %v2287
  %v2294 = vsel %vm1218, %v2281, %v2289
  %v2295 = vsel %vm1218, %v2283, %v2291
  %v2296 = vsel %vm1218, %v2285, %v2277
  %v2297 = vsel %vm1218, %v2287, %v2279
  %v2298 = vsel %vm1218, %v2289, %v2281
  %v2299 = vsel %vm1218, %v2291, %v2283
  %v2300 = vld [vmem:[%s6 + $0x1a0] sm:$0xff]
  %v2301 = vld [vmem:[%s6 + $0x1a8] sm:$0xff]
  %v2303 = vsel %vm1455, %v2300, 0
  %v2306 = vsel %vm1455, %v2301, 0
  %2308 = vmatprep.subr.mxu0 %v2296
  %2309 = vmatpush1.msra.mxu0 %v2292
  %2310 = vmatprep.subr.mxu0 %v2297
  %2311 = vmatpush1.msra.mxu0 %v2293
  %2312 = vmatprep.subr.mxu0 %v2298
  %2313 = vmatpush1.msra.mxu0 %v2294
  %2314 = vmatprep.subr.mxu0 %v2299
  %2315 = vmatpush1.msra.mxu0 %v2295
  %2316 = vmatprep.subr.mxu0 0.0
  %2317 = vmatpush1.msra.mxu0 0.0
  %2318 = vmatprep.subr.mxu0 0.0
  %2319 = vmatpush1.msra.mxu0 0.0
  %2320 = vmatprep.subr.mxu0 0.0
  %2321 = vmatpush1.msra.mxu0 0.0
  %2322 = vmatprep.subr.mxu0 0.0
  %2323 = vmatpush1.msra.mxu0 0.0
  %2324 = vmatprep.subr.mxu0 0.0
  %2325 = vmatpush1.msra.mxu0 0.0
  %2326 = vmatprep.subr.mxu0 0.0
  %2327 = vmatpush1.msra.mxu0 0.0
  %2328 = vmatprep.subr.mxu0 0.0
  %2329 = vmatpush1.msra.mxu0 0.0
  %2330 = vmatprep.subr.mxu0 0.0
  %2331 = vmatpush1.msra.mxu0 0.0
  %2332 = vmatprep.subr.mxu0 0.0
  %2333 = vmatpush1.msra.mxu0 0.0
  %2334 = vmatprep.subr.mxu0 0.0
  %2335 = vmatpush1.msra.mxu0 0.0
  %2336 = vmatprep.subr.mxu0 0.0
  %2337 = vmatpush1.msra.mxu0 0.0
  %2338 = vmatprep.subr.mxu0 0.0
  %2339 = vmatpush1.msra.mxu0 0.0
  %2340 = vmatprep.subr.mxu0 0.0
  %2341 = vmatpush1.msra.mxu0 0.0
  %2342 = vmatprep.subr.mxu0 0.0
  %2343 = vmatpush1.msra.mxu0 0.0
  %2344 = vmatprep.subr.mxu0 0.0
  %2345 = vmatpush1.msra.mxu0 0.0
  %2346 = vmatprep.subr.mxu0 0.0
  %2347 = vmatpush1.msra.mxu0 0.0
  %2348 = vmatprep.subr.mxu0 0.0
  %2349 = vmatpush1.msra.mxu0 0.0
  %2350 = vmatprep.subr.mxu0 0.0
  %2351 = vmatpush1.msra.mxu0 0.0
  %2352 = vmatprep.subr.mxu0 0.0
  %2353 = vmatpush1.msra.mxu0 0.0
  %2354 = vmatprep.subr.mxu0 0.0
  %2355 = vmatpush1.msra.mxu0 0.0
  %2356 = vmatprep.subr.mxu0 0.0
  %2357 = vmatpush1.msra.mxu0 0.0
  %2358 = vmatprep.subr.mxu0 0.0
  %2359 = vmatpush1.msra.mxu0 0.0
  %2360 = vmatprep.subr.mxu0 0.0
  %2361 = vmatpush1.msra.mxu0 0.0
  %2362 = vmatprep.subr.mxu0 0.0
  %2363 = vmatpush1.msra.mxu0 0.0
  %2364 = vmatprep.subr.mxu0 0.0
  %2365 = vmatpush1.msra.mxu0 0.0
  %2366 = vmatprep.subr.mxu0 0.0
  %2367 = vmatpush1.msra.mxu0 0.0
  %2368 = vmatprep.subr.mxu0 0.0
  %2369 = vmatpush1.msra.mxu0 0.0
  %2370 = vmatprep.subr.mxu0 0.0
  %2371 = vmatpush1.msra.mxu0 0.0
  %2372 = vmatprep.mubr.f32.mxu0 0.0
  %2373 = vmatmul.mubr.f32.gmra.mrb[0].mxu0 %v2303
  %v2374 = vpop.f32.mrb[0].mxu0
  %v2375 = vadd.f32 0.0, %v2374
  %v2376 = vpop.f32.mrb[0].mxu0
  %v2377 = vadd.f32 0.0, %v2376
  %2378 = vmatprep.mubr.f32.mxu0 0.0
  %2379 = vmatmul.mubr.f32.gmra.mrb[0].mxu0 %v2306
  %v2380 = vpop.f32.mrb[0].mxu0
  %v2381 = vadd.f32 0.0, %v2380
  %v2382 = vpop.f32.mrb[0].mxu0
  %v2383 = vadd.f32 0.0, %v2382
  %2384 = vdwg.mxu0
  %v2385 = vadd.f32 %v2272, %v2375
  %v2386 = vadd.f32 %v2273, %v2377
  %v2387 = vadd.f32 %v2274, %v2381
  %v2388 = vadd.f32 %v2275, %v2383
  %v2389 = vld [vmem:[%s6 + $0x220] sm:$0xff]
  %v2390 = vld [vmem:[%s6 + $0x228] sm:$0xff]
  %2392 = vset.pattern.permute.xlu0 0
  %2393 = vperm.xlu0 %2392, %v2389
  %v2394 = vpop.permute.xlu0 %2393
  %2397 = vset.pattern.permute.xlu0 0
  %2398 = vperm.xlu0 %2397, %v2390
  %v2399 = vpop.permute.xlu0 %2398
  %v2401 = vadd.f32 %v2385, %v2394
  %v2402 = vadd.f32 %v2386, %v2394
  %v2403 = vadd.f32 %v2387, %v2399
  %v2404 = vadd.f32 %v2388, %v2399
  %v2405 = vmax.f32 %v2401, 0.0
  %v2406 = vmax.f32 %v2402, 0.0
  %v2407 = vmax.f32 %v2403, 0.0
  %v2408 = vmax.f32 %v2404, 0.0
  %v2409 = vmul.f32 %v2405, %v1388
  %v2410 = vmul.f32 %v2406, %v1392
  %v2411 = vmul.f32 %v2407, %v1388
  %v2412 = vmul.f32 %v2408, %v1392
  %2413 = vrot.lane.b32.xlu0 %v2409, 11
  %v2414 = vpop.permute.xlu0 %2413
  %2415 = vrot.lane.b32.xlu0 %v2411, 11
  %v2416 = vpop.permute.xlu0 %2415
  %2417 = vrot.lane.b32.xlu0 %v2410, 11
  %v2418 = vpop.permute.xlu0 %2417
  %2419 = vrot.lane.b32.xlu0 %v2412, 11
  %v2420 = vpop.permute.xlu0 %2419
  %v2421 = vsel %vm70, %v2414, %v2418
  %v2422 = vsel %vm70, %v2416, %v2420
  %v2423 = vsel %vm70, %v2418, %v2414
  %v2424 = vsel %vm70, %v2420, %v2416
  %v2425 = vld [vmem:[%s6 + $0x1b0] sm:$0xff]
  %2426 = vrot.lane.b32.xlu0 %v2409, 10
  %v2427 = vpop.permute.xlu0 %2426
  %2428 = vrot.lane.b32.xlu0 %v2411, 10
  %v2429 = vpop.permute.xlu0 %2428
  %2430 = vrot.lane.b32.xlu0 %v2410, 10
  %v2431 = vpop.permute.xlu0 %2430
  %2432 = vrot.lane.b32.xlu0 %v2412, 10
  %v2433 = vpop.permute.xlu0 %2432
  %v2434 = vsel %vm111, %v2427, %v2431
  %v2435 = vsel %vm111, %v2429, %v2433
  %v2436 = vsel %vm111, %v2431, %v2427
  %v2437 = vsel %vm111, %v2433, %v2429
  %v2438 = vld [vmem:[%s6 + $0x1b8] sm:$0xff]
  %vm2439 = vcmask 130048
  %v2441 = vsel %vm2439, %v2438, 0
  %2443 = vmatprep.subr.mxu0 %v2434
  %2444 = vmatpush1.msra.mxu0 %v2436
  %2445 = vmatprep.subr.mxu0 %v2435
  %2446 = vmatpush1.msra.mxu0 %v2437
  %2447 = vmatprep.subr.mxu0 0.0
  %2448 = vmatpush1.msra.mxu0 0.0
  %2449 = vmatprep.subr.mxu0 0.0
  %2450 = vmatpush1.msra.mxu0 0.0
  %2451 = vmatprep.subr.mxu0 0.0
  %2452 = vmatpush1.msra.mxu0 0.0
  %2453 = vmatprep.subr.mxu0 0.0
  %2454 = vmatpush1.msra.mxu0 0.0
  %2455 = vmatprep.subr.mxu0 0.0
  %2456 = vmatpush1.msra.mxu0 0.0
  %2457 = vmatprep.subr.mxu0 0.0
  %2458 = vmatpush1.msra.mxu0 0.0
  %2459 = vmatprep.subr.mxu0 0.0
  %2460 = vmatpush1.msra.mxu0 0.0
  %2461 = vmatprep.subr.mxu0 0.0
  %2462 = vmatpush1.msra.mxu0 0.0
  %2463 = vmatprep.subr.mxu0 0.0
  %2464 = vmatpush1.msra.mxu0 0.0
  %2465 = vmatprep.subr.mxu0 0.0
  %2466 = vmatpush1.msra.mxu0 0.0
  %2467 = vmatprep.subr.mxu0 0.0
  %2468 = vmatpush1.msra.mxu0 0.0
  %2469 = vmatprep.subr.mxu0 0.0
  %2470 = vmatpush1.msra.mxu0 0.0
  %2471 = vmatprep.subr.mxu0 0.0
  %2472 = vmatpush1.msra.mxu0 0.0
  %2473 = vmatprep.subr.mxu0 0.0
  %2474 = vmatpush1.msra.mxu0 0.0
  %2475 = vmatprep.subr.mxu0 0.0
  %2476 = vmatpush1.msra.mxu0 0.0
  %2477 = vmatprep.subr.mxu0 0.0
  %2478 = vmatpush1.msra.mxu0 0.0
  %2479 = vmatprep.subr.mxu0 0.0
  %2480 = vmatpush1.msra.mxu0 0.0
  %2481 = vmatprep.subr.mxu0 0.0
  %2482 = vmatpush1.msra.mxu0 0.0
  %2483 = vmatprep.subr.mxu0 0.0
  %2484 = vmatpush1.msra.mxu0 0.0
  %2485 = vmatprep.subr.mxu0 0.0
  %2486 = vmatpush1.msra.mxu0 0.0
  %2487 = vmatprep.subr.mxu0 0.0
  %2488 = vmatpush1.msra.mxu0 0.0
  %2489 = vmatprep.subr.mxu0 0.0
  %2490 = vmatpush1.msra.mxu0 0.0
  %2491 = vmatprep.subr.mxu0 0.0
  %2492 = vmatpush1.msra.mxu0 0.0
  %2493 = vmatprep.subr.mxu0 0.0
  %2494 = vmatpush1.msra.mxu0 0.0
  %2495 = vmatprep.subr.mxu0 0.0
  %2496 = vmatpush1.msra.mxu0 0.0
  %2497 = vmatprep.subr.mxu0 0.0
  %2498 = vmatpush1.msra.mxu0 0.0
  %2499 = vmatprep.subr.mxu0 0.0
  %2500 = vmatpush1.msra.mxu0 0.0
  %2501 = vmatprep.subr.mxu0 0.0
  %2502 = vmatpush1.msra.mxu0 0.0
  %2503 = vmatprep.subr.mxu0 0.0
  %2504 = vmatpush1.msra.mxu0 0.0
  %2505 = vmatprep.subr.mxu0 0.0
  %2506 = vmatpush1.msra.mxu0 0.0
  %2507 = vmatprep.mubr.f32.mxu0 0.0
  %2508 = vmatmul.mubr.f32.gmra.mrb[0].mxu0 %v2441
  %v2509 = vpop.f32.mrb[0].mxu0
  %v2510 = vadd.f32 0.0, %v2509
  %v2511 = vpop.f32.mrb[0].mxu0
  %v2512 = vadd.f32 0.0, %v2511
  %2513 = vdwg.mxu0
  %v2515 = vsel %vm2439, %v2425, 0
  %2517 = vmatprep.subr.mxu0 %v2421
  %2518 = vmatpush1.msra.mxu0 %v2423
  %2519 = vmatprep.subr.mxu0 %v2422
  %2520 = vmatpush1.msra.mxu0 %v2424
  %2521 = vmatprep.subr.mxu0 0.0
  %2522 = vmatpush1.msra.mxu0 0.0
  %2523 = vmatprep.subr.mxu0 0.0
  %2524 = vmatpush1.msra.mxu0 0.0
  %2525 = vmatprep.subr.mxu0 0.0
  %2526 = vmatpush1.msra.mxu0 0.0
  %2527 = vmatprep.subr.mxu0 0.0
  %2528 = vmatpush1.msra.mxu0 0.0
  %2529 = vmatprep.subr.mxu0 0.0
  %2530 = vmatpush1.msra.mxu0 0.0
  %2531 = vmatprep.subr.mxu0 0.0
  %2532 = vmatpush1.msra.mxu0 0.0
  %2533 = vmatprep.subr.mxu0 0.0
  %2534 = vmatpush1.msra.mxu0 0.0
  %2535 = vmatprep.subr.mxu0 0.0
  %2536 = vmatpush1.msra.mxu0 0.0
  %2537 = vmatprep.subr.mxu0 0.0
  %2538 = vmatpush1.msra.mxu0 0.0
  %2539 = vmatprep.subr.mxu0 0.0
  %2540 = vmatpush1.msra.mxu0 0.0
  %2541 = vmatprep.subr.mxu0 0.0
  %2542 = vmatpush1.msra.mxu0 0.0
  %2543 = vmatprep.subr.mxu0 0.0
  %2544 = vmatpush1.msra.mxu0 0.0
  %2545 = vmatprep.subr.mxu0 0.0
  %2546 = vmatpush1.msra.mxu0 0.0
  %2547 = vmatprep.subr.mxu0 0.0
  %2548 = vmatpush1.msra.mxu0 0.0
  %2549 = vmatprep.subr.mxu0 0.0
  %2550 = vmatpush1.msra.mxu0 0.0
  %2551 = vmatprep.subr.mxu0 0.0
  %2552 = vmatpush1.msra.mxu0 0.0
  %2553 = vmatprep.subr.mxu0 0.0
  %2554 = vmatpush1.msra.mxu0 0.0
  %2555 = vmatprep.subr.mxu0 0.0
  %2556 = vmatpush1.msra.mxu0 0.0
  %2557 = vmatprep.subr.mxu0 0.0
  %2558 = vmatpush1.msra.mxu0 0.0
  %2559 = vmatprep.subr.mxu0 0.0
  %2560 = vmatpush1.msra.mxu0 0.0
  %2561 = vmatprep.subr.mxu0 0.0
  %2562 = vmatpush1.msra.mxu0 0.0
  %2563 = vmatprep.subr.mxu0 0.0
  %2564 = vmatpush1.msra.mxu0 0.0
  %2565 = vmatprep.subr.mxu0 0.0
  %2566 = vmatpush1.msra.mxu0 0.0
  %2567 = vmatprep.subr.mxu0 0.0
  %2568 = vmatpush1.msra.mxu0 0.0
  %2569 = vmatprep.subr.mxu0 0.0
  %2570 = vmatpush1.msra.mxu0 0.0
  %2571 = vmatprep.subr.mxu0 0.0
  %2572 = vmatpush1.msra.mxu0 0.0
  %2573 = vmatprep.subr.mxu0 0.0
  %2574 = vmatpush1.msra.mxu0 0.0
  %2575 = vmatprep.subr.mxu0 0.0
  %2576 = vmatpush1.msra.mxu0 0.0
  %2577 = vmatprep.subr.mxu0 0.0
  %2578 = vmatpush1.msra.mxu0 0.0
  %2579 = vmatprep.subr.mxu0 0.0
  %2580 = vmatpush1.msra.mxu0 0.0
  %2581 = vmatprep.mubr.f32.mxu0 0.0
  %2582 = vmatmul.mubr.f32.gmra.mrb[0].mxu0 %v2515
  %v2583 = vpop.f32.mrb[0].mxu0
  %v2584 = vadd.f32 %v2510, %v2583
  %v2585 = vpop.f32.mrb[0].mxu0
  %v2586 = vadd.f32 %v2512, %v2585
  %2587 = vdwg.mxu0
  %2588 = vrot.lane.b32.xlu0 %v2409, 9
  %v2589 = vpop.permute.xlu0 %2588
  %2590 = vrot.lane.b32.xlu0 %v2411, 9
  %v2591 = vpop.permute.xlu0 %2590
  %2592 = vrot.lane.b32.xlu0 %v2410, 9
  %v2593 = vpop.permute.xlu0 %2592
  %2594 = vrot.lane.b32.xlu0 %v2412, 9
  %v2595 = vpop.permute.xlu0 %2594
  %v2596 = vsel %vm355, %v2589, %v2593
  %v2597 = vsel %vm355, %v2591, %v2595
  %v2598 = vsel %vm355, %v2593, %v2589
  %v2599 = vsel %vm355, %v2595, %v2591
  %v2600 = vld [vmem:[%s6 + $0x1c0] sm:$0xff]
  %v2602 = vsel %vm2439, %v2600, 0
  %2604 = vmatprep.subr.mxu0 %v2596
  %2605 = vmatpush1.msra.mxu0 %v2598
  %2606 = vmatprep.subr.mxu0 %v2597
  %2607 = vmatpush1.msra.mxu0 %v2599
  %2608 = vmatprep.subr.mxu0 0.0
  %2609 = vmatpush1.msra.mxu0 0.0
  %2610 = vmatprep.subr.mxu0 0.0
  %2611 = vmatpush1.msra.mxu0 0.0
  %2612 = vmatprep.subr.mxu0 0.0
  %2613 = vmatpush1.msra.mxu0 0.0
  %2614 = vmatprep.subr.mxu0 0.0
  %2615 = vmatpush1.msra.mxu0 0.0
  %2616 = vmatprep.subr.mxu0 0.0
  %2617 = vmatpush1.msra.mxu0 0.0
  %2618 = vmatprep.subr.mxu0 0.0
  %2619 = vmatpush1.msra.mxu0 0.0
  %2620 = vmatprep.subr.mxu0 0.0
  %2621 = vmatpush1.msra.mxu0 0.0
  %2622 = vmatprep.subr.mxu0 0.0
  %2623 = vmatpush1.msra.mxu0 0.0
  %2624 = vmatprep.subr.mxu0 0.0
  %2625 = vmatpush1.msra.mxu0 0.0
  %2626 = vmatprep.subr.mxu0 0.0
  %2627 = vmatpush1.msra.mxu0 0.0
  %2628 = vmatprep.subr.mxu0 0.0
  %2629 = vmatpush1.msra.mxu0 0.0
  %2630 = vmatprep.subr.mxu0 0.0
  %2631 = vmatpush1.msra.mxu0 0.0
  %2632 = vmatprep.subr.mxu0 0.0
  %2633 = vmatpush1.msra.mxu0 0.0
  %2634 = vmatprep.subr.mxu0 0.0
  %2635 = vmatpush1.msra.mxu0 0.0
  %2636 = vmatprep.subr.mxu0 0.0
  %2637 = vmatpush1.msra.mxu0 0.0
  %2638 = vmatprep.subr.mxu0 0.0
  %2639 = vmatpush1.msra.mxu0 0.0
  %2640 = vmatprep.subr.mxu0 0.0
  %2641 = vmatpush1.msra.mxu0 0.0
  %2642 = vmatprep.subr.mxu0 0.0
  %2643 = vmatpush1.msra.mxu0 0.0
  %2644 = vmatprep.subr.mxu0 0.0
  %2645 = vmatpush1.msra.mxu0 0.0
  %2646 = vmatprep.subr.mxu0 0.0
  %2647 = vmatpush1.msra.mxu0 0.0
  %2648 = vmatprep.subr.mxu0 0.0
  %2649 = vmatpush1.msra.mxu0 0.0
  %2650 = vmatprep.subr.mxu0 0.0
  %2651 = vmatpush1.msra.mxu0 0.0
  %2652 = vmatprep.subr.mxu0 0.0
  %2653 = vmatpush1.msra.mxu0 0.0
  %2654 = vmatprep.subr.mxu0 0.0
  %2655 = vmatpush1.msra.mxu0 0.0
  %2656 = vmatprep.subr.mxu0 0.0
  %2657 = vmatpush1.msra.mxu0 0.0
  %2658 = vmatprep.subr.mxu0 0.0
  %2659 = vmatpush1.msra.mxu0 0.0
  %2660 = vmatprep.subr.mxu0 0.0
  %2661 = vmatpush1.msra.mxu0 0.0
  %2662 = vmatprep.subr.mxu0 0.0
  %2663 = vmatpush1.msra.mxu0 0.0
  %2664 = vmatprep.subr.mxu0 0.0
  %2665 = vmatpush1.msra.mxu0 0.0
  %2666 = vmatprep.subr.mxu0 0.0
  %2667 = vmatpush1.msra.mxu0 0.0
  %2668 = vmatprep.mubr.f32.mxu0 0.0
  %2669 = vmatmul.mubr.f32.gmra.mrb[0].mxu0 %v2602
  %v2670 = vpop.f32.mrb[0].mxu0
  %v2671 = vadd.f32 0.0, %v2670
  %v2672 = vpop.f32.mrb[0].mxu0
  %v2673 = vadd.f32 0.0, %v2672
  %2674 = vdwg.mxu0
  %v2675 = vadd.f32 %v2584, %v2671
  %v2676 = vadd.f32 %v2586, %v2673
  %2677 = vrot.lane.b32.xlu0 %v2409, 1
  %v2678 = vpop.permute.xlu0 %2677
  %2679 = vrot.lane.b32.xlu0 %v2411, 1
  %v2680 = vpop.permute.xlu0 %2679
  %2681 = vrot.lane.b32.xlu0 %v2410, 1
  %v2682 = vpop.permute.xlu0 %2681
  %2683 = vrot.lane.b32.xlu0 %v2412, 1
  %v2684 = vpop.permute.xlu0 %2683
  %v2685 = vsel %vm505, %v2678, %v2682
  %v2686 = vsel %vm505, %v2680, %v2684
  %v2687 = vsel %vm505, %v2682, %v2678
  %v2688 = vsel %vm505, %v2684, %v2680
  %v2689 = vld [vmem:[%s6 + $0x1c8] sm:$0xff]
  %v2691 = vsel %vm2439, %v2689, 0
  %2693 = vmatprep.subr.mxu0 %v2685
  %2694 = vmatpush1.msra.mxu0 %v2687
  %2695 = vmatprep.subr.mxu0 %v2686
  %2696 = vmatpush1.msra.mxu0 %v2688
  %2697 = vmatprep.subr.mxu0 0.0
  %2698 = vmatpush1.msra.mxu0 0.0
  %2699 = vmatprep.subr.mxu0 0.0
  %2700 = vmatpush1.msra.mxu0 0.0
  %2701 = vmatprep.subr.mxu0 0.0
  %2702 = vmatpush1.msra.mxu0 0.0
  %2703 = vmatprep.subr.mxu0 0.0
  %2704 = vmatpush1.msra.mxu0 0.0
  %2705 = vmatprep.subr.mxu0 0.0
  %2706 = vmatpush1.msra.mxu0 0.0
  %2707 = vmatprep.subr.mxu0 0.0
  %2708 = vmatpush1.msra.mxu0 0.0
  %2709 = vmatprep.subr.mxu0 0.0
  %2710 = vmatpush1.msra.mxu0 0.0
  %2711 = vmatprep.subr.mxu0 0.0
  %2712 = vmatpush1.msra.mxu0 0.0
  %2713 = vmatprep.subr.mxu0 0.0
  %2714 = vmatpush1.msra.mxu0 0.0
  %2715 = vmatprep.subr.mxu0 0.0
  %2716 = vmatpush1.msra.mxu0 0.0
  %2717 = vmatprep.subr.mxu0 0.0
  %2718 = vmatpush1.msra.mxu0 0.0
  %2719 = vmatprep.subr.mxu0 0.0
  %2720 = vmatpush1.msra.mxu0 0.0
  %2721 = vmatprep.subr.mxu0 0.0
  %2722 = vmatpush1.msra.mxu0 0.0
  %2723 = vmatprep.subr.mxu0 0.0
  %2724 = vmatpush1.msra.mxu0 0.0
  %2725 = vmatprep.subr.mxu0 0.0
  %2726 = vmatpush1.msra.mxu0 0.0
  %2727 = vmatprep.subr.mxu0 0.0
  %2728 = vmatpush1.msra.mxu0 0.0
  %2729 = vmatprep.subr.mxu0 0.0
  %2730 = vmatpush1.msra.mxu0 0.0
  %2731 = vmatprep.subr.mxu0 0.0
  %2732 = vmatpush1.msra.mxu0 0.0
  %2733 = vmatprep.subr.mxu0 0.0
  %2734 = vmatpush1.msra.mxu0 0.0
  %2735 = vmatprep.subr.mxu0 0.0
  %2736 = vmatpush1.msra.mxu0 0.0
  %2737 = vmatprep.subr.mxu0 0.0
  %2738 = vmatpush1.msra.mxu0 0.0
  %2739 = vmatprep.subr.mxu0 0.0
  %2740 = vmatpush1.msra.mxu0 0.0
  %2741 = vmatprep.subr.mxu0 0.0
  %2742 = vmatpush1.msra.mxu0 0.0
  %2743 = vmatprep.subr.mxu0 0.0
  %2744 = vmatpush1.msra.mxu0 0.0
  %2745 = vmatprep.subr.mxu0 0.0
  %2746 = vmatpush1.msra.mxu0 0.0
  %2747 = vmatprep.subr.mxu0 0.0
  %2748 = vmatpush1.msra.mxu0 0.0
  %2749 = vmatprep.subr.mxu0 0.0
  %2750 = vmatpush1.msra.mxu0 0.0
  %2751 = vmatprep.subr.mxu0 0.0
  %2752 = vmatpush1.msra.mxu0 0.0
  %2753 = vmatprep.subr.mxu0 0.0
  %2754 = vmatpush1.msra.mxu0 0.0
  %2755 = vmatprep.subr.mxu0 0.0
  %2756 = vmatpush1.msra.mxu0 0.0
  %2757 = vmatprep.mubr.f32.mxu0 0.0
  %2758 = vmatmul.mubr.f32.gmra.mrb[0].mxu0 %v2691
  %v2759 = vpop.f32.mrb[0].mxu0
  %v2760 = vadd.f32 0.0, %v2759
  %v2761 = vpop.f32.mrb[0].mxu0
  %v2762 = vadd.f32 0.0, %v2761
  %2763 = vdwg.mxu0
  %v2764 = vadd.f32 %v2675, %v2760
  %v2765 = vadd.f32 %v2676, %v2762
  %v2766 = vld [vmem:[%s6 + $0x1d0] sm:$0xff]
  %v2768 = vsel %vm2439, %v2766, 0
  %2770 = vmatprep.subr.mxu0 %v2410
  %2771 = vmatpush1.msra.mxu0 %v2409
  %2772 = vmatprep.subr.mxu0 %v2412
  %2773 = vmatpush1.msra.mxu0 %v2411
  %2774 = vmatprep.subr.mxu0 0.0
  %2775 = vmatpush1.msra.mxu0 0.0
  %2776 = vmatprep.subr.mxu0 0.0
  %2777 = vmatpush1.msra.mxu0 0.0
  %2778 = vmatprep.subr.mxu0 0.0
  %2779 = vmatpush1.msra.mxu0 0.0
  %2780 = vmatprep.subr.mxu0 0.0
  %2781 = vmatpush1.msra.mxu0 0.0
  %2782 = vmatprep.subr.mxu0 0.0
  %2783 = vmatpush1.msra.mxu0 0.0
  %2784 = vmatprep.subr.mxu0 0.0
  %2785 = vmatpush1.msra.mxu0 0.0
  %2786 = vmatprep.subr.mxu0 0.0
  %2787 = vmatpush1.msra.mxu0 0.0
  %2788 = vmatprep.subr.mxu0 0.0
  %2789 = vmatpush1.msra.mxu0 0.0
  %2790 = vmatprep.subr.mxu0 0.0
  %2791 = vmatpush1.msra.mxu0 0.0
  %2792 = vmatprep.subr.mxu0 0.0
  %2793 = vmatpush1.msra.mxu0 0.0
  %2794 = vmatprep.subr.mxu0 0.0
  %2795 = vmatpush1.msra.mxu0 0.0
  %2796 = vmatprep.subr.mxu0 0.0
  %2797 = vmatpush1.msra.mxu0 0.0
  %2798 = vmatprep.subr.mxu0 0.0
  %2799 = vmatpush1.msra.mxu0 0.0
  %2800 = vmatprep.subr.mxu0 0.0
  %2801 = vmatpush1.msra.mxu0 0.0
  %2802 = vmatprep.subr.mxu0 0.0
  %2803 = vmatpush1.msra.mxu0 0.0
  %2804 = vmatprep.subr.mxu0 0.0
  %2805 = vmatpush1.msra.mxu0 0.0
  %2806 = vmatprep.subr.mxu0 0.0
  %2807 = vmatpush1.msra.mxu0 0.0
  %2808 = vmatprep.subr.mxu0 0.0
  %2809 = vmatpush1.msra.mxu0 0.0
  %2810 = vmatprep.subr.mxu0 0.0
  %2811 = vmatpush1.msra.mxu0 0.0
  %2812 = vmatprep.subr.mxu0 0.0
  %2813 = vmatpush1.msra.mxu0 0.0
  %2814 = vmatprep.subr.mxu0 0.0
  %2815 = vmatpush1.msra.mxu0 0.0
  %2816 = vmatprep.subr.mxu0 0.0
  %2817 = vmatpush1.msra.mxu0 0.0
  %2818 = vmatprep.subr.mxu0 0.0
  %2819 = vmatpush1.msra.mxu0 0.0
  %2820 = vmatprep.subr.mxu0 0.0
  %2821 = vmatpush1.msra.mxu0 0.0
  %2822 = vmatprep.subr.mxu0 0.0
  %2823 = vmatpush1.msra.mxu0 0.0
  %2824 = vmatprep.subr.mxu0 0.0
  %2825 = vmatpush1.msra.mxu0 0.0
  %2826 = vmatprep.subr.mxu0 0.0
  %2827 = vmatpush1.msra.mxu0 0.0
  %2828 = vmatprep.subr.mxu0 0.0
  %2829 = vmatpush1.msra.mxu0 0.0
  %2830 = vmatprep.subr.mxu0 0.0
  %2831 = vmatpush1.msra.mxu0 0.0
  %2832 = vmatprep.subr.mxu0 0.0
  %2833 = vmatpush1.msra.mxu0 0.0
  %2834 = vmatprep.mubr.f32.mxu0 0.0
  %2835 = vmatmul.mubr.f32.gmra.mrb[0].mxu0 %v2768
  %v2836 = vpop.f32.mrb[0].mxu0
  %v2837 = vadd.f32 0.0, %v2836
  %v2838 = vpop.f32.mrb[0].mxu0
  %v2839 = vadd.f32 0.0, %v2838
  %2840 = vdwg.mxu0
  %v2841 = vadd.f32 %v2764, %v2837
  %v2842 = vadd.f32 %v2765, %v2839
  %2843 = vrot.lane.b32.xlu0 %v2409, 127
  %v2844 = vpop.permute.xlu0 %2843
  %2845 = vrot.lane.b32.xlu0 %v2411, 127
  %v2846 = vpop.permute.xlu0 %2845
  %2847 = vrot.lane.b32.xlu0 %v2410, 127
  %v2848 = vpop.permute.xlu0 %2847
  %2849 = vrot.lane.b32.xlu0 %v2412, 127
  %v2850 = vpop.permute.xlu0 %2849
  %v2851 = vsel %vm768, %v2844, %v2848
  %v2852 = vsel %vm768, %v2846, %v2850
  %v2853 = vsel %vm768, %v2848, %v2844
  %v2854 = vsel %vm768, %v2850, %v2846
  %v2855 = vld [vmem:[%s6 + $0x1d8] sm:$0xff]
  %v2857 = vsel %vm2439, %v2855, 0
  %2859 = vmatprep.subr.mxu0 %v2853
  %2860 = vmatpush1.msra.mxu0 %v2851
  %2861 = vmatprep.subr.mxu0 %v2854
  %2862 = vmatpush1.msra.mxu0 %v2852
  %2863 = vmatprep.subr.mxu0 0.0
  %2864 = vmatpush1.msra.mxu0 0.0
  %2865 = vmatprep.subr.mxu0 0.0
  %2866 = vmatpush1.msra.mxu0 0.0
  %2867 = vmatprep.subr.mxu0 0.0
  %2868 = vmatpush1.msra.mxu0 0.0
  %2869 = vmatprep.subr.mxu0 0.0
  %2870 = vmatpush1.msra.mxu0 0.0
  %2871 = vmatprep.subr.mxu0 0.0
  %2872 = vmatpush1.msra.mxu0 0.0
  %2873 = vmatprep.subr.mxu0 0.0
  %2874 = vmatpush1.msra.mxu0 0.0
  %2875 = vmatprep.subr.mxu0 0.0
  %2876 = vmatpush1.msra.mxu0 0.0
  %2877 = vmatprep.subr.mxu0 0.0
  %2878 = vmatpush1.msra.mxu0 0.0
  %2879 = vmatprep.subr.mxu0 0.0
  %2880 = vmatpush1.msra.mxu0 0.0
  %2881 = vmatprep.subr.mxu0 0.0
  %2882 = vmatpush1.msra.mxu0 0.0
  %2883 = vmatprep.subr.mxu0 0.0
  %2884 = vmatpush1.msra.mxu0 0.0
  %2885 = vmatprep.subr.mxu0 0.0
  %2886 = vmatpush1.msra.mxu0 0.0
  %2887 = vmatprep.subr.mxu0 0.0
  %2888 = vmatpush1.msra.mxu0 0.0
  %2889 = vmatprep.subr.mxu0 0.0
  %2890 = vmatpush1.msra.mxu0 0.0
  %2891 = vmatprep.subr.mxu0 0.0
  %2892 = vmatpush1.msra.mxu0 0.0
  %2893 = vmatprep.subr.mxu0 0.0
  %2894 = vmatpush1.msra.mxu0 0.0
  %2895 = vmatprep.subr.mxu0 0.0
  %2896 = vmatpush1.msra.mxu0 0.0
  %2897 = vmatprep.subr.mxu0 0.0
  %2898 = vmatpush1.msra.mxu0 0.0
  %2899 = vmatprep.subr.mxu0 0.0
  %2900 = vmatpush1.msra.mxu0 0.0
  %2901 = vmatprep.subr.mxu0 0.0
  %2902 = vmatpush1.msra.mxu0 0.0
  %2903 = vmatprep.subr.mxu0 0.0
  %2904 = vmatpush1.msra.mxu0 0.0
  %2905 = vmatprep.subr.mxu0 0.0
  %2906 = vmatpush1.msra.mxu0 0.0
  %2907 = vmatprep.subr.mxu0 0.0
  %2908 = vmatpush1.msra.mxu0 0.0
  %2909 = vmatprep.subr.mxu0 0.0
  %2910 = vmatpush1.msra.mxu0 0.0
  %2911 = vmatprep.subr.mxu0 0.0
  %2912 = vmatpush1.msra.mxu0 0.0
  %2913 = vmatprep.subr.mxu0 0.0
  %2914 = vmatpush1.msra.mxu0 0.0
  %2915 = vmatprep.subr.mxu0 0.0
  %2916 = vmatpush1.msra.mxu0 0.0
  %2917 = vmatprep.subr.mxu0 0.0
  %2918 = vmatpush1.msra.mxu0 0.0
  %2919 = vmatprep.subr.mxu0 0.0
  %2920 = vmatpush1.msra.mxu0 0.0
  %2921 = vmatprep.subr.mxu0 0.0
  %2922 = vmatpush1.msra.mxu0 0.0
  %2923 = vmatprep.mubr.f32.mxu0 0.0
  %2924 = vmatmul.mubr.f32.gmra.mrb[0].mxu0 %v2857
  %v2925 = vpop.f32.mrb[0].mxu0
  %v2926 = vadd.f32 0.0, %v2925
  %v2927 = vpop.f32.mrb[0].mxu0
  %v2928 = vadd.f32 0.0, %v2927
  %2929 = vdwg.mxu0
  %v2930 = vadd.f32 %v2841, %v2926
  %v2931 = vadd.f32 %v2842, %v2928
  %2932 = vrot.lane.b32.xlu0 %v2409, 119
  %v2933 = vpop.permute.xlu0 %2932
  %2934 = vrot.lane.b32.xlu0 %v2411, 119
  %v2935 = vpop.permute.xlu0 %2934
  %2936 = vrot.lane.b32.xlu0 %v2410, 119
  %v2937 = vpop.permute.xlu0 %2936
  %2938 = vrot.lane.b32.xlu0 %v2412, 119
  %v2939 = vpop.permute.xlu0 %2938
  %v2940 = vsel %vm918, %v2933, %v2937
  %v2941 = vsel %vm918, %v2935, %v2939
  %v2942 = vsel %vm918, %v2937, %v2933
  %v2943 = vsel %vm918, %v2939, %v2935
  %v2944 = vld [vmem:[%s6 + $0x1e0] sm:$0xff]
  %v2946 = vsel %vm2439, %v2944, 0
  %2948 = vmatprep.subr.mxu0 %v2942
  %2949 = vmatpush1.msra.mxu0 %v2940
  %2950 = vmatprep.subr.mxu0 %v2943
  %2951 = vmatpush1.msra.mxu0 %v2941
  %2952 = vmatprep.subr.mxu0 0.0
  %2953 = vmatpush1.msra.mxu0 0.0
  %2954 = vmatprep.subr.mxu0 0.0
  %2955 = vmatpush1.msra.mxu0 0.0
  %2956 = vmatprep.subr.mxu0 0.0
  %2957 = vmatpush1.msra.mxu0 0.0
  %2958 = vmatprep.subr.mxu0 0.0
  %2959 = vmatpush1.msra.mxu0 0.0
  %2960 = vmatprep.subr.mxu0 0.0
  %2961 = vmatpush1.msra.mxu0 0.0
  %2962 = vmatprep.subr.mxu0 0.0
  %2963 = vmatpush1.msra.mxu0 0.0
  %2964 = vmatprep.subr.mxu0 0.0
  %2965 = vmatpush1.msra.mxu0 0.0
  %2966 = vmatprep.subr.mxu0 0.0
  %2967 = vmatpush1.msra.mxu0 0.0
  %2968 = vmatprep.subr.mxu0 0.0
  %2969 = vmatpush1.msra.mxu0 0.0
  %2970 = vmatprep.subr.mxu0 0.0
  %2971 = vmatpush1.msra.mxu0 0.0
  %2972 = vmatprep.subr.mxu0 0.0
  %2973 = vmatpush1.msra.mxu0 0.0
  %2974 = vmatprep.subr.mxu0 0.0
  %2975 = vmatpush1.msra.mxu0 0.0
  %2976 = vmatprep.subr.mxu0 0.0
  %2977 = vmatpush1.msra.mxu0 0.0
  %2978 = vmatprep.subr.mxu0 0.0
  %2979 = vmatpush1.msra.mxu0 0.0
  %2980 = vmatprep.subr.mxu0 0.0
  %2981 = vmatpush1.msra.mxu0 0.0
  %2982 = vmatprep.subr.mxu0 0.0
  %2983 = vmatpush1.msra.mxu0 0.0
  %2984 = vmatprep.subr.mxu0 0.0
  %2985 = vmatpush1.msra.mxu0 0.0
  %2986 = vmatprep.subr.mxu0 0.0
  %2987 = vmatpush1.msra.mxu0 0.0
  %2988 = vmatprep.subr.mxu0 0.0
  %2989 = vmatpush1.msra.mxu0 0.0
  %2990 = vmatprep.subr.mxu0 0.0
  %2991 = vmatpush1.msra.mxu0 0.0
  %2992 = vmatprep.subr.mxu0 0.0
  %2993 = vmatpush1.msra.mxu0 0.0
  %2994 = vmatprep.subr.mxu0 0.0
  %2995 = vmatpush1.msra.mxu0 0.0
  %2996 = vmatprep.subr.mxu0 0.0
  %2997 = vmatpush1.msra.mxu0 0.0
  %2998 = vmatprep.subr.mxu0 0.0
  %2999 = vmatpush1.msra.mxu0 0.0
  %3000 = vmatprep.subr.mxu0 0.0
  %3001 = vmatpush1.msra.mxu0 0.0
  %3002 = vmatprep.subr.mxu0 0.0
  %3003 = vmatpush1.msra.mxu0 0.0
  %3004 = vmatprep.subr.mxu0 0.0
  %3005 = vmatpush1.msra.mxu0 0.0
  %3006 = vmatprep.subr.mxu0 0.0
  %3007 = vmatpush1.msra.mxu0 0.0
  %3008 = vmatprep.subr.mxu0 0.0
  %3009 = vmatpush1.msra.mxu0 0.0
  %3010 = vmatprep.subr.mxu0 0.0
  %3011 = vmatpush1.msra.mxu0 0.0
  %3012 = vmatprep.mubr.f32.mxu0 0.0
  %3013 = vmatmul.mubr.f32.gmra.mrb[0].mxu0 %v2946
  %v3014 = vpop.f32.mrb[0].mxu0
  %v3015 = vadd.f32 0.0, %v3014
  %v3016 = vpop.f32.mrb[0].mxu0
  %v3017 = vadd.f32 0.0, %v3016
  %3018 = vdwg.mxu0
  %v3019 = vadd.f32 %v2930, %v3015
  %v3020 = vadd.f32 %v2931, %v3017
  %3021 = vrot.lane.b32.xlu0 %v2409, 118
  %v3022 = vpop.permute.xlu0 %3021
  %3023 = vrot.lane.b32.xlu0 %v2411, 118
  %v3024 = vpop.permute.xlu0 %3023
  %3025 = vrot.lane.b32.xlu0 %v2410, 118
  %v3026 = vpop.permute.xlu0 %3025
  %3027 = vrot.lane.b32.xlu0 %v2412, 118
  %v3028 = vpop.permute.xlu0 %3027
  %v3029 = vsel %vm1068, %v3022, %v3026
  %v3030 = vsel %vm1068, %v3024, %v3028
  %v3031 = vsel %vm1068, %v3026, %v3022
  %v3032 = vsel %vm1068, %v3028, %v3024
  %v3033 = vld [vmem:[%s6 + $0x1e8] sm:$0xff]
  %v3035 = vsel %vm2439, %v3033, 0
  %3037 = vmatprep.subr.mxu0 %v3031
  %3038 = vmatpush1.msra.mxu0 %v3029
  %3039 = vmatprep.subr.mxu0 %v3032
  %3040 = vmatpush1.msra.mxu0 %v3030
  %3041 = vmatprep.subr.mxu0 0.0
  %3042 = vmatpush1.msra.mxu0 0.0
  %3043 = vmatprep.subr.mxu0 0.0
  %3044 = vmatpush1.msra.mxu0 0.0
  %3045 = vmatprep.subr.mxu0 0.0
  %3046 = vmatpush1.msra.mxu0 0.0
  %3047 = vmatprep.subr.mxu0 0.0
  %3048 = vmatpush1.msra.mxu0 0.0
  %3049 = vmatprep.subr.mxu0 0.0
  %3050 = vmatpush1.msra.mxu0 0.0
  %3051 = vmatprep.subr.mxu0 0.0
  %3052 = vmatpush1.msra.mxu0 0.0
  %3053 = vmatprep.subr.mxu0 0.0
  %3054 = vmatpush1.msra.mxu0 0.0
  %3055 = vmatprep.subr.mxu0 0.0
  %3056 = vmatpush1.msra.mxu0 0.0
  %3057 = vmatprep.subr.mxu0 0.0
  %3058 = vmatpush1.msra.mxu0 0.0
  %3059 = vmatprep.subr.mxu0 0.0
  %3060 = vmatpush1.msra.mxu0 0.0
  %3061 = vmatprep.subr.mxu0 0.0
  %3062 = vmatpush1.msra.mxu0 0.0
  %3063 = vmatprep.subr.mxu0 0.0
  %3064 = vmatpush1.msra.mxu0 0.0
  %3065 = vmatprep.subr.mxu0 0.0
  %3066 = vmatpush1.msra.mxu0 0.0
  %3067 = vmatprep.subr.mxu0 0.0
  %3068 = vmatpush1.msra.mxu0 0.0
  %3069 = vmatprep.subr.mxu0 0.0
  %3070 = vmatpush1.msra.mxu0 0.0
  %3071 = vmatprep.subr.mxu0 0.0
  %3072 = vmatpush1.msra.mxu0 0.0
  %3073 = vmatprep.subr.mxu0 0.0
  %3074 = vmatpush1.msra.mxu0 0.0
  %3075 = vmatprep.subr.mxu0 0.0
  %3076 = vmatpush1.msra.mxu0 0.0
  %3077 = vmatprep.subr.mxu0 0.0
  %3078 = vmatpush1.msra.mxu0 0.0
  %3079 = vmatprep.subr.mxu0 0.0
  %3080 = vmatpush1.msra.mxu0 0.0
  %3081 = vmatprep.subr.mxu0 0.0
  %3082 = vmatpush1.msra.mxu0 0.0
  %3083 = vmatprep.subr.mxu0 0.0
  %3084 = vmatpush1.msra.mxu0 0.0
  %3085 = vmatprep.subr.mxu0 0.0
  %3086 = vmatpush1.msra.mxu0 0.0
  %3087 = vmatprep.subr.mxu0 0.0
  %3088 = vmatpush1.msra.mxu0 0.0
  %3089 = vmatprep.subr.mxu0 0.0
  %3090 = vmatpush1.msra.mxu0 0.0
  %3091 = vmatprep.subr.mxu0 0.0
  %3092 = vmatpush1.msra.mxu0 0.0
  %3093 = vmatprep.subr.mxu0 0.0
  %3094 = vmatpush1.msra.mxu0 0.0
  %3095 = vmatprep.subr.mxu0 0.0
  %3096 = vmatpush1.msra.mxu0 0.0
  %3097 = vmatprep.subr.mxu0 0.0
  %3098 = vmatpush1.msra.mxu0 0.0
  %3099 = vmatprep.subr.mxu0 0.0
  %3100 = vmatpush1.msra.mxu0 0.0
  %3101 = vmatprep.mubr.f32.mxu0 0.0
  %3102 = vmatmul.mubr.f32.gmra.mrb[0].mxu0 %v3035
  %v3103 = vpop.f32.mrb[0].mxu0
  %v3104 = vadd.f32 0.0, %v3103
  %v3105 = vpop.f32.mrb[0].mxu0
  %v3106 = vadd.f32 0.0, %v3105
  %3107 = vdwg.mxu0
  %v3108 = vadd.f32 %v3019, %v3104
  %v3109 = vadd.f32 %v3020, %v3106
  %3110 = vrot.lane.b32.xlu0 %v2409, 117
  %v3111 = vpop.permute.xlu0 %3110
  %3112 = vrot.lane.b32.xlu0 %v2411, 117
  %v3113 = vpop.permute.xlu0 %3112
  %3114 = vrot.lane.b32.xlu0 %v2410, 117
  %v3115 = vpop.permute.xlu0 %3114
  %3116 = vrot.lane.b32.xlu0 %v2412, 117
  %v3117 = vpop.permute.xlu0 %3116
  %v3118 = vsel %vm1218, %v3111, %v3115
  %v3119 = vsel %vm1218, %v3113, %v3117
  %v3120 = vsel %vm1218, %v3115, %v3111
  %v3121 = vsel %vm1218, %v3117, %v3113
  %v3122 = vld [vmem:[%s6 + $0x1f0] sm:$0xff]
  %v3124 = vsel %vm2439, %v3122, 0
  %3126 = vmatprep.subr.mxu0 %v3120
  %3127 = vmatpush1.msra.mxu0 %v3118
  %3128 = vmatprep.subr.mxu0 %v3121
  %3129 = vmatpush1.msra.mxu0 %v3119
  %3130 = vmatprep.subr.mxu0 0.0
  %3131 = vmatpush1.msra.mxu0 0.0
  %3132 = vmatprep.subr.mxu0 0.0
  %3133 = vmatpush1.msra.mxu0 0.0
  %3134 = vmatprep.subr.mxu0 0.0
  %3135 = vmatpush1.msra.mxu0 0.0
  %3136 = vmatprep.subr.mxu0 0.0
  %3137 = vmatpush1.msra.mxu0 0.0
  %3138 = vmatprep.subr.mxu0 0.0
  %3139 = vmatpush1.msra.mxu0 0.0
  %3140 = vmatprep.subr.mxu0 0.0
  %3141 = vmatpush1.msra.mxu0 0.0
  %3142 = vmatprep.subr.mxu0 0.0
  %3143 = vmatpush1.msra.mxu0 0.0
  %3144 = vmatprep.subr.mxu0 0.0
  %3145 = vmatpush1.msra.mxu0 0.0
  %3146 = vmatprep.subr.mxu0 0.0
  %3147 = vmatpush1.msra.mxu0 0.0
  %3148 = vmatprep.subr.mxu0 0.0
  %3149 = vmatpush1.msra.mxu0 0.0
  %3150 = vmatprep.subr.mxu0 0.0
  %3151 = vmatpush1.msra.mxu0 0.0
  %3152 = vmatprep.subr.mxu0 0.0
  %3153 = vmatpush1.msra.mxu0 0.0
  %3154 = vmatprep.subr.mxu0 0.0
  %3155 = vmatpush1.msra.mxu0 0.0
  %3156 = vmatprep.subr.mxu0 0.0
  %3157 = vmatpush1.msra.mxu0 0.0
  %3158 = vmatprep.subr.mxu0 0.0
  %3159 = vmatpush1.msra.mxu0 0.0
  %3160 = vmatprep.subr.mxu0 0.0
  %3161 = vmatpush1.msra.mxu0 0.0
  %3162 = vmatprep.subr.mxu0 0.0
  %3163 = vmatpush1.msra.mxu0 0.0
  %3164 = vmatprep.subr.mxu0 0.0
  %3165 = vmatpush1.msra.mxu0 0.0
  %3166 = vmatprep.subr.mxu0 0.0
  %3167 = vmatpush1.msra.mxu0 0.0
  %3168 = vmatprep.subr.mxu0 0.0
  %3169 = vmatpush1.msra.mxu0 0.0
  %3170 = vmatprep.subr.mxu0 0.0
  %3171 = vmatpush1.msra.mxu0 0.0
  %3172 = vmatprep.subr.mxu0 0.0
  %3173 = vmatpush1.msra.mxu0 0.0
  %3174 = vmatprep.subr.mxu0 0.0
  %3175 = vmatpush1.msra.mxu0 0.0
  %3176 = vmatprep.subr.mxu0 0.0
  %3177 = vmatpush1.msra.mxu0 0.0
  %3178 = vmatprep.subr.mxu0 0.0
  %3179 = vmatpush1.msra.mxu0 0.0
  %3180 = vmatprep.subr.mxu0 0.0
  %3181 = vmatpush1.msra.mxu0 0.0
  %3182 = vmatprep.subr.mxu0 0.0
  %3183 = vmatpush1.msra.mxu0 0.0
  %3184 = vmatprep.subr.mxu0 0.0
  %3185 = vmatpush1.msra.mxu0 0.0
  %3186 = vmatprep.subr.mxu0 0.0
  %3187 = vmatpush1.msra.mxu0 0.0
  %3188 = vmatprep.subr.mxu0 0.0
  %3189 = vmatpush1.msra.mxu0 0.0
  %3190 = vmatprep.mubr.f32.mxu0 0.0
  %3191 = vmatmul.mubr.f32.gmra.mrb[0].mxu0 %v3124
  %v3192 = vpop.f32.mrb[0].mxu0
  %v3193 = vadd.f32 0.0, %v3192
  %v3194 = vpop.f32.mrb[0].mxu0
  %v3195 = vadd.f32 0.0, %v3194
  %3196 = vdwg.mxu0
  %v3197 = vadd.f32 %v3108, %v3193
  %v3198 = vadd.f32 %v3109, %v3195
  %v3199 = vld [vmem:[%s6 + $0x230] sm:$0xff]
  %3201 = vset.pattern.permute.xlu0 0
  %3202 = vperm.xlu0 %3201, %v3199
  %v3203 = vpop.permute.xlu0 %3202
  %v3205 = vadd.f32 %v3197, %v3203
  %v3206 = vadd.f32 %v3198, %v3203
  %v3207 = vmax.f32 %v3205, 0.0
  %v3208 = vmax.f32 %v3206, 0.0
  %v3209 = vmul.f32 %v3207, %v1388
  %v3210 = vmul.f32 %v3208, %v1392
  %v3211 = vld [vmem:[%s6 + $0x1f8] sm:$0xff]
  %3213 = vset.pattern.permute.xlu0 0
  %3214 = vperm.xlu0 %3213, %v3211
  %v3215 = vpop.permute.xlu0 %3214
  %v3217 = vmul.f32 %v3215, %v3209
  %v3218 = vmul.f32 %v3215, %v3210
  %v3219 = vrot.slane %v3217, 4
  %v3220 = vadd.f32 %v3217, %v3219
  %v3221 = vrot.slane %v3220, 2
  %v3222 = vadd.f32 %v3220, %v3221
  %v3223 = vrot.slane %v3222, 1
  %v3224 = vadd.f32 %v3222, %v3223
  %v3225 = vrot.slane %v3218, 4
  %v3226 = vadd.f32 %v3218, %v3225
  %v3227 = vrot.slane %v3226, 2
  %v3228 = vadd.f32 %v3226, %v3227
  %v3229 = vrot.slane %v3228, 1
  %v3230 = vadd.f32 %v3228, %v3229
  %v3231 = vld [vmem:[%s6 + $0x238] sm:$0x1]
  %3233 = vset.pattern.permute.xlu0 0
  %3234 = vperm.xlu0 %3233, %v3231
  %v3235 = vpop.permute.xlu0 %3234
  %v3237 = vadd.f32 %v3224, %v3235
  %v3238 = vadd.f32 %v3230, %v3235
  %v3241 = vcombine.low %v3237, %v3238
  %v3243 = vunpack.c.l.s4 1966171168
  %v3244 = vunpack.c.0.s8 %v3243
  %v3245 = vlaneseq
  %v3246 = vshrl.u32 %v3245, 7
  %v3247 = vsub.s32 %v3244, %v3246
  %v3248 = vrot.slane %v3241, %v3247
  %v3250 = vunpack.c.l.s4 1966171168
  %v3251 = vunpack.c.0.s8 %v3250
  %v3252 = vlaneseq
  %v3253 = vshrl.u32 %v3252, 7
  %v3254 = vsub.s32 %v3251, %v3253
  %v3255 = vrot.slane %v3248, %v3254
  %v3257 = vlaneseq
  %vm3258 = vcmp.ge.s32.totalorder %v3257, 0
  %vm3259 = vcmp.lt.s32.totalorder %v3257, 256
  %vm3260 = vmand %vm3258, %vm3259
  %3261 = vst.msk [vmem:[%s8] sm:$0x3] %vm3260, %v3255
  %v3262 = vld [vmem:[%s1] sm:$0x3]
  %v3263 = vld [vmem:[%s2] sm:$0x3]
  %3265 = vrot.lane.b32.xlu0 %v3263, 32
  %v3266 = vpop.permute.xlu0 %3265
  %v3268 = vsel %vm1455, %v3262, %v3266
  %v3269 = vld [vmem:[%s7] sm:$0xff]
  %v3270 = vld [vmem:[%s7 + $0x8] sm:$0xff]
  %v3271 = vld [vmem:[%s7 + $0x10] sm:$0xff]
  %v3272 = vld [vmem:[%s7 + $0x18] sm:$0xff]
  %v3273 = vld [vmem:[%s7 + $0x20] sm:$0xff]
  %v3274 = vld [vmem:[%s7 + $0x128] sm:$0x1]
  %v3275 = vlaneseq
  %v3276 = vshrl.u32 %v3275, 7
  %v3277 = vsub.s32 0, %v3276
  %v3278 = vrot.slane %v3274, %v3277
  %vm3279 = vcmask 326656
  %v3281 = vsel %vm3279, %v3268, 0
  %3283 = vmatprep.subr.mxu0 0.0
  %3284 = vmatpush1.msra.mxu0 %v3269
  %3285 = vmatprep.subr.mxu0 0.0
  %3286 = vmatpush1.msra.mxu0 %v3270
  %3287 = vmatprep.subr.mxu0 0.0
  %3288 = vmatpush1.msra.mxu0 %v3271
  %3289 = vmatprep.subr.mxu0 0.0
  %3290 = vmatpush1.msra.mxu0 %v3272
  %3291 = vmatprep.subr.mxu0 0.0
  %3292 = vmatpush1.msra.mxu0 %v3273
  %3293 = vmatprep.subr.mxu0 0.0
  %3294 = vmatpush1.msra.mxu0 0.0
  %3295 = vmatprep.subr.mxu0 0.0
  %3296 = vmatpush1.msra.mxu0 0.0
  %3297 = vmatprep.subr.mxu0 0.0
  %3298 = vmatpush1.msra.mxu0 0.0
  %3299 = vmatprep.subr.mxu0 0.0
  %3300 = vmatpush1.msra.mxu0 0.0
  %3301 = vmatprep.subr.mxu0 0.0
  %3302 = vmatpush1.msra.mxu0 0.0
  %3303 = vmatprep.subr.mxu0 0.0
  %3304 = vmatpush1.msra.mxu0 0.0
  %3305 = vmatprep.subr.mxu0 0.0
  %3306 = vmatpush1.msra.mxu0 0.0
  %3307 = vmatprep.subr.mxu0 0.0
  %3308 = vmatpush1.msra.mxu0 0.0
  %3309 = vmatprep.subr.mxu0 0.0
  %3310 = vmatpush1.msra.mxu0 0.0
  %3311 = vmatprep.subr.mxu0 0.0
  %3312 = vmatpush1.msra.mxu0 0.0
  %3313 = vmatprep.subr.mxu0 0.0
  %3314 = vmatpush1.msra.mxu0 0.0
  %3315 = vmatprep.subr.mxu0 0.0
  %3316 = vmatpush1.msra.mxu0 0.0
  %3317 = vmatprep.subr.mxu0 0.0
  %3318 = vmatpush1.msra.mxu0 0.0
  %3319 = vmatprep.subr.mxu0 0.0
  %3320 = vmatpush1.msra.mxu0 0.0
  %3321 = vmatprep.subr.mxu0 0.0
  %3322 = vmatpush1.msra.mxu0 0.0
  %3323 = vmatprep.subr.mxu0 0.0
  %3324 = vmatpush1.msra.mxu0 0.0
  %3325 = vmatprep.subr.mxu0 0.0
  %3326 = vmatpush1.msra.mxu0 0.0
  %3327 = vmatprep.subr.mxu0 0.0
  %3328 = vmatpush1.msra.mxu0 0.0
  %3329 = vmatprep.subr.mxu0 0.0
  %3330 = vmatpush1.msra.mxu0 0.0
  %3331 = vmatprep.subr.mxu0 0.0
  %3332 = vmatpush1.msra.mxu0 0.0
  %3333 = vmatprep.subr.mxu0 0.0
  %3334 = vmatpush1.msra.mxu0 0.0
  %3335 = vmatprep.subr.mxu0 0.0
  %3336 = vmatpush1.msra.mxu0 0.0
  %3337 = vmatprep.subr.mxu0 0.0
  %3338 = vmatpush1.msra.mxu0 0.0
  %3339 = vmatprep.subr.mxu0 0.0
  %3340 = vmatpush1.msra.mxu0 0.0
  %3341 = vmatprep.subr.mxu0 0.0
  %3342 = vmatpush1.msra.mxu0 0.0
  %3343 = vmatprep.subr.mxu0 0.0
  %3344 = vmatpush1.msra.mxu0 0.0
  %3345 = vmatprep.subr.mxu0 0.0
  %3346 = vmatpush1.msra.mxu0 0.0
  %3347 = vmatprep.mubr.f32.mxu0 0.0
  %3348 = vmatmul.mubr.f32.gmra.mrb[0].mxu0 %v3281
  %v3349 = vpop.f32.mrb[0].mxu0
  %v3350 = vadd.f32 %v3278, %v3349
  %v3351 = vpop.f32.mrb[0].mxu0
  %3352 = vdwg.mxu0
  %v3353 = vmax.f32 %v3350, 0.0
  %v3354 = vld [vmem:[%s7 + $0x28] sm:$0xff]
  %v3355 = vld [vmem:[%s7 + $0x30] sm:$0xff]
  %v3356 = vld [vmem:[%s7 + $0x38] sm:$0xff]
  %v3357 = vld [vmem:[%s7 + $0x40] sm:$0xff]
  %v3358 = vld [vmem:[%s7 + $0x130] sm:$0x1]
  %v3359 = vlaneseq
  %v3360 = vshrl.u32 %v3359, 7
  %v3361 = vsub.s32 0, %v3360
  %v3362 = vrot.slane %v3358, %v3361
  %v3364 = vsel %vm1455, %v3353, 0
  %3366 = vmatprep.subr.mxu0 0.0
  %3367 = vmatpush1.msra.mxu0 %v3354
  %3368 = vmatprep.subr.mxu0 0.0
  %3369 = vmatpush1.msra.mxu0 %v3355
  %3370 = vmatprep.subr.mxu0 0.0
  %3371 = vmatpush1.msra.mxu0 %v3356
  %3372 = vmatprep.subr.mxu0 0.0
  %3373 = vmatpush1.msra.mxu0 %v3357
  %3374 = vmatprep.subr.mxu0 0.0
  %3375 = vmatpush1.msra.mxu0 0.0
  %3376 = vmatprep.subr.mxu0 0.0
  %3377 = vmatpush1.msra.mxu0 0.0
  %3378 = vmatprep.subr.mxu0 0.0
  %3379 = vmatpush1.msra.mxu0 0.0
  %3380 = vmatprep.subr.mxu0 0.0
  %3381 = vmatpush1.msra.mxu0 0.0
  %3382 = vmatprep.subr.mxu0 0.0
  %3383 = vmatpush1.msra.mxu0 0.0
  %3384 = vmatprep.subr.mxu0 0.0
  %3385 = vmatpush1.msra.mxu0 0.0
  %3386 = vmatprep.subr.mxu0 0.0
  %3387 = vmatpush1.msra.mxu0 0.0
  %3388 = vmatprep.subr.mxu0 0.0
  %3389 = vmatpush1.msra.mxu0 0.0
  %3390 = vmatprep.subr.mxu0 0.0
  %3391 = vmatpush1.msra.mxu0 0.0
  %3392 = vmatprep.subr.mxu0 0.0
  %3393 = vmatpush1.msra.mxu0 0.0
  %3394 = vmatprep.subr.mxu0 0.0
  %3395 = vmatpush1.msra.mxu0 0.0
  %3396 = vmatprep.subr.mxu0 0.0
  %3397 = vmatpush1.msra.mxu0 0.0
  %3398 = vmatprep.subr.mxu0 0.0
  %3399 = vmatpush1.msra.mxu0 0.0
  %3400 = vmatprep.subr.mxu0 0.0
  %3401 = vmatpush1.msra.mxu0 0.0
  %3402 = vmatprep.subr.mxu0 0.0
  %3403 = vmatpush1.msra.mxu0 0.0
  %3404 = vmatprep.subr.mxu0 0.0
  %3405 = vmatpush1.msra.mxu0 0.0
  %3406 = vmatprep.subr.mxu0 0.0
  %3407 = vmatpush1.msra.mxu0 0.0
  %3408 = vmatprep.subr.mxu0 0.0
  %3409 = vmatpush1.msra.mxu0 0.0
  %3410 = vmatprep.subr.mxu0 0.0
  %3411 = vmatpush1.msra.mxu0 0.0
  %3412 = vmatprep.subr.mxu0 0.0
  %3413 = vmatpush1.msra.mxu0 0.0
  %3414 = vmatprep.subr.mxu0 0.0
  %3415 = vmatpush1.msra.mxu0 0.0
  %3416 = vmatprep.subr.mxu0 0.0
  %3417 = vmatpush1.msra.mxu0 0.0
  %3418 = vmatprep.subr.mxu0 0.0
  %3419 = vmatpush1.msra.mxu0 0.0
  %3420 = vmatprep.subr.mxu0 0.0
  %3421 = vmatpush1.msra.mxu0 0.0
  %3422 = vmatprep.subr.mxu0 0.0
  %3423 = vmatpush1.msra.mxu0 0.0
  %3424 = vmatprep.subr.mxu0 0.0
  %3425 = vmatpush1.msra.mxu0 0.0
  %3426 = vmatprep.subr.mxu0 0.0
  %3427 = vmatpush1.msra.mxu0 0.0
  %3428 = vmatprep.subr.mxu0 0.0
  %3429 = vmatpush1.msra.mxu0 0.0
  %3430 = vmatprep.mubr.f32.mxu0 0.0
  %3431 = vmatmul.mubr.f32.gmra.mrb[0].mxu0 %v3364
  %v3432 = vpop.f32.mrb[0].mxu0
  %v3433 = vadd.f32 %v3362, %v3432
  %v3434 = vpop.f32.mrb[0].mxu0
  %3435 = vdwg.mxu0
  %v3436 = vmax.f32 %v3433, 0.0
  %v3437 = vld [vmem:[%s7 + $0x48] sm:$0xff]
  %v3438 = vld [vmem:[%s7 + $0x50] sm:$0xff]
  %v3439 = vld [vmem:[%s7 + $0x58] sm:$0xff]
  %v3440 = vld [vmem:[%s7 + $0x60] sm:$0xff]
  %v3442 = vsel %vm1455, %v3436, 0
  %3444 = vmatprep.subr.mxu0 0.0
  %3445 = vmatpush1.msra.mxu0 %v3437
  %3446 = vmatprep.subr.mxu0 0.0
  %3447 = vmatpush1.msra.mxu0 %v3438
  %3448 = vmatprep.subr.mxu0 0.0
  %3449 = vmatpush1.msra.mxu0 %v3439
  %3450 = vmatprep.subr.mxu0 0.0
  %3451 = vmatpush1.msra.mxu0 %v3440
  %3452 = vmatprep.subr.mxu0 0.0
  %3453 = vmatpush1.msra.mxu0 0.0
  %3454 = vmatprep.subr.mxu0 0.0
  %3455 = vmatpush1.msra.mxu0 0.0
  %3456 = vmatprep.subr.mxu0 0.0
  %3457 = vmatpush1.msra.mxu0 0.0
  %3458 = vmatprep.subr.mxu0 0.0
  %3459 = vmatpush1.msra.mxu0 0.0
  %3460 = vmatprep.subr.mxu0 0.0
  %3461 = vmatpush1.msra.mxu0 0.0
  %3462 = vmatprep.subr.mxu0 0.0
  %3463 = vmatpush1.msra.mxu0 0.0
  %3464 = vmatprep.subr.mxu0 0.0
  %3465 = vmatpush1.msra.mxu0 0.0
  %3466 = vmatprep.subr.mxu0 0.0
  %3467 = vmatpush1.msra.mxu0 0.0
  %3468 = vmatprep.subr.mxu0 0.0
  %3469 = vmatpush1.msra.mxu0 0.0
  %3470 = vmatprep.subr.mxu0 0.0
  %3471 = vmatpush1.msra.mxu0 0.0
  %3472 = vmatprep.subr.mxu0 0.0
  %3473 = vmatpush1.msra.mxu0 0.0
  %3474 = vmatprep.subr.mxu0 0.0
  %3475 = vmatpush1.msra.mxu0 0.0
  %3476 = vmatprep.subr.mxu0 0.0
  %3477 = vmatpush1.msra.mxu0 0.0
  %3478 = vmatprep.subr.mxu0 0.0
  %3479 = vmatpush1.msra.mxu0 0.0
  %3480 = vmatprep.subr.mxu0 0.0
  %3481 = vmatpush1.msra.mxu0 0.0
  %3482 = vmatprep.subr.mxu0 0.0
  %3483 = vmatpush1.msra.mxu0 0.0
  %3484 = vmatprep.subr.mxu0 0.0
  %3485 = vmatpush1.msra.mxu0 0.0
  %3486 = vmatprep.subr.mxu0 0.0
  %3487 = vmatpush1.msra.mxu0 0.0
  %3488 = vmatprep.subr.mxu0 0.0
  %3489 = vmatpush1.msra.mxu0 0.0
  %3490 = vmatprep.subr.mxu0 0.0
  %3491 = vmatpush1.msra.mxu0 0.0
  %3492 = vmatprep.subr.mxu0 0.0
  %3493 = vmatpush1.msra.mxu0 0.0
  %3494 = vmatprep.subr.mxu0 0.0
  %3495 = vmatpush1.msra.mxu0 0.0
  %3496 = vmatprep.subr.mxu0 0.0
  %3497 = vmatpush1.msra.mxu0 0.0
  %3498 = vmatprep.subr.mxu0 0.0
  %3499 = vmatpush1.msra.mxu0 0.0
  %3500 = vmatprep.subr.mxu0 0.0
  %3501 = vmatpush1.msra.mxu0 0.0
  %3502 = vmatprep.subr.mxu0 0.0
  %3503 = vmatpush1.msra.mxu0 0.0
  %3504 = vmatprep.subr.mxu0 0.0
  %3505 = vmatpush1.msra.mxu0 0.0
  %3506 = vmatprep.subr.mxu0 0.0
  %3507 = vmatpush1.msra.mxu0 0.0
  %3508 = vmatprep.mubr.f32.mxu0 0.0
  %3509 = vmatmul.mubr.f32.gmra.mrb[0].mxu0 %v3442
  %v3510 = vpop.f32.mrb[0].mxu0
  %v3511 = vadd.f32 0.0, %v3510
  %v3512 = vpop.f32.mrb[0].mxu0
  %3513 = vdwg.mxu0
  %v3514 = vld [vmem:[%s7 + $0x138] sm:$0x1]
  %v3515 = vlaneseq
  %v3516 = vshrl.u32 %v3515, 7
  %v3517 = vsub.s32 0, %v3516
  %v3518 = vrot.slane %v3514, %v3517
  %v3519 = vadd.f32 %v3511, %v3518
  %v3520 = vmax.f32 %v3519, 0.0
  %v3521 = vld [vmem:[%s7 + $0x68] sm:$0xff]
  %v3522 = vld [vmem:[%s7 + $0x70] sm:$0xff]
  %v3523 = vld [vmem:[%s7 + $0x78] sm:$0xff]
  %v3524 = vld [vmem:[%s7 + $0x80] sm:$0xff]
  %v3525 = vld [vmem:[%s7 + $0x140] sm:$0x1]
  %v3526 = vlaneseq
  %v3527 = vshrl.u32 %v3526, 7
  %v3528 = vsub.s32 0, %v3527
  %v3529 = vrot.slane %v3525, %v3528
  %v3531 = vsel %vm1455, %v3520, 0
  %3533 = vmatprep.subr.mxu0 0.0
  %3534 = vmatpush1.msra.mxu0 %v3521
  %3535 = vmatprep.subr.mxu0 0.0
  %3536 = vmatpush1.msra.mxu0 %v3522
  %3537 = vmatprep.subr.mxu0 0.0
  %3538 = vmatpush1.msra.mxu0 %v3523
  %3539 = vmatprep.subr.mxu0 0.0
  %3540 = vmatpush1.msra.mxu0 %v3524
  %3541 = vmatprep.subr.mxu0 0.0
  %3542 = vmatpush1.msra.mxu0 0.0
  %3543 = vmatprep.subr.mxu0 0.0
  %3544 = vmatpush1.msra.mxu0 0.0
  %3545 = vmatprep.subr.mxu0 0.0
  %3546 = vmatpush1.msra.mxu0 0.0
  %3547 = vmatprep.subr.mxu0 0.0
  %3548 = vmatpush1.msra.mxu0 0.0
  %3549 = vmatprep.subr.mxu0 0.0
  %3550 = vmatpush1.msra.mxu0 0.0
  %3551 = vmatprep.subr.mxu0 0.0
  %3552 = vmatpush1.msra.mxu0 0.0
  %3553 = vmatprep.subr.mxu0 0.0
  %3554 = vmatpush1.msra.mxu0 0.0
  %3555 = vmatprep.subr.mxu0 0.0
  %3556 = vmatpush1.msra.mxu0 0.0
  %3557 = vmatprep.subr.mxu0 0.0
  %3558 = vmatpush1.msra.mxu0 0.0
  %3559 = vmatprep.subr.mxu0 0.0
  %3560 = vmatpush1.msra.mxu0 0.0
  %3561 = vmatprep.subr.mxu0 0.0
  %3562 = vmatpush1.msra.mxu0 0.0
  %3563 = vmatprep.subr.mxu0 0.0
  %3564 = vmatpush1.msra.mxu0 0.0
  %3565 = vmatprep.subr.mxu0 0.0
  %3566 = vmatpush1.msra.mxu0 0.0
  %3567 = vmatprep.subr.mxu0 0.0
  %3568 = vmatpush1.msra.mxu0 0.0
  %3569 = vmatprep.subr.mxu0 0.0
  %3570 = vmatpush1.msra.mxu0 0.0
  %3571 = vmatprep.subr.mxu0 0.0
  %3572 = vmatpush1.msra.mxu0 0.0
  %3573 = vmatprep.subr.mxu0 0.0
  %3574 = vmatpush1.msra.mxu0 0.0
  %3575 = vmatprep.subr.mxu0 0.0
  %3576 = vmatpush1.msra.mxu0 0.0
  %3577 = vmatprep.subr.mxu0 0.0
  %3578 = vmatpush1.msra.mxu0 0.0
  %3579 = vmatprep.subr.mxu0 0.0
  %3580 = vmatpush1.msra.mxu0 0.0
  %3581 = vmatprep.subr.mxu0 0.0
  %3582 = vmatpush1.msra.mxu0 0.0
  %3583 = vmatprep.subr.mxu0 0.0
  %3584 = vmatpush1.msra.mxu0 0.0
  %3585 = vmatprep.subr.mxu0 0.0
  %3586 = vmatpush1.msra.mxu0 0.0
  %3587 = vmatprep.subr.mxu0 0.0
  %3588 = vmatpush1.msra.mxu0 0.0
  %3589 = vmatprep.subr.mxu0 0.0
  %3590 = vmatpush1.msra.mxu0 0.0
  %3591 = vmatprep.subr.mxu0 0.0
  %3592 = vmatpush1.msra.mxu0 0.0
  %3593 = vmatprep.subr.mxu0 0.0
  %3594 = vmatpush1.msra.mxu0 0.0
  %3595 = vmatprep.subr.mxu0 0.0
  %3596 = vmatpush1.msra.mxu0 0.0
  %3597 = vmatprep.mubr.f32.mxu0 0.0
  %3598 = vmatmul.mubr.f32.gmra.mrb[0].mxu0 %v3531
  %v3599 = vpop.f32.mrb[0].mxu0
  %v3600 = vadd.f32 %v3529, %v3599
  %v3601 = vpop.f32.mrb[0].mxu0
  %3602 = vdwg.mxu0
  %v3603 = vld [vmem:[%s7 + $0x88] sm:$0xff]
  %v3604 = vld [vmem:[%s7 + $0x90] sm:$0xff]
  %v3605 = vld [vmem:[%s7 + $0x98] sm:$0xff]
  %v3606 = vld [vmem:[%s7 + $0xa0] sm:$0x3f]
  %3608 = vrot.lane.b32.xlu0 %v3511, 96
  %v3609 = vpop.permute.xlu0 %3608
  %vm3611 = vcmask 244736
  %v3613 = vsel %vm3611, %v3600, 0
  %vm3615 = vcmask 1045504
  %v3617 = vsel %vm3615, %v3606, 0
  %3619 = vmatprep.subr.mxu0 0.0
  %3620 = vmatpush1.msra.mxu0 %v3603
  %3621 = vmatprep.subr.mxu0 0.0
  %3622 = vmatpush1.msra.mxu0 %v3604
  %3623 = vmatprep.subr.mxu0 0.0
  %3624 = vmatpush1.msra.mxu0 %v3605
  %3625 = vmatprep.subr.mxu0 0.0
  %3626 = vmatpush1.msra.mxu0 %v3617
  %3627 = vmatprep.subr.mxu0 0.0
  %3628 = vmatpush1.msra.mxu0 0.0
  %3629 = vmatprep.subr.mxu0 0.0
  %3630 = vmatpush1.msra.mxu0 0.0
  %3631 = vmatprep.subr.mxu0 0.0
  %3632 = vmatpush1.msra.mxu0 0.0
  %3633 = vmatprep.subr.mxu0 0.0
  %3634 = vmatpush1.msra.mxu0 0.0
  %3635 = vmatprep.subr.mxu0 0.0
  %3636 = vmatpush1.msra.mxu0 0.0
  %3637 = vmatprep.subr.mxu0 0.0
  %3638 = vmatpush1.msra.mxu0 0.0
  %3639 = vmatprep.subr.mxu0 0.0
  %3640 = vmatpush1.msra.mxu0 0.0
  %3641 = vmatprep.subr.mxu0 0.0
  %3642 = vmatpush1.msra.mxu0 0.0
  %3643 = vmatprep.subr.mxu0 0.0
  %3644 = vmatpush1.msra.mxu0 0.0
  %3645 = vmatprep.subr.mxu0 0.0
  %3646 = vmatpush1.msra.mxu0 0.0
  %3647 = vmatprep.subr.mxu0 0.0
  %3648 = vmatpush1.msra.mxu0 0.0
  %3649 = vmatprep.subr.mxu0 0.0
  %3650 = vmatpush1.msra.mxu0 0.0
  %3651 = vmatprep.subr.mxu0 0.0
  %3652 = vmatpush1.msra.mxu0 0.0
  %3653 = vmatprep.subr.mxu0 0.0
  %3654 = vmatpush1.msra.mxu0 0.0
  %3655 = vmatprep.subr.mxu0 0.0
  %3656 = vmatpush1.msra.mxu0 0.0
  %3657 = vmatprep.subr.mxu0 0.0
  %3658 = vmatpush1.msra.mxu0 0.0
  %3659 = vmatprep.subr.mxu0 0.0
  %3660 = vmatpush1.msra.mxu0 0.0
  %3661 = vmatprep.subr.mxu0 0.0
  %3662 = vmatpush1.msra.mxu0 0.0
  %3663 = vmatprep.subr.mxu0 0.0
  %3664 = vmatpush1.msra.mxu0 0.0
  %3665 = vmatprep.subr.mxu0 0.0
  %3666 = vmatpush1.msra.mxu0 0.0
  %3667 = vmatprep.subr.mxu0 0.0
  %3668 = vmatpush1.msra.mxu0 0.0
  %3669 = vmatprep.subr.mxu0 0.0
  %3670 = vmatpush1.msra.mxu0 0.0
  %3671 = vmatprep.subr.mxu0 0.0
  %3672 = vmatpush1.msra.mxu0 0.0
  %3673 = vmatprep.subr.mxu0 0.0
  %3674 = vmatpush1.msra.mxu0 0.0
  %3675 = vmatprep.subr.mxu0 0.0
  %3676 = vmatpush1.msra.mxu0 0.0
  %3677 = vmatprep.subr.mxu0 0.0
  %3678 = vmatpush1.msra.mxu0 0.0
  %3679 = vmatprep.subr.mxu0 0.0
  %3680 = vmatpush1.msra.mxu0 0.0
  %3681 = vmatprep.subr.mxu0 0.0
  %3682 = vmatpush1.msra.mxu0 0.0
  %3683 = vmatprep.mubr.f32.mxu0 0.0
  %3684 = vmatmul.mubr.f32.gmra.mrb[0].mxu0 %v3613
  %v3685 = vpop.f32.mrb[0].mxu0
  %v3686 = vadd.f32 %v3609, %v3685
  %v3687 = vpop.f32.mrb[0].mxu0
  %3688 = vdwg.mxu0
  %v3689 = vld [vmem:[%s7 + $0x148] sm:$0x1]
  %v3690 = vlaneseq
  %v3691 = vshrl.u32 %v3690, 7
  %v3692 = vsub.s32 0, %v3691
  %v3693 = vrot.slane %v3689, %v3692
  %v3694 = vadd.f32 %v3686, %v3693
  %v3695 = vld [vmem:[%s3] sm:$0xff]
  %v3696 = vld [vmem:[%s3 + $0x8] sm:$0xf]
  %v3698 = vsel %vm3611, %v3695, 0
  %v3701 = vsel %vm3611, %v3696, 0
  %3703 = vmatprep.subr.mxu0 0.0
  %3704 = vmatpush1.msra.mxu0 %v3603
  %3705 = vmatprep.subr.mxu0 0.0
  %3706 = vmatpush1.msra.mxu0 %v3604
  %3707 = vmatprep.subr.mxu0 0.0
  %3708 = vmatpush1.msra.mxu0 %v3605
  %3709 = vmatprep.subr.mxu0 0.0
  %3710 = vmatpush1.msra.mxu0 %v3617
  %3711 = vmatprep.subr.mxu0 0.0
  %3712 = vmatpush1.msra.mxu0 0.0
  %3713 = vmatprep.subr.mxu0 0.0
  %3714 = vmatpush1.msra.mxu0 0.0
  %3715 = vmatprep.subr.mxu0 0.0
  %3716 = vmatpush1.msra.mxu0 0.0
  %3717 = vmatprep.subr.mxu0 0.0
  %3718 = vmatpush1.msra.mxu0 0.0
  %3719 = vmatprep.subr.mxu0 0.0
  %3720 = vmatpush1.msra.mxu0 0.0
  %3721 = vmatprep.subr.mxu0 0.0
  %3722 = vmatpush1.msra.mxu0 0.0
  %3723 = vmatprep.subr.mxu0 0.0
  %3724 = vmatpush1.msra.mxu0 0.0
  %3725 = vmatprep.subr.mxu0 0.0
  %3726 = vmatpush1.msra.mxu0 0.0
  %3727 = vmatprep.subr.mxu0 0.0
  %3728 = vmatpush1.msra.mxu0 0.0
  %3729 = vmatprep.subr.mxu0 0.0
  %3730 = vmatpush1.msra.mxu0 0.0
  %3731 = vmatprep.subr.mxu0 0.0
  %3732 = vmatpush1.msra.mxu0 0.0
  %3733 = vmatprep.subr.mxu0 0.0
  %3734 = vmatpush1.msra.mxu0 0.0
  %3735 = vmatprep.subr.mxu0 0.0
  %3736 = vmatpush1.msra.mxu0 0.0
  %3737 = vmatprep.subr.mxu0 0.0
  %3738 = vmatpush1.msra.mxu0 0.0
  %3739 = vmatprep.subr.mxu0 0.0
  %3740 = vmatpush1.msra.mxu0 0.0
  %3741 = vmatprep.subr.mxu0 0.0
  %3742 = vmatpush1.msra.mxu0 0.0
  %3743 = vmatprep.subr.mxu0 0.0
  %3744 = vmatpush1.msra.mxu0 0.0
  %3745 = vmatprep.subr.mxu0 0.0
  %3746 = vmatpush1.msra.mxu0 0.0
  %3747 = vmatprep.subr.mxu0 0.0
  %3748 = vmatpush1.msra.mxu0 0.0
  %3749 = vmatprep.subr.mxu0 0.0
  %3750 = vmatpush1.msra.mxu0 0.0
  %3751 = vmatprep.subr.mxu0 0.0
  %3752 = vmatpush1.msra.mxu0 0.0
  %3753 = vmatprep.subr.mxu0 0.0
  %3754 = vmatpush1.msra.mxu0 0.0
  %3755 = vmatprep.subr.mxu0 0.0
  %3756 = vmatpush1.msra.mxu0 0.0
  %3757 = vmatprep.subr.mxu0 0.0
  %3758 = vmatpush1.msra.mxu0 0.0
  %3759 = vmatprep.subr.mxu0 0.0
  %3760 = vmatpush1.msra.mxu0 0.0
  %3761 = vmatprep.subr.mxu0 0.0
  %3762 = vmatpush1.msra.mxu0 0.0
  %3763 = vmatprep.subr.mxu0 0.0
  %3764 = vmatpush1.msra.mxu0 0.0
  %3765 = vmatprep.subr.mxu0 0.0
  %3766 = vmatpush1.msra.mxu0 0.0
  %3767 = vmatprep.mubr.f32.mxu0 0.0
  %3768 = vmatmul.mubr.f32.gmra.mrb[0].mxu0 %v3698
  %v3769 = vpop.f32.mrb[0].mxu0
  %v3770 = vadd.f32 0.0, %v3769
  %v3771 = vpop.f32.mrb[0].mxu0
  %3772 = vmatprep.mubr.f32.mxu0 0.0
  %3773 = vmatmul.mubr.f32.gmra.mrb[0].mxu0 %v3701
  %v3774 = vpop.f32.mrb[0].mxu0
  %v3775 = vadd.f32 0.0, %v3774
  %v3776 = vpop.f32.mrb[0].mxu0
  %3777 = vdwg.mxu0
  %v3780 = vcombine.high %v3770, %v3770
  %v3782 = vunpack.c.l.s4 1983009808
  %v3783 = vunpack.c.0.s8 %v3782
  %v3784 = vlaneseq
  %v3785 = vshrl.u32 %v3784, 7
  %v3786 = vsub.s32 %v3783, %v3785
  %v3787 = vrot.slane %v3770, %v3786
  %v3789 = vunpack.c.l.s4 1983009808
  %v3790 = vunpack.c.0.s8 %v3789
  %v3791 = vlaneseq
  %v3792 = vshrl.u32 %v3791, 7
  %v3793 = vsub.s32 %v3790, %v3792
  %v3794 = vrot.slane %v3780, %v3793
  %v3795 = vcombine.high %v3787, %v3787
  %v3796 = vcombine.high %v3794, %v3794
  %v3798 = vunpack.c.l.s4 1983009808
  %v3799 = vunpack.c.0.s8 %v3798
  %v3800 = vlaneseq
  %v3801 = vshrl.u32 %v3800, 7
  %v3802 = vsub.s32 %v3799, %v3801
  %v3803 = vrot.slane %v3775, %v3802
  %v3804 = vcombine.high %v3803, %v3803
  %v3811 = vadd.f32 %v3787, %v3694
  %v3812 = vadd.f32 %v3795, %v3694
  %v3813 = vadd.f32 %v3794, %v3694
  %v3814 = vadd.f32 %v3796, %v3694
  %v3815 = vadd.f32 %v3803, %v3694
  %v3816 = vadd.f32 %v3804, %v3694
  %v3817 = vmax.f32 %v3811, 0.0
  %v3818 = vmax.f32 %v3812, 0.0
  %v3819 = vmax.f32 %v3813, 0.0
  %v3820 = vmax.f32 %v3814, 0.0
  %v3821 = vmax.f32 %v3815, 0.0
  %v3822 = vmax.f32 %v3816, 0.0
  %v3823 = vld [vmem:[%s7 + $0xa8] sm:$0xff]
  %v3824 = vld [vmem:[%s7 + $0xb0] sm:$0xff]
  %v3825 = vld [vmem:[%s7 + $0xb8] sm:$0xff]
  %v3826 = vld [vmem:[%s7 + $0xc0] sm:$0xff]
  %v3827 = vld [vmem:[%s7 + $0x150] sm:$0x1]
  %v3828 = vlaneseq
  %v3829 = vshrl.u32 %v3828, 7
  %v3830 = vsub.s32 0, %v3829
  %v3831 = vrot.slane %v3827, %v3830
  %v3838 = vcombine.low %v3817, %v3818
  %v3839 = vcombine.low %v3819, %v3820
  %v3841 = vunpack.c.l.s4 1983009808
  %v3842 = vunpack.c.0.s8 %v3841
  %v3843 = vlaneseq
  %v3844 = vshrl.u32 %v3843, 7
  %v3845 = vsub.s32 %v3842, %v3844
  %v3846 = vrot.slane %v3838, %v3845
  %v3848 = vunpack.c.l.s4 1983009808
  %v3849 = vunpack.c.0.s8 %v3848
  %v3850 = vlaneseq
  %v3851 = vshrl.u32 %v3850, 7
  %v3852 = vsub.s32 %v3849, %v3851
  %v3853 = vrot.slane %v3839, %v3852
  %v3854 = vcombine.low %v3846, %v3853
  %v3855 = vcombine.low %v3821, %v3822
  %v3857 = vunpack.c.l.s4 1983009808
  %v3858 = vunpack.c.0.s8 %v3857
  %v3859 = vlaneseq
  %v3860 = vshrl.u32 %v3859, 7
  %v3861 = vsub.s32 %v3858, %v3860
  %v3862 = vrot.slane %v3855, %v3861
  %v3863 = vsel %vm1455, %v3854, 0
  %v3865 = vsel %vm1455, %v3862, 0
  %3867 = vmatprep.subr.mxu0 0.0
  %3868 = vmatpush1.msra.mxu0 %v3823
  %3869 = vmatprep.subr.mxu0 0.0
  %3870 = vmatpush1.msra.mxu0 %v3824
  %3871 = vmatprep.subr.mxu0 0.0
  %3872 = vmatpush1.msra.mxu0 %v3825
  %3873 = vmatprep.subr.mxu0 0.0
  %3874 = vmatpush1.msra.mxu0 %v3826
  %3875 = vmatprep.subr.mxu0 0.0
  %3876 = vmatpush1.msra.mxu0 0.0
  %3877 = vmatprep.subr.mxu0 0.0
  %3878 = vmatpush1.msra.mxu0 0.0
  %3879 = vmatprep.subr.mxu0 0.0
  %3880 = vmatpush1.msra.mxu0 0.0
  %3881 = vmatprep.subr.mxu0 0.0
  %3882 = vmatpush1.msra.mxu0 0.0
  %3883 = vmatprep.subr.mxu0 0.0
  %3884 = vmatpush1.msra.mxu0 0.0
  %3885 = vmatprep.subr.mxu0 0.0
  %3886 = vmatpush1.msra.mxu0 0.0
  %3887 = vmatprep.subr.mxu0 0.0
  %3888 = vmatpush1.msra.mxu0 0.0
  %3889 = vmatprep.subr.mxu0 0.0
  %3890 = vmatpush1.msra.mxu0 0.0
  %3891 = vmatprep.subr.mxu0 0.0
  %3892 = vmatpush1.msra.mxu0 0.0
  %3893 = vmatprep.subr.mxu0 0.0
  %3894 = vmatpush1.msra.mxu0 0.0
  %3895 = vmatprep.subr.mxu0 0.0
  %3896 = vmatpush1.msra.mxu0 0.0
  %3897 = vmatprep.subr.mxu0 0.0
  %3898 = vmatpush1.msra.mxu0 0.0
  %3899 = vmatprep.subr.mxu0 0.0
  %3900 = vmatpush1.msra.mxu0 0.0
  %3901 = vmatprep.subr.mxu0 0.0
  %3902 = vmatpush1.msra.mxu0 0.0
  %3903 = vmatprep.subr.mxu0 0.0
  %3904 = vmatpush1.msra.mxu0 0.0
  %3905 = vmatprep.subr.mxu0 0.0
  %3906 = vmatpush1.msra.mxu0 0.0
  %3907 = vmatprep.subr.mxu0 0.0
  %3908 = vmatpush1.msra.mxu0 0.0
  %3909 = vmatprep.subr.mxu0 0.0
  %3910 = vmatpush1.msra.mxu0 0.0
  %3911 = vmatprep.subr.mxu0 0.0
  %3912 = vmatpush1.msra.mxu0 0.0
  %3913 = vmatprep.subr.mxu0 0.0
  %3914 = vmatpush1.msra.mxu0 0.0
  %3915 = vmatprep.subr.mxu0 0.0
  %3916 = vmatpush1.msra.mxu0 0.0
  %3917 = vmatprep.subr.mxu0 0.0
  %3918 = vmatpush1.msra.mxu0 0.0
  %3919 = vmatprep.subr.mxu0 0.0
  %3920 = vmatpush1.msra.mxu0 0.0
  %3921 = vmatprep.subr.mxu0 0.0
  %3922 = vmatpush1.msra.mxu0 0.0
  %3923 = vmatprep.subr.mxu0 0.0
  %3924 = vmatpush1.msra.mxu0 0.0
  %3925 = vmatprep.subr.mxu0 0.0
  %3926 = vmatpush1.msra.mxu0 0.0
  %3927 = vmatprep.subr.mxu0 0.0
  %3928 = vmatpush1.msra.mxu0 0.0
  %3929 = vmatprep.subr.mxu0 0.0
  %3930 = vmatpush1.msra.mxu0 0.0
  %3931 = vmatprep.mubr.f32.mxu0 0.0
  %3932 = vmatmul.mubr.f32.gmra.mrb[0].mxu0 %v3863
  %v3933 = vpop.f32.mrb[0].mxu0
  %v3934 = vadd.f32 %v3831, %v3933
  %v3935 = vpop.f32.mrb[0].mxu0
  %3936 = vmatprep.mubr.f32.mxu0 0.0
  %3937 = vmatmul.mubr.f32.gmra.mrb[0].mxu0 %v3865
  %v3938 = vpop.f32.mrb[0].mxu0
  %v3939 = vadd.f32 %v3831, %v3938
  %v3940 = vpop.f32.mrb[0].mxu0
  %3941 = vdwg.mxu0
  %v3942 = vmax.f32 %v3934, 0.0
  %v3943 = vmax.f32 %v3939, 0.0
  %v3944 = vld [vmem:[%s7 + $0xc8] sm:$0xff]
  %v3945 = vld [vmem:[%s7 + $0xd0] sm:$0xff]
  %v3946 = vld [vmem:[%s7 + $0xd8] sm:$0xff]
  %v3947 = vld [vmem:[%s7 + $0xe0] sm:$0xff]
  %v3948 = vld [vmem:[%s7 + $0x158] sm:$0x1]
  %v3949 = vlaneseq
  %v3950 = vshrl.u32 %v3949, 7
  %v3951 = vsub.s32 0, %v3950
  %v3952 = vrot.slane %v3948, %v3951
  %v3954 = vsel %vm1455, %v3942, 0
  %v3957 = vsel %vm1455, %v3943, 0
  %3959 = vmatprep.subr.mxu0 0.0
  %3960 = vmatpush1.msra.mxu0 %v3944
  %3961 = vmatprep.subr.mxu0 0.0
  %3962 = vmatpush1.msra.mxu0 %v3945
  %3963 = vmatprep.subr.mxu0 0.0
  %3964 = vmatpush1.msra.mxu0 %v3946
  %3965 = vmatprep.subr.mxu0 0.0
  %3966 = vmatpush1.msra.mxu0 %v3947
  %3967 = vmatprep.subr.mxu0 0.0
  %3968 = vmatpush1.msra.mxu0 0.0
  %3969 = vmatprep.subr.mxu0 0.0
  %3970 = vmatpush1.msra.mxu0 0.0
  %3971 = vmatprep.subr.mxu0 0.0
  %3972 = vmatpush1.msra.mxu0 0.0
  %3973 = vmatprep.subr.mxu0 0.0
  %3974 = vmatpush1.msra.mxu0 0.0
  %3975 = vmatprep.subr.mxu0 0.0
  %3976 = vmatpush1.msra.mxu0 0.0
  %3977 = vmatprep.subr.mxu0 0.0
  %3978 = vmatpush1.msra.mxu0 0.0
  %3979 = vmatprep.subr.mxu0 0.0
  %3980 = vmatpush1.msra.mxu0 0.0
  %3981 = vmatprep.subr.mxu0 0.0
  %3982 = vmatpush1.msra.mxu0 0.0
  %3983 = vmatprep.subr.mxu0 0.0
  %3984 = vmatpush1.msra.mxu0 0.0
  %3985 = vmatprep.subr.mxu0 0.0
  %3986 = vmatpush1.msra.mxu0 0.0
  %3987 = vmatprep.subr.mxu0 0.0
  %3988 = vmatpush1.msra.mxu0 0.0
  %3989 = vmatprep.subr.mxu0 0.0
  %3990 = vmatpush1.msra.mxu0 0.0
  %3991 = vmatprep.subr.mxu0 0.0
  %3992 = vmatpush1.msra.mxu0 0.0
  %3993 = vmatprep.subr.mxu0 0.0
  %3994 = vmatpush1.msra.mxu0 0.0
  %3995 = vmatprep.subr.mxu0 0.0
  %3996 = vmatpush1.msra.mxu0 0.0
  %3997 = vmatprep.subr.mxu0 0.0
  %3998 = vmatpush1.msra.mxu0 0.0
  %3999 = vmatprep.subr.mxu0 0.0
  %4000 = vmatpush1.msra.mxu0 0.0
  %4001 = vmatprep.subr.mxu0 0.0
  %4002 = vmatpush1.msra.mxu0 0.0
  %4003 = vmatprep.subr.mxu0 0.0
  %4004 = vmatpush1.msra.mxu0 0.0
  %4005 = vmatprep.subr.mxu0 0.0
  %4006 = vmatpush1.msra.mxu0 0.0
  %4007 = vmatprep.subr.mxu0 0.0
  %4008 = vmatpush1.msra.mxu0 0.0
  %4009 = vmatprep.subr.mxu0 0.0
  %4010 = vmatpush1.msra.mxu0 0.0
  %4011 = vmatprep.subr.mxu0 0.0
  %4012 = vmatpush1.msra.mxu0 0.0
  %4013 = vmatprep.subr.mxu0 0.0
  %4014 = vmatpush1.msra.mxu0 0.0
  %4015 = vmatprep.subr.mxu0 0.0
  %4016 = vmatpush1.msra.mxu0 0.0
  %4017 = vmatprep.subr.mxu0 0.0
  %4018 = vmatpush1.msra.mxu0 0.0
  %4019 = vmatprep.subr.mxu0 0.0
  %4020 = vmatpush1.msra.mxu0 0.0
  %4021 = vmatprep.subr.mxu0 0.0
  %4022 = vmatpush1.msra.mxu0 0.0
  %4023 = vmatprep.mubr.f32.mxu0 0.0
  %4024 = vmatmul.mubr.f32.gmra.mrb[0].mxu0 %v3954
  %v4025 = vpop.f32.mrb[0].mxu0
  %v4026 = vadd.f32 %v3952, %v4025
  %v4027 = vpop.f32.mrb[0].mxu0
  %4028 = vmatprep.mubr.f32.mxu0 0.0
  %4029 = vmatmul.mubr.f32.gmra.mrb[0].mxu0 %v3957
  %v4030 = vpop.f32.mrb[0].mxu0
  %v4031 = vadd.f32 %v3952, %v4030
  %v4032 = vpop.f32.mrb[0].mxu0
  %4033 = vdwg.mxu0
  %v4034 = vld [vmem:[%s4] sm:$0xff]
  %v4035 = vld [vmem:[%s4 + $0x8] sm:$0xf]
  %4038 = vrot.lane.b32.xlu0 %v4026, 110
  %v4039 = vpop.permute.xlu0 %4038
  %4040 = vrot.lane.b32.xlu0 %v4031, 110
  %v4041 = vpop.permute.xlu0 %4040
  %4046 = vrot.lane.b32.xlu0 %v4034, 6
  %v4047 = vpop.permute.xlu0 %4046
  %4048 = vrot.lane.b32.xlu0 %v4035, 6
  %v4049 = vpop.permute.xlu0 %4048
  %vm4052 = vcmask 23552
  %v4053 = vsel %vm4052, %v4026, %v4039
  %v4054 = vsel %vm4052, %v4031, %v4041
  %vm4055 = vcmask 48128
  %v4056 = vsel %vm4055, %v4053, %v4047
  %v4057 = vsel %vm4055, %v4054, %v4049
  %v4058 = vld [vmem:[%s7 + $0x160] sm:$0x1]
  %v4059 = vlaneseq
  %v4060 = vshrl.u32 %v4059, 7
  %v4061 = vsub.s32 0, %v4060
  %v4062 = vrot.slane %v4058, %v4061
  %4064 = vrot.lane.b32.xlu0 %v4062, 64
  %v4065 = vpop.permute.xlu0 %4064
  %v4067 = vadd.f32 %v3511, %v4065
  %v4068 = vld [vmem:[%s7 + $0xe8] sm:$0xff]
  %v4069 = vld [vmem:[%s7 + $0xf0] sm:$0x3f]
  %vm4070 = vcmask 113664
  %v4072 = vsel %vm4070, %v4056, 0
  %v4075 = vsel %vm4070, %v4057, 0
  %v4078 = vsel %vm3615, %v4069, 0
  %4080 = vmatprep.subr.mxu0 0.0
  %4081 = vmatpush1.msra.mxu0 %v4068
  %4082 = vmatprep.subr.mxu0 0.0
  %4083 = vmatpush1.msra.mxu0 %v4078
  %4084 = vmatprep.subr.mxu0 0.0
  %4085 = vmatpush1.msra.mxu0 0.0
  %4086 = vmatprep.subr.mxu0 0.0
  %4087 = vmatpush1.msra.mxu0 0.0
  %4088 = vmatprep.subr.mxu0 0.0
  %4089 = vmatpush1.msra.mxu0 0.0
  %4090 = vmatprep.subr.mxu0 0.0
  %4091 = vmatpush1.msra.mxu0 0.0
  %4092 = vmatprep.subr.mxu0 0.0
  %4093 = vmatpush1.msra.mxu0 0.0
  %4094 = vmatprep.subr.mxu0 0.0
  %4095 = vmatpush1.msra.mxu0 0.0
  %4096 = vmatprep.subr.mxu0 0.0
  %4097 = vmatpush1.msra.mxu0 0.0
  %4098 = vmatprep.subr.mxu0 0.0
  %4099 = vmatpush1.msra.mxu0 0.0
  %4100 = vmatprep.subr.mxu0 0.0
  %4101 = vmatpush1.msra.mxu0 0.0
  %4102 = vmatprep.subr.mxu0 0.0
  %4103 = vmatpush1.msra.mxu0 0.0
  %4104 = vmatprep.subr.mxu0 0.0
  %4105 = vmatpush1.msra.mxu0 0.0
  %4106 = vmatprep.subr.mxu0 0.0
  %4107 = vmatpush1.msra.mxu0 0.0
  %4108 = vmatprep.subr.mxu0 0.0
  %4109 = vmatpush1.msra.mxu0 0.0
  %4110 = vmatprep.subr.mxu0 0.0
  %4111 = vmatpush1.msra.mxu0 0.0
  %4112 = vmatprep.subr.mxu0 0.0
  %4113 = vmatpush1.msra.mxu0 0.0
  %4114 = vmatprep.subr.mxu0 0.0
  %4115 = vmatpush1.msra.mxu0 0.0
  %4116 = vmatprep.subr.mxu0 0.0
  %4117 = vmatpush1.msra.mxu0 0.0
  %4118 = vmatprep.subr.mxu0 0.0
  %4119 = vmatpush1.msra.mxu0 0.0
  %4120 = vmatprep.subr.mxu0 0.0
  %4121 = vmatpush1.msra.mxu0 0.0
  %4122 = vmatprep.subr.mxu0 0.0
  %4123 = vmatpush1.msra.mxu0 0.0
  %4124 = vmatprep.subr.mxu0 0.0
  %4125 = vmatpush1.msra.mxu0 0.0
  %4126 = vmatprep.subr.mxu0 0.0
  %4127 = vmatpush1.msra.mxu0 0.0
  %4128 = vmatprep.subr.mxu0 0.0
  %4129 = vmatpush1.msra.mxu0 0.0
  %4130 = vmatprep.subr.mxu0 0.0
  %4131 = vmatpush1.msra.mxu0 0.0
  %4132 = vmatprep.subr.mxu0 0.0
  %4133 = vmatpush1.msra.mxu0 0.0
  %4134 = vmatprep.subr.mxu0 0.0
  %4135 = vmatpush1.msra.mxu0 0.0
  %4136 = vmatprep.subr.mxu0 0.0
  %4137 = vmatpush1.msra.mxu0 0.0
  %4138 = vmatprep.subr.mxu0 0.0
  %4139 = vmatpush1.msra.mxu0 0.0
  %4140 = vmatprep.subr.mxu0 0.0
  %4141 = vmatpush1.msra.mxu0 0.0
  %4142 = vmatprep.subr.mxu0 0.0
  %4143 = vmatpush1.msra.mxu0 0.0
  %4144 = vmatprep.mubr.f32.mxu0 0.0
  %4145 = vmatmul.mubr.f32.gmra.mrb[0].mxu0 %v4072
  %v4146 = vpop.f32.mrb[0].mxu0
  %v4147 = vadd.f32 0.0, %v4146
  %v4148 = vpop.f32.mrb[0].mxu0
  %4149 = vmatprep.mubr.f32.mxu0 0.0
  %4150 = vmatmul.mubr.f32.gmra.mrb[0].mxu0 %v4075
  %v4151 = vpop.f32.mrb[0].mxu0
  %v4152 = vadd.f32 0.0, %v4151
  %v4153 = vpop.f32.mrb[0].mxu0
  %4154 = vdwg.mxu0
  %v4157 = vcombine.high %v4147, %v4147
  %v4159 = vunpack.c.l.s4 1983009808
  %v4160 = vunpack.c.0.s8 %v4159
  %v4161 = vlaneseq
  %v4162 = vshrl.u32 %v4161, 7
  %v4163 = vsub.s32 %v4160, %v4162
  %v4164 = vrot.slane %v4147, %v4163
  %v4166 = vunpack.c.l.s4 1983009808
  %v4167 = vunpack.c.0.s8 %v4166
  %v4168 = vlaneseq
  %v4169 = vshrl.u32 %v4168, 7
  %v4170 = vsub.s32 %v4167, %v4169
  %v4171 = vrot.slane %v4157, %v4170
  %v4172 = vcombine.high %v4164, %v4164
  %v4173 = vcombine.high %v4171, %v4171
  %v4175 = vunpack.c.l.s4 1983009808
  %v4176 = vunpack.c.0.s8 %v4175
  %v4177 = vlaneseq
  %v4178 = vshrl.u32 %v4177, 7
  %v4179 = vsub.s32 %v4176, %v4178
  %v4180 = vrot.slane %v4152, %v4179
  %v4181 = vcombine.high %v4180, %v4180
  %v4190 = vunpack.c.l.s4 1983009808
  %v4191 = vunpack.c.0.s8 %v4190
  %v4192 = vlaneseq
  %v4193 = vshrl.u32 %v4192, 7
  %v4194 = vsub.s32 %v4191, %v4193
  %v4195 = vrot.slane %v4067, %v4194
  %4196 = vrot.lane.b32.xlu0 %v4195, 64
  %v4197 = vpop.permute.xlu0 %4196
  %v4199 = vadd.f32 %v4164, %v4197
  %v4200 = vadd.f32 %v4172, %v4197
  %v4201 = vadd.f32 %v4171, %v4197
  %v4202 = vadd.f32 %v4173, %v4197
  %v4203 = vadd.f32 %v4180, %v4197
  %v4204 = vadd.f32 %v4181, %v4197
  %v4205 = vmax.f32 %v4199, 0.0
  %v4206 = vmax.f32 %v4200, 0.0
  %v4207 = vmax.f32 %v4201, 0.0
  %v4208 = vmax.f32 %v4202, 0.0
  %v4209 = vmax.f32 %v4203, 0.0
  %v4210 = vmax.f32 %v4204, 0.0
  %v4211 = vld [vmem:[%s7 + $0xf8] sm:$0xff]
  %v4212 = vld [vmem:[%s7 + $0x100] sm:$0xff]
  %v4213 = vld [vmem:[%s7 + $0x108] sm:$0xff]
  %v4214 = vld [vmem:[%s7 + $0x110] sm:$0xff]
  %v4215 = vld [vmem:[%s7 + $0x168] sm:$0x1]
  %v4216 = vlaneseq
  %v4217 = vshrl.u32 %v4216, 7
  %v4218 = vsub.s32 0, %v4217
  %v4219 = vrot.slane %v4215, %v4218
  %v4226 = vcombine.low %v4205, %v4206
  %v4227 = vcombine.low %v4207, %v4208
  %v4229 = vunpack.c.l.s4 1983009808
  %v4230 = vunpack.c.0.s8 %v4229
  %v4231 = vlaneseq
  %v4232 = vshrl.u32 %v4231, 7
  %v4233 = vsub.s32 %v4230, %v4232
  %v4234 = vrot.slane %v4226, %v4233
  %v4236 = vunpack.c.l.s4 1983009808
  %v4237 = vunpack.c.0.s8 %v4236
  %v4238 = vlaneseq
  %v4239 = vshrl.u32 %v4238, 7
  %v4240 = vsub.s32 %v4237, %v4239
  %v4241 = vrot.slane %v4227, %v4240
  %v4242 = vcombine.low %v4234, %v4241
  %v4243 = vcombine.low %v4209, %v4210
  %v4245 = vunpack.c.l.s4 1983009808
  %v4246 = vunpack.c.0.s8 %v4245
  %v4247 = vlaneseq
  %v4248 = vshrl.u32 %v4247, 7
  %v4249 = vsub.s32 %v4246, %v4248
  %v4250 = vrot.slane %v4243, %v4249
  %v4251 = vsel %vm1455, %v4242, 0
  %v4253 = vsel %vm1455, %v4250, 0
  %4255 = vmatprep.subr.mxu0 0.0
  %4256 = vmatpush1.msra.mxu0 %v4211
  %4257 = vmatprep.subr.mxu0 0.0
  %4258 = vmatpush1.msra.mxu0 %v4212
  %4259 = vmatprep.subr.mxu0 0.0
  %4260 = vmatpush1.msra.mxu0 %v4213
  %4261 = vmatprep.subr.mxu0 0.0
  %4262 = vmatpush1.msra.mxu0 %v4214
  %4263 = vmatprep.subr.mxu0 0.0
  %4264 = vmatpush1.msra.mxu0 0.0
  %4265 = vmatprep.subr.mxu0 0.0
  %4266 = vmatpush1.msra.mxu0 0.0
  %4267 = vmatprep.subr.mxu0 0.0
  %4268 = vmatpush1.msra.mxu0 0.0
  %4269 = vmatprep.subr.mxu0 0.0
  %4270 = vmatpush1.msra.mxu0 0.0
  %4271 = vmatprep.subr.mxu0 0.0
  %4272 = vmatpush1.msra.mxu0 0.0
  %4273 = vmatprep.subr.mxu0 0.0
  %4274 = vmatpush1.msra.mxu0 0.0
  %4275 = vmatprep.subr.mxu0 0.0
  %4276 = vmatpush1.msra.mxu0 0.0
  %4277 = vmatprep.subr.mxu0 0.0
  %4278 = vmatpush1.msra.mxu0 0.0
  %4279 = vmatprep.subr.mxu0 0.0
  %4280 = vmatpush1.msra.mxu0 0.0
  %4281 = vmatprep.subr.mxu0 0.0
  %4282 = vmatpush1.msra.mxu0 0.0
  %4283 = vmatprep.subr.mxu0 0.0
  %4284 = vmatpush1.msra.mxu0 0.0
  %4285 = vmatprep.subr.mxu0 0.0
  %4286 = vmatpush1.msra.mxu0 0.0
  %4287 = vmatprep.subr.mxu0 0.0
  %4288 = vmatpush1.msra.mxu0 0.0
  %4289 = vmatprep.subr.mxu0 0.0
  %4290 = vmatpush1.msra.mxu0 0.0
  %4291 = vmatprep.subr.mxu0 0.0
  %4292 = vmatpush1.msra.mxu0 0.0
  %4293 = vmatprep.subr.mxu0 0.0
  %4294 = vmatpush1.msra.mxu0 0.0
  %4295 = vmatprep.subr.mxu0 0.0
  %4296 = vmatpush1.msra.mxu0 0.0
  %4297 = vmatprep.subr.mxu0 0.0
  %4298 = vmatpush1.msra.mxu0 0.0
  %4299 = vmatprep.subr.mxu0 0.0
  %4300 = vmatpush1.msra.mxu0 0.0
  %4301 = vmatprep.subr.mxu0 0.0
  %4302 = vmatpush1.msra.mxu0 0.0
  %4303 = vmatprep.subr.mxu0 0.0
  %4304 = vmatpush1.msra.mxu0 0.0
  %4305 = vmatprep.subr.mxu0 0.0
  %4306 = vmatpush1.msra.mxu0 0.0
  %4307 = vmatprep.subr.mxu0 0.0
  %4308 = vmatpush1.msra.mxu0 0.0
  %4309 = vmatprep.subr.mxu0 0.0
  %4310 = vmatpush1.msra.mxu0 0.0
  %4311 = vmatprep.subr.mxu0 0.0
  %4312 = vmatpush1.msra.mxu0 0.0
  %4313 = vmatprep.subr.mxu0 0.0
  %4314 = vmatpush1.msra.mxu0 0.0
  %4315 = vmatprep.subr.mxu0 0.0
  %4316 = vmatpush1.msra.mxu0 0.0
  %4317 = vmatprep.subr.mxu0 0.0
  %4318 = vmatpush1.msra.mxu0 0.0
  %4319 = vmatprep.mubr.f32.mxu0 0.0
  %4320 = vmatmul.mubr.f32.gmra.mrb[0].mxu0 %v4251
  %v4321 = vpop.f32.mrb[0].mxu0
  %v4322 = vadd.f32 %v4219, %v4321
  %v4323 = vpop.f32.mrb[0].mxu0
  %4324 = vmatprep.mubr.f32.mxu0 0.0
  %4325 = vmatmul.mubr.f32.gmra.mrb[0].mxu0 %v4253
  %v4326 = vpop.f32.mrb[0].mxu0
  %v4327 = vadd.f32 %v4219, %v4326
  %v4328 = vpop.f32.mrb[0].mxu0
  %4329 = vdwg.mxu0
  %v4330 = vmax.f32 %v4322, 0.0
  %v4331 = vmax.f32 %v4327, 0.0
  %v4332 = vld [vmem:[%s7 + $0x118] sm:$0xff]
  %v4333 = vld [vmem:[%s7 + $0x120] sm:$0xff]
  %v4334 = vld [vmem:[%s7 + $0x170] sm:$0x1]
  %v4335 = vlaneseq
  %v4336 = vshrl.u32 %v4335, 7
  %v4337 = vsub.s32 0, %v4336
  %v4338 = vrot.slane %v4334, %v4337
  %v4340 = vsel %vm2439, %v4330, 0
  %v4343 = vsel %vm2439, %v4331, 0
  %4345 = vmatprep.subr.mxu0 0.0
  %4346 = vmatpush1.msra.mxu0 %v4332
  %4347 = vmatprep.subr.mxu0 0.0
  %4348 = vmatpush1.msra.mxu0 %v4333
  %4349 = vmatprep.subr.mxu0 0.0
  %4350 = vmatpush1.msra.mxu0 0.0
  %4351 = vmatprep.subr.mxu0 0.0
  %4352 = vmatpush1.msra.mxu0 0.0
  %4353 = vmatprep.subr.mxu0 0.0
  %4354 = vmatpush1.msra.mxu0 0.0
  %4355 = vmatprep.subr.mxu0 0.0
  %4356 = vmatpush1.msra.mxu0 0.0
  %4357 = vmatprep.subr.mxu0 0.0
  %4358 = vmatpush1.msra.mxu0 0.0
  %4359 = vmatprep.subr.mxu0 0.0
  %4360 = vmatpush1.msra.mxu0 0.0
  %4361 = vmatprep.subr.mxu0 0.0
  %4362 = vmatpush1.msra.mxu0 0.0
  %4363 = vmatprep.subr.mxu0 0.0
  %4364 = vmatpush1.msra.mxu0 0.0
  %4365 = vmatprep.subr.mxu0 0.0
  %4366 = vmatpush1.msra.mxu0 0.0
  %4367 = vmatprep.subr.mxu0 0.0
  %4368 = vmatpush1.msra.mxu0 0.0
  %4369 = vmatprep.subr.mxu0 0.0
  %4370 = vmatpush1.msra.mxu0 0.0
  %4371 = vmatprep.subr.mxu0 0.0
  %4372 = vmatpush1.msra.mxu0 0.0
  %4373 = vmatprep.subr.mxu0 0.0
  %4374 = vmatpush1.msra.mxu0 0.0
  %4375 = vmatprep.subr.mxu0 0.0
  %4376 = vmatpush1.msra.mxu0 0.0
  %4377 = vmatprep.subr.mxu0 0.0
  %4378 = vmatpush1.msra.mxu0 0.0
  %4379 = vmatprep.subr.mxu0 0.0
  %4380 = vmatpush1.msra.mxu0 0.0
  %4381 = vmatprep.subr.mxu0 0.0
  %4382 = vmatpush1.msra.mxu0 0.0
  %4383 = vmatprep.subr.mxu0 0.0
  %4384 = vmatpush1.msra.mxu0 0.0
  %4385 = vmatprep.subr.mxu0 0.0
  %4386 = vmatpush1.msra.mxu0 0.0
  %4387 = vmatprep.subr.mxu0 0.0
  %4388 = vmatpush1.msra.mxu0 0.0
  %4389 = vmatprep.subr.mxu0 0.0
  %4390 = vmatpush1.msra.mxu0 0.0
  %4391 = vmatprep.subr.mxu0 0.0
  %4392 = vmatpush1.msra.mxu0 0.0
  %4393 = vmatprep.subr.mxu0 0.0
  %4394 = vmatpush1.msra.mxu0 0.0
  %4395 = vmatprep.subr.mxu0 0.0
  %4396 = vmatpush1.msra.mxu0 0.0
  %4397 = vmatprep.subr.mxu0 0.0
  %4398 = vmatpush1.msra.mxu0 0.0
  %4399 = vmatprep.subr.mxu0 0.0
  %4400 = vmatpush1.msra.mxu0 0.0
  %4401 = vmatprep.subr.mxu0 0.0
  %4402 = vmatpush1.msra.mxu0 0.0
  %4403 = vmatprep.subr.mxu0 0.0
  %4404 = vmatpush1.msra.mxu0 0.0
  %4405 = vmatprep.subr.mxu0 0.0
  %4406 = vmatpush1.msra.mxu0 0.0
  %4407 = vmatprep.subr.mxu0 0.0
  %4408 = vmatpush1.msra.mxu0 0.0
  %4409 = vmatprep.mubr.f32.mxu0 0.0
  %4410 = vmatmul.mubr.f32.gmra.mrb[0].mxu0 %v4340
  %v4411 = vpop.f32.mrb[0].mxu0
  %v4412 = vadd.f32 %v4338, %v4411
  %v4413 = vpop.f32.mrb[0].mxu0
  %4414 = vmatprep.mubr.f32.mxu0 0.0
  %4415 = vmatmul.mubr.f32.gmra.mrb[0].mxu0 %v4343
  %v4416 = vpop.f32.mrb[0].mxu0
  %v4417 = vadd.f32 %v4338, %v4416
  %v4418 = vpop.f32.mrb[0].mxu0
  %4419 = vdwg.mxu0
  %v4420 = vld [vmem:[%s7 + $0x178] sm:$0x1]
  %4422 = vset.pattern.permute.xlu0 0
  %4423 = vperm.xlu0 %4422, %v4412
  %v4424 = vpop.permute.xlu0 %4423
  %4427 = vset.pattern.permute.xlu0 0
  %4428 = vperm.xlu0 %4427, %v4417
  %v4429 = vpop.permute.xlu0 %4428
  %v4431 = vlaneseq
  %v4432 = vshrl.u32 %v4431, 7
  %v4433 = vsub.s32 0, %v4432
  %v4434 = vrot.slane %v4420, %v4433
  %v4435 = vmul.f32 %v4424, %v4434
  %v4436 = vmul.f32 %v4429, %v4434
  %v4437 = vadd.f32 %v4026, %v4435
  %v4438 = vadd.f32 %v4031, %v4436
  %4439 = vst.msk [vmem:[%s9] sm:$0xff] %vm1455, %v4437
  %vm4440 = vcmask 257024
  %4441 = vst.msk [vmem:[%s9 + $0x8] sm:$0xf] %vm4440, %v4438
  // Predicated region
  $region34: #{planning_forward.3} parent=0 // pred_check
    _
  $region35: #{planning_forward.3} parent=0 // pred_check_branch
    %4443 = sbr.rel (0) target = $region37
  $region36: #{planning_forward.3} parent=0 // pred_region
    _
  $region37: #{planning_forward.3} parent=0 // pred_fallthru
    _
  // Predicated region
  $region38: #{planning_forward.3} parent=0 // pred_check
    _
  $region39: #{planning_forward.3} parent=0 // pred_check_branch
    %4445 = sbr.rel (0) target = $region41
  $region40: #{planning_forward.3} parent=0 // pred_region
    _
  $region41: #{planning_forward.3} parent=0 // pred_fallthru
    _
  // Predicated region
  $region42: #{planning_forward.3} parent=0 // pred_check
    _
  $region43: #{planning_forward.3} parent=0 // pred_check_branch
    %4447 = sbr.rel (0) target = $region45
  $region44: #{planning_forward.3} parent=0 // pred_region
    _
  $region45: #{planning_forward.3} parent=0 // pred_fallthru
    _
  // Predicated region
  $region46: #{planning_forward.3} parent=0 // pred_check
    _
  $region47: #{planning_forward.3} parent=0 // pred_check_branch
    %4449 = sbr.rel (0) target = $region49
  $region48: #{planning_forward.3} parent=0 // pred_region
    _
  $region49: #{planning_forward.3} parent=0 // pred_fallthru
    _

</llo_original>
